<compile_context>
chip_gen: v5e
topology: v5e:2x2
jax: 0.10.0
libtpu: 0.0.40
codegen_flags: <defaults>
</compile_context>

<pallas_src>
import functools

import jax
import jax.numpy as jnp
from jax import lax
from jax.experimental import pallas as pl
from jax.experimental.pallas import tpu as pltpu
import numpy as np


def _gru_recurrence_kernel(a_r_ref, a_z_ref, a_n_ref,
                           whh_r_ref, whh_z_ref, whh_n_ref, bhh_n_ref,
                           hs_ref, *, seq_len, total_steps):
    """Serial GRU recurrence over all T = modules*seq steps in one kernel call.

    a_*_ref   : (seq, B, H)  precomputed input-gate pre-activations (biases folded)
    whh_*_ref : (H, H)       hidden->gate weights, pre-transposed for h @ W
    bhh_n_ref : (1, H)       hidden bias of the n gate (must stay inside r * (.))
    hs_ref    : (T, B, H)    output: hidden state at every timestep
    """
    B = a_r_ref.shape[1]
    H = a_r_ref.shape[2]

    def step(t, h):
        lt = lax.rem(t, seq_len)        # handles x.repeat(modules, 1, 1) without a copy
        h_r = jnp.dot(h, whh_r_ref[...], preferred_element_type=jnp.float32)
        h_z = jnp.dot(h, whh_z_ref[...], preferred_element_type=jnp.float32)
        h_n = (jnp.dot(h, whh_n_ref[...], preferred_element_type=jnp.float32)
               + bhh_n_ref[...])
        r = jax.nn.sigmoid(a_r_ref[lt] + h_r)
        z = jax.nn.sigmoid(a_z_ref[lt] + h_z)
        n = jnp.tanh(a_n_ref[lt] + r * h_n)
        h_new = (1.0 - z) * n + z * h
        hs_ref[t] = h_new
        return h_new

    h0 = jnp.zeros((B, H), jnp.float32)  # PyTorch default: h0 = 0
    lax.fori_loop(0, total_steps, step, h0, unroll=(total_steps <= 128))


def gru_head_v2_forward(x, params, modules):
    """x: (seq, batch, features) -> (batch, states, modules*seq)."""
    wih, whh, bih, bhh, wc, bc = params
    L, B, F = x.shape
    H = whh.shape[1]                    # hidden == features (unidirectional)
    S = wc.shape[0]                     # states
    assert H == F
    T = modules * L

    f32 = jnp.float32
    x32 = x.astype(f32)
    wih = wih.astype(f32)
    whh = whh.astype(f32)
    bih = bih.astype(f32)
    bhh = bhh.astype(f32)
    wc = wc.astype(f32)
    bc = bc.astype(f32)

    # PyTorch gate order: r, z, n (rows of the stacked (3H, F) weights).
    wih_r, wih_z, wih_n = wih[:H], wih[H:2 * H], wih[2 * H:]
    whh_r, whh_z, whh_n = whh[:H], whh[H:2 * H], whh[2 * H:]
    bih_r, bih_z, bih_n = bih[:H], bih[H:2 * H], bih[2 * H:]
    bhh_r, bhh_z, bhh_n = bhh[:H], bhh[H:2 * H], bhh[2 * H:]

    # Hoisted input projections: independent of h and identical across the `modules`
    # repeats, so computed once per distinct timestep as batched XLA matmuls.
    a_r = jnp.einsum("lbf,hf->lbh", x32, wih_r) + (bih_r + bhh_r)
    a_z = jnp.einsum("lbf,hf->lbh", x32, wih_z) + (bih_z + bhh_z)
    a_n = jnp.einsum("lbf,hf->lbh", x32, wih_n) + bih_n

    whh_rT = whh_r.T                    # (H, H), for h @ W
    whh_zT = whh_z.T
    whh_nT = whh_n.T
    bhh_n2 = bhh_n.reshape(1, H)

    full3 = lambda shape: pl.BlockSpec(shape, lambda i: (0, 0, 0))
    full2 = lambda shape: pl.BlockSpec(shape, lambda i: (0, 0))

    hs = pl.pallas_call(
        functools.partial(_gru_recurrence_kernel, seq_len=L, total_steps=T),
        out_shape=jax.ShapeDtypeStruct((T, B, H), f32),
        grid=(1,),                       # whole recurrence in one invocation (fits VMEM)
        in_specs=[
            full3((L, B, H)), full3((L, B, H)), full3((L, B, H)),
            full2((H, H)), full2((H, H)), full2((H, H)),
            full2((1, H)),
        ],
        out_specs=full3((T, B, H)),
        compiler_params=pltpu.CompilerParams(
            dimension_semantics=("arbitrary",)),   # serial recurrence
    )(a_r, a_z, a_n, whh_rT, whh_zT, whh_nT, bhh_n2)

    # Conv1d(kernel_size=1) == per-timestep linear projection of h_t; fuse with the
    # permute(1, 2, 0) so the result is directly (batch, states, T).
    return jnp.einsum("tbh,sh->bst", hs, wc) + bc[None, :, None]


def gru_head_v2_reference(x, params, modules):
    """Pure-JAX reference (lax.scan GRU) for correctness checking."""
    wih, whh, bih, bhh, wc, bc = params
    H = whh.shape[1]
    xt = jnp.tile(x, (modules, 1, 1)).astype(jnp.float32)       # (T, B, F)

    def step(h, x_t):
        gi = x_t @ wih.T + bih
        gh = h @ whh.T + bhh
        i_r, i_z, i_n = jnp.split(gi, 3, axis=-1)
        h_r, h_z, h_n = jnp.split(gh, 3, axis=-1)
        r = jax.nn.sigmoid(i_r + h_r)
        z = jax.nn.sigmoid(i_z + h_z)
        n = jnp.tanh(i_n + r * h_n)
        h_new = (1.0 - z) * n + z * h
        return h_new, h_new

    h0 = jnp.zeros((x.shape[1], H), jnp.float32)
    _, hs = lax.scan(step, h0, xt)                              # (T, B, H)
    return jnp.einsum("tbh,sh->bst", hs, wc) + bc[None, :, None]


if __name__ == "__main__":
    # Small shapes consistent with the module's forward.
    features = 32      # GRU input size == hidden size (unidirectional)
    states = 2
    modules = 2
    seq = 8
    batch = 4

    key = jax.random.PRNGKey(0)
    k = jax.random.split(key, 8)
    scale = 1.0 / jnp.sqrt(features)

    # Deterministic parameter init (same shapes as nn.GRU + nn.Conv1d(k=1)).
    w_ih = jax.random.uniform(k[0], (3 * features, features), jnp.float32, -scale, scale)
    w_hh = jax.random.uniform(k[1], (3 * features, features), jnp.float32, -scale, scale)
    b_ih = jax.random.uniform(k[2], (3 * features,), jnp.float32, -scale, scale)
    b_hh = jax.random.uniform(k[3], (3 * features,), jnp.float32, -scale, scale)
    w_conv = jax.random.uniform(k[4], (states, features), jnp.float32, -scale, scale)
    b_conv = jax.random.uniform(k[5], (states,), jnp.float32, -scale, scale)
    params = (w_ih, w_hh, b_ih, b_hh, w_conv, b_conv)

    # Input in the PyTorch (seq, batch, features) layout.
    x = jax.random.normal(k[6], (seq, batch, features), jnp.float32)

    fwd = jax.jit(functools.partial(gru_head_v2_forward, modules=modules))
    out = fwd(x, params)
    jax.block_until_ready(out)

    ref = gru_head_v2_reference(x, params, modules)
    np.testing.assert_allclose(np.asarray(out), np.asarray(ref), atol=1e-4, rtol=1e-4)
    assert out.shape == (batch, states, modules * seq)

    print("KERNEL_OK")
</pallas_src>

<mosaic_0001>
module attributes {stable_mosaic.version = 11 : i64} {
  func.func @_gru_recurrence_kernel(%arg0: i32, %arg1: memref<8x4x32xf32, #tpu.memory_space<vmem>>, %arg2: memref<8x4x32xf32, #tpu.memory_space<vmem>>, %arg3: memref<8x4x32xf32, #tpu.memory_space<vmem>>, %arg4: memref<32x32xf32, #tpu.memory_space<vmem>>, %arg5: memref<32x32xf32, #tpu.memory_space<vmem>>, %arg6: memref<32x32xf32, #tpu.memory_space<vmem>>, %arg7: memref<1x32xf32, #tpu.memory_space<vmem>>, %arg8: memref<16x4x32xf32, #tpu.memory_space<vmem>>) attributes {dimension_semantics = [#tpu.dimension_semantics<arbitrary>], iteration_bounds = array<i64: 1>, scalar_prefetch = 0 : i64, scratch_operands = 0 : i64, tpu.core_type = #tpu.core_type<tc>, window_params = [{pipeline_mode = #tpu.pipeline_mode<synchronous>, transform_indices = @transform_0, window_bounds = array<i64: 8, 4, 32>}, {pipeline_mode = #tpu.pipeline_mode<synchronous>, transform_indices = @transform_1, window_bounds = array<i64: 8, 4, 32>}, {pipeline_mode = #tpu.pipeline_mode<synchronous>, transform_indices = @transform_2, window_bounds = array<i64: 8, 4, 32>}, {pipeline_mode = #tpu.pipeline_mode<synchronous>, transform_indices = @transform_3, window_bounds = array<i64: 32, 32>}, {pipeline_mode = #tpu.pipeline_mode<synchronous>, transform_indices = @transform_4, window_bounds = array<i64: 32, 32>}, {pipeline_mode = #tpu.pipeline_mode<synchronous>, transform_indices = @transform_5, window_bounds = array<i64: 32, 32>}, {pipeline_mode = #tpu.pipeline_mode<synchronous>, transform_indices = @transform_6, window_bounds = array<i64: 1, 32>}, {pipeline_mode = #tpu.pipeline_mode<synchronous>, transform_indices = @transform_7, window_bounds = array<i64: 16, 4, 32>}]} {
    %cst = arith.constant 0.000000e+00 : f32
    %0 = vector.broadcast %cst : f32 to vector<4x32xf32>
    %c0_i32 = arith.constant 0 : i32
    %c8_i32 = arith.constant 8 : i32
    %1 = arith.remsi %c0_i32, %c8_i32 : i32
    %c0 = arith.constant 0 : index
    %c0_0 = arith.constant 0 : index
    %2 = vector.load %arg4[%c0, %c0_0] : memref<32x32xf32, #tpu.memory_space<vmem>>, vector<32x32xf32>
    %cst_1 = arith.constant dense<0.000000e+00> : vector<4x32xf32>
    %3 = tpu.matmul %0, %2, %cst_1 {dimension_numbers = #tpu.dot_dimension_numbers<[1], [0], [0], [1], [0, 0, 1, 1], [], []>} : vector<4x32xf32>, vector<32x32xf32>, vector<4x32xf32> -> vector<4x32xf32>
    %c0_2 = arith.constant 0 : index
    %c0_3 = arith.constant 0 : index
    %4 = vector.load %arg5[%c0_2, %c0_3] : memref<32x32xf32, #tpu.memory_space<vmem>>, vector<32x32xf32>
    %cst_4 = arith.constant dense<0.000000e+00> : vector<4x32xf32>
    %5 = tpu.matmul %0, %4, %cst_4 {dimension_numbers = #tpu.dot_dimension_numbers<[1], [0], [0], [1], [0, 0, 1, 1], [], []>} : vector<4x32xf32>, vector<32x32xf32>, vector<4x32xf32> -> vector<4x32xf32>
    %c0_5 = arith.constant 0 : index
    %c0_6 = arith.constant 0 : index
    %6 = vector.load %arg6[%c0_5, %c0_6] : memref<32x32xf32, #tpu.memory_space<vmem>>, vector<32x32xf32>
    %cst_7 = arith.constant dense<0.000000e+00> : vector<4x32xf32>
    %7 = tpu.matmul %0, %6, %cst_7 {dimension_numbers = #tpu.dot_dimension_numbers<[1], [0], [0], [1], [0, 0, 1, 1], [], []>} : vector<4x32xf32>, vector<32x32xf32>, vector<4x32xf32> -> vector<4x32xf32>
    %c0_8 = arith.constant 0 : index
    %c0_9 = arith.constant 0 : index
    %8 = vector.load %arg7[%c0_8, %c0_9] : memref<1x32xf32, #tpu.memory_space<vmem>>, vector<1x32xf32>
    %9 = vector.broadcast %8 : vector<1x32xf32> to vector<4x32xf32>
    %10 = arith.addf %7, %9 : vector<4x32xf32>
    %11 = arith.index_cast %1 : i32 to index
    %c0_10 = arith.constant 0 : index
    %c0_11 = arith.constant 0 : index
    %12 = vector.load %arg1[%11, %c0_10, %c0_11] : memref<8x4x32xf32, #tpu.memory_space<vmem>>, vector<1x4x32xf32>
    %13 = vector.shape_cast %12 : vector<1x4x32xf32> to vector<4x32xf32>
    %14 = arith.addf %13, %3 : vector<4x32xf32>
    %15 = arith.negf %14 : vector<4x32xf32>
    %16 = math.exp %15 : vector<4x32xf32>
    %cst_12 = arith.constant 1.000000e+00 : f32
    %17 = vector.broadcast %cst_12 : f32 to vector<4x32xf32>
    %18 = arith.addf %17, %16 : vector<4x32xf32>
    %19 = arith.divf %17, %18 : vector<4x32xf32>
    %20 = arith.index_cast %1 : i32 to index
    %c0_13 = arith.constant 0 : index
    %c0_14 = arith.constant 0 : index
    %21 = vector.load %arg2[%20, %c0_13, %c0_14] : memref<8x4x32xf32, #tpu.memory_space<vmem>>, vector<1x4x32xf32>
    %22 = vector.shape_cast %21 : vector<1x4x32xf32> to vector<4x32xf32>
    %23 = arith.addf %22, %5 : vector<4x32xf32>
    %24 = arith.negf %23 : vector<4x32xf32>
    %25 = math.exp %24 : vector<4x32xf32>
    %cst_15 = arith.constant 1.000000e+00 : f32
    %26 = vector.broadcast %cst_15 : f32 to vector<4x32xf32>
    %27 = arith.addf %26, %25 : vector<4x32xf32>
    %28 = arith.divf %26, %27 : vector<4x32xf32>
    %29 = arith.index_cast %1 : i32 to index
    %c0_16 = arith.constant 0 : index
    %c0_17 = arith.constant 0 : index
    %30 = vector.load %arg3[%29, %c0_16, %c0_17] : memref<8x4x32xf32, #tpu.memory_space<vmem>>, vector<1x4x32xf32>
    %31 = vector.shape_cast %30 : vector<1x4x32xf32> to vector<4x32xf32>
    %32 = arith.mulf %19, %10 : vector<4x32xf32>
    %33 = arith.addf %31, %32 : vector<4x32xf32>
    %34 = math.tanh %33 : vector<4x32xf32>
    %cst_18 = arith.constant 1.000000e+00 : f32
    %35 = vector.broadcast %cst_18 : f32 to vector<4x32xf32>
    %36 = arith.subf %35, %28 : vector<4x32xf32>
    %37 = arith.mulf %36, %34 : vector<4x32xf32>
    %38 = arith.mulf %28, %0 : vector<4x32xf32>
    %39 = arith.addf %37, %38 : vector<4x32xf32>
    %40 = arith.index_cast %c0_i32 : i32 to index
    %c0_19 = arith.constant 0 : index
    %c0_20 = arith.constant 0 : index
    %41 = vector.load %arg8[%40, %c0_19, %c0_20] : memref<16x4x32xf32, #tpu.memory_space<vmem>>, vector<1x4x32xf32>
    %42 = vector.shape_cast %41 : vector<1x4x32xf32> to vector<4x32xf32>
    %43 = vector.shape_cast %39 : vector<4x32xf32> to vector<1x4x32xf32>
    tpu.vector_store %arg8[%40, %c0_19, %c0_20], %43 {strides = array<i32>} : memref<16x4x32xf32, #tpu.memory_space<vmem>>, vector<1x4x32xf32>,
    %c1_i32 = arith.constant 1 : i32
    %c8_i32_21 = arith.constant 8 : i32
    %44 = arith.remsi %c1_i32, %c8_i32_21 : i32
    %c0_22 = arith.constant 0 : index
    %c0_23 = arith.constant 0 : index
    %45 = vector.load %arg4[%c0_22, %c0_23] : memref<32x32xf32, #tpu.memory_space<vmem>>, vector<32x32xf32>
    %cst_24 = arith.constant dense<0.000000e+00> : vector<4x32xf32>
    %46 = tpu.matmul %39, %45, %cst_24 {dimension_numbers = #tpu.dot_dimension_numbers<[1], [0], [0], [1], [0, 0, 1, 1], [], []>} : vector<4x32xf32>, vector<32x32xf32>, vector<4x32xf32> -> vector<4x32xf32>
    %c0_25 = arith.constant 0 : index
    %c0_26 = arith.constant 0 : index
    %47 = vector.load %arg5[%c0_25, %c0_26] : memref<32x32xf32, #tpu.memory_space<vmem>>, vector<32x32xf32>
    %cst_27 = arith.constant dense<0.000000e+00> : vector<4x32xf32>
    %48 = tpu.matmul %39, %47, %cst_27 {dimension_numbers = #tpu.dot_dimension_numbers<[1], [0], [0], [1], [0, 0, 1, 1], [], []>} : vector<4x32xf32>, vector<32x32xf32>, vector<4x32xf32> -> vector<4x32xf32>
    %c0_28 = arith.constant 0 : index
    %c0_29 = arith.constant 0 : index
    %49 = vector.load %arg6[%c0_28, %c0_29] : memref<32x32xf32, #tpu.memory_space<vmem>>, vector<32x32xf32>
    %cst_30 = arith.constant dense<0.000000e+00> : vector<4x32xf32>
    %50 = tpu.matmul %39, %49, %cst_30 {dimension_numbers = #tpu.dot_dimension_numbers<[1], [0], [0], [1], [0, 0, 1, 1], [], []>} : vector<4x32xf32>, vector<32x32xf32>, vector<4x32xf32> -> vector<4x32xf32>
    %c0_31 = arith.constant 0 : index
    %c0_32 = arith.constant 0 : index
    %51 = vector.load %arg7[%c0_31, %c0_32] : memref<1x32xf32, #tpu.memory_space<vmem>>, vector<1x32xf32>
    %52 = vector.broadcast %51 : vector<1x32xf32> to vector<4x32xf32>
    %53 = arith.addf %50, %52 : vector<4x32xf32>
    %54 = arith.index_cast %44 : i32 to index
    %c0_33 = arith.constant 0 : index
    %c0_34 = arith.constant 0 : index
    %55 = vector.load %arg1[%54, %c0_33, %c0_34] : memref<8x4x32xf32, #tpu.memory_space<vmem>>, vector<1x4x32xf32>
    %56 = vector.shape_cast %55 : vector<1x4x32xf32> to vector<4x32xf32>
    %57 = arith.addf %56, %46 : vector<4x32xf32>
    %58 = arith.negf %57 : vector<4x32xf32>
    %59 = math.exp %58 : vector<4x32xf32>
    %cst_35 = arith.constant 1.000000e+00 : f32
    %60 = vector.broadcast %cst_35 : f32 to vector<4x32xf32>
    %61 = arith.addf %60, %59 : vector<4x32xf32>
    %62 = arith.divf %60, %61 : vector<4x32xf32>
    %63 = arith.index_cast %44 : i32 to index
    %c0_36 = arith.constant 0 : index
    %c0_37 = arith.constant 0 : index
    %64 = vector.load %arg2[%63, %c0_36, %c0_37] : memref<8x4x32xf32, #tpu.memory_space<vmem>>, vector<1x4x32xf32>
    %65 = vector.shape_cast %64 : vector<1x4x32xf32> to vector<4x32xf32>
    %66 = arith.addf %65, %48 : vector<4x32xf32>
    %67 = arith.negf %66 : vector<4x32xf32>
    %68 = math.exp %67 : vector<4x32xf32>
    %cst_38 = arith.constant 1.000000e+00 : f32
    %69 = vector.broadcast %cst_38 : f32 to vector<4x32xf32>
    %70 = arith.addf %69, %68 : vector<4x32xf32>
    %71 = arith.divf %69, %70 : vector<4x32xf32>
    %72 = arith.index_cast %44 : i32 to index
    %c0_39 = arith.constant 0 : index
    %c0_40 = arith.constant 0 : index
    %73 = vector.load %arg3[%72, %c0_39, %c0_40] : memref<8x4x32xf32, #tpu.memory_space<vmem>>, vector<1x4x32xf32>
    %74 = vector.shape_cast %73 : vector<1x4x32xf32> to vector<4x32xf32>
    %75 = arith.mulf %62, %53 : vector<4x32xf32>
    %76 = arith.addf %74, %75 : vector<4x32xf32>
    %77 = math.tanh %76 : vector<4x32xf32>
    %cst_41 = arith.constant 1.000000e+00 : f32
    %78 = vector.broadcast %cst_41 : f32 to vector<4x32xf32>
    %79 = arith.subf %78, %71 : vector<4x32xf32>
    %80 = arith.mulf %79, %77 : vector<4x32xf32>
    %81 = arith.mulf %71, %39 : vector<4x32xf32>
    %82 = arith.addf %80, %81 : vector<4x32xf32>
    %83 = arith.index_cast %c1_i32 : i32 to index
    %c0_42 = arith.constant 0 : index
    %c0_43 = arith.constant 0 : index
    %84 = vector.load %arg8[%83, %c0_42, %c0_43] : memref<16x4x32xf32, #tpu.memory_space<vmem>>, vector<1x4x32xf32>
    %85 = vector.shape_cast %84 : vector<1x4x32xf32> to vector<4x32xf32>
    %86 = vector.shape_cast %82 : vector<4x32xf32> to vector<1x4x32xf32>
    tpu.vector_store %arg8[%83, %c0_42, %c0_43], %86 {strides = array<i32>} : memref<16x4x32xf32, #tpu.memory_space<vmem>>, vector<1x4x32xf32>,
    %c2_i32 = arith.constant 2 : i32
    %c8_i32_44 = arith.constant 8 : i32
    %87 = arith.remsi %c2_i32, %c8_i32_44 : i32
    %c0_45 = arith.constant 0 : index
    %c0_46 = arith.constant 0 : index
    %88 = vector.load %arg4[%c0_45, %c0_46] : memref<32x32xf32, #tpu.memory_space<vmem>>, vector<32x32xf32>
    %cst_47 = arith.constant dense<0.000000e+00> : vector<4x32xf32>
    %89 = tpu.matmul %82, %88, %cst_47 {dimension_numbers = #tpu.dot_dimension_numbers<[1], [0], [0], [1], [0, 0, 1, 1], [], []>} : vector<4x32xf32>, vector<32x32xf32>, vector<4x32xf32> -> vector<4x32xf32>
    %c0_48 = arith.constant 0 : index
    %c0_49 = arith.constant 0 : index
    %90 = vector.load %arg5[%c0_48, %c0_49] : memref<32x32xf32, #tpu.memory_space<vmem>>, vector<32x32xf32>
    %cst_50 = arith.constant dense<0.000000e+00> : vector<4x32xf32>
    %91 = tpu.matmul %82, %90, %cst_50 {dimension_numbers = #tpu.dot_dimension_numbers<[1], [0], [0], [1], [0, 0, 1, 1], [], []>} : vector<4x32xf32>, vector<32x32xf32>, vector<4x32xf32> -> vector<4x32xf32>
    %c0_51 = arith.constant 0 : index
    %c0_52 = arith.constant 0 : index
    %92 = vector.load %arg6[%c0_51, %c0_52] : memref<32x32xf32, #tpu.memory_space<vmem>>, vector<32x32xf32>
    %cst_53 = arith.constant dense<0.000000e+00> : vector<4x32xf32>
    %93 = tpu.matmul %82, %92, %cst_53 {dimension_numbers = #tpu.dot_dimension_numbers<[1], [0], [0], [1], [0, 0, 1, 1], [], []>} : vector<4x32xf32>, vector<32x32xf32>, vector<4x32xf32> -> vector<4x32xf32>
    %c0_54 = arith.constant 0 : index
    %c0_55 = arith.constant 0 : index
    %94 = vector.load %arg7[%c0_54, %c0_55] : memref<1x32xf32, #tpu.memory_space<vmem>>, vector<1x32xf32>
    %95 = vector.broadcast %94 : vector<1x32xf32> to vector<4x32xf32>
    %96 = arith.addf %93, %95 : vector<4x32xf32>
    %97 = arith.index_cast %87 : i32 to index
    %c0_56 = arith.constant 0 : index
    %c0_57 = arith.constant 0 : index
    %98 = vector.load %arg1[%97, %c0_56, %c0_57] : memref<8x4x32xf32, #tpu.memory_space<vmem>>, vector<1x4x32xf32>
    %99 = vector.shape_cast %98 : vector<1x4x32xf32> to vector<4x32xf32>
    %100 = arith.addf %99, %89 : vector<4x32xf32>
    %101 = arith.negf %100 : vector<4x32xf32>
    %102 = math.exp %101 : vector<4x32xf32>
    %cst_58 = arith.constant 1.000000e+00 : f32
    %103 = vector.broadcast %cst_58 : f32 to vector<4x32xf32>
    %104 = arith.addf %103, %102 : vector<4x32xf32>
    %105 = arith.divf %103, %104 : vector<4x32xf32>
    %106 = arith.index_cast %87 : i32 to index
    %c0_59 = arith.constant 0 : index
    %c0_60 = arith.constant 0 : index
    %107 = vector.load %arg2[%106, %c0_59, %c0_60] : memref<8x4x32xf32, #tpu.memory_space<vmem>>, vector<1x4x32xf32>
    %108 = vector.shape_cast %107 : vector<1x4x32xf32> to vector<4x32xf32>
    %109 = arith.addf %108, %91 : vector<4x32xf32>
    %110 = arith.negf %109 : vector<4x32xf32>
    %111 = math.exp %110 : vector<4x32xf32>
    %cst_61 = arith.constant 1.000000e+00 : f32
    %112 = vector.broadcast %cst_61 : f32 to vector<4x32xf32>
    %113 = arith.addf %112, %111 : vector<4x32xf32>
    %114 = arith.divf %112, %113 : vector<4x32xf32>
    %115 = arith.index_cast %87 : i32 to index
    %c0_62 = arith.constant 0 : index
    %c0_63 = arith.constant 0 : index
    %116 = vector.load %arg3[%115, %c0_62, %c0_63] : memref<8x4x32xf32, #tpu.memory_space<vmem>>, vector<1x4x32xf32>
    %117 = vector.shape_cast %116 : vector<1x4x32xf32> to vector<4x32xf32>
    %118 = arith.mulf %105, %96 : vector<4x32xf32>
    %119 = arith.addf %117, %118 : vector<4x32xf32>
    %120 = math.tanh %119 : vector<4x32xf32>
    %cst_64 = arith.constant 1.000000e+00 : f32
    %121 = vector.broadcast %cst_64 : f32 to vector<4x32xf32>
    %122 = arith.subf %121, %114 : vector<4x32xf32>
    %123 = arith.mulf %122, %120 : vector<4x32xf32>
    %124 = arith.mulf %114, %82 : vector<4x32xf32>
    %125 = arith.addf %123, %124 : vector<4x32xf32>
    %126 = arith.index_cast %c2_i32 : i32 to index
    %c0_65 = arith.constant 0 : index
    %c0_66 = arith.constant 0 : index
    %127 = vector.load %arg8[%126, %c0_65, %c0_66] : memref<16x4x32xf32, #tpu.memory_space<vmem>>, vector<1x4x32xf32>
    %128 = vector.shape_cast %127 : vector<1x4x32xf32> to vector<4x32xf32>
    %129 = vector.shape_cast %125 : vector<4x32xf32> to vector<1x4x32xf32>
    tpu.vector_store %arg8[%126, %c0_65, %c0_66], %129 {strides = array<i32>} : memref<16x4x32xf32, #tpu.memory_space<vmem>>, vector<1x4x32xf32>,
    %c3_i32 = arith.constant 3 : i32
    %c8_i32_67 = arith.constant 8 : i32
    %130 = arith.remsi %c3_i32, %c8_i32_67 : i32
    %c0_68 = arith.constant 0 : index
    %c0_69 = arith.constant 0 : index
    %131 = vector.load %arg4[%c0_68, %c0_69] : memref<32x32xf32, #tpu.memory_space<vmem>>, vector<32x32xf32>
    %cst_70 = arith.constant dense<0.000000e+00> : vector<4x32xf32>
    %132 = tpu.matmul %125, %131, %cst_70 {dimension_numbers = #tpu.dot_dimension_numbers<[1], [0], [0], [1], [0, 0, 1, 1], [], []>} : vector<4x32xf32>, vector<32x32xf32>, vector<4x32xf32> -> vector<4x32xf32>
    %c0_71 = arith.constant 0 : index
    %c0_72 = arith.constant 0 : index
    %133 = vector.load %arg5[%c0_71, %c0_72] : memref<32x32xf32, #tpu.memory_space<vmem>>, vector<32x32xf32>
    %cst_73 = arith.constant dense<0.000000e+00> : vector<4x32xf32>
    %134 = tpu.matmul %125, %133, %cst_73 {dimension_numbers = #tpu.dot_dimension_numbers<[1], [0], [0], [1], [0, 0, 1, 1], [], []>} : vector<4x32xf32>, vector<32x32xf32>, vector<4x32xf32> -> vector<4x32xf32>
    %c0_74 = arith.constant 0 : index
    %c0_75 = arith.constant 0 : index
    %135 = vector.load %arg6[%c0_74, %c0_75] : memref<32x32xf32, #tpu.memory_space<vmem>>, vector<32x32xf32>
    %cst_76 = arith.constant dense<0.000000e+00> : vector<4x32xf32>
    %136 = tpu.matmul %125, %135, %cst_76 {dimension_numbers = #tpu.dot_dimension_numbers<[1], [0], [0], [1], [0, 0, 1, 1], [], []>} : vector<4x32xf32>, vector<32x32xf32>, vector<4x32xf32> -> vector<4x32xf32>
    %c0_77 = arith.constant 0 : index
    %c0_78 = arith.constant 0 : index
    %137 = vector.load %arg7[%c0_77, %c0_78] : memref<1x32xf32, #tpu.memory_space<vmem>>, vector<1x32xf32>
    %138 = vector.broadcast %137 : vector<1x32xf32> to vector<4x32xf32>
    %139 = arith.addf %136, %138 : vector<4x32xf32>
    %140 = arith.index_cast %130 : i32 to index
    %c0_79 = arith.constant 0 : index
    %c0_80 = arith.constant 0 : index
    %141 = vector.load %arg1[%140, %c0_79, %c0_80] : memref<8x4x32xf32, #tpu.memory_space<vmem>>, vector<1x4x32xf32>
    %142 = vector.shape_cast %141 : vector<1x4x32xf32> to vector<4x32xf32>
    %143 = arith.addf %142, %132 : vector<4x32xf32>
    %144 = arith.negf %143 : vector<4x32xf32>
    %145 = math.exp %144 : vector<4x32xf32>
    %cst_81 = arith.constant 1.000000e+00 : f32
    %146 = vector.broadcast %cst_81 : f32 to vector<4x32xf32>
    %147 = arith.addf %146, %145 : vector<4x32xf32>
    %148 = arith.divf %146, %147 : vector<4x32xf32>
    %149 = arith.index_cast %130 : i32 to index
    %c0_82 = arith.constant 0 : index
    %c0_83 = arith.constant 0 : index
    %150 = vector.load %arg2[%149, %c0_82, %c0_83] : memref<8x4x32xf32, #tpu.memory_space<vmem>>, vector<1x4x32xf32>
    %151 = vector.shape_cast %150 : vector<1x4x32xf32> to vector<4x32xf32>
    %152 = arith.addf %151, %134 : vector<4x32xf32>
    %153 = arith.negf %152 : vector<4x32xf32>
    %154 = math.exp %153 : vector<4x32xf32>
    %cst_84 = arith.constant 1.000000e+00 : f32
    %155 = vector.broadcast %cst_84 : f32 to vector<4x32xf32>
    %156 = arith.addf %155, %154 : vector<4x32xf32>
    %157 = arith.divf %155, %156 : vector<4x32xf32>
    %158 = arith.index_cast %130 : i32 to index
    %c0_85 = arith.constant 0 : index
    %c0_86 = arith.constant 0 : index
    %159 = vector.load %arg3[%158, %c0_85, %c0_86] : memref<8x4x32xf32, #tpu.memory_space<vmem>>, vector<1x4x32xf32>
    %160 = vector.shape_cast %159 : vector<1x4x32xf32> to vector<4x32xf32>
    %161 = arith.mulf %148, %139 : vector<4x32xf32>
    %162 = arith.addf %160, %161 : vector<4x32xf32>
    %163 = math.tanh %162 : vector<4x32xf32>
    %cst_87 = arith.constant 1.000000e+00 : f32
    %164 = vector.broadcast %cst_87 : f32 to vector<4x32xf32>
    %165 = arith.subf %164, %157 : vector<4x32xf32>
    %166 = arith.mulf %165, %163 : vector<4x32xf32>
    %167 = arith.mulf %157, %125 : vector<4x32xf32>
    %168 = arith.addf %166, %167 : vector<4x32xf32>
    %169 = arith.index_cast %c3_i32 : i32 to index
    %c0_88 = arith.constant 0 : index
    %c0_89 = arith.constant 0 : index
    %170 = vector.load %arg8[%169, %c0_88, %c0_89] : memref<16x4x32xf32, #tpu.memory_space<vmem>>, vector<1x4x32xf32>
    %171 = vector.shape_cast %170 : vector<1x4x32xf32> to vector<4x32xf32>
    %172 = vector.shape_cast %168 : vector<4x32xf32> to vector<1x4x32xf32>
    tpu.vector_store %arg8[%169, %c0_88, %c0_89], %172 {strides = array<i32>} : memref<16x4x32xf32, #tpu.memory_space<vmem>>, vector<1x4x32xf32>,
    %c4_i32 = arith.constant 4 : i32
    %c8_i32_90 = arith.constant 8 : i32
    %173 = arith.remsi %c4_i32, %c8_i32_90 : i32
    %c0_91 = arith.constant 0 : index
    %c0_92 = arith.constant 0 : index
    %174 = vector.load %arg4[%c0_91, %c0_92] : memref<32x32xf32, #tpu.memory_space<vmem>>, vector<32x32xf32>
    %cst_93 = arith.constant dense<0.000000e+00> : vector<4x32xf32>
    %175 = tpu.matmul %168, %174, %cst_93 {dimension_numbers = #tpu.dot_dimension_numbers<[1], [0], [0], [1], [0, 0, 1, 1], [], []>} : vector<4x32xf32>, vector<32x32xf32>, vector<4x32xf32> -> vector<4x32xf32>
    %c0_94 = arith.constant 0 : index
    %c0_95 = arith.constant 0 : index
    %176 = vector.load %arg5[%c0_94, %c0_95] : memref<32x32xf32, #tpu.memory_space<vmem>>, vector<32x32xf32>
    %cst_96 = arith.constant dense<0.000000e+00> : vector<4x32xf32>
    %177 = tpu.matmul %168, %176, %cst_96 {dimension_numbers = #tpu.dot_dimension_numbers<[1], [0], [0], [1], [0, 0, 1, 1], [], []>} : vector<4x32xf32>, vector<32x32xf32>, vector<4x32xf32> -> vector<4x32xf32>
    %c0_97 = arith.constant 0 : index
    %c0_98 = arith.constant 0 : index
    %178 = vector.load %arg6[%c0_97, %c0_98] : memref<32x32xf32, #tpu.memory_space<vmem>>, vector<32x32xf32>
    %cst_99 = arith.constant dense<0.000000e+00> : vector<4x32xf32>
    %179 = tpu.matmul %168, %178, %cst_99 {dimension_numbers = #tpu.dot_dimension_numbers<[1], [0], [0], [1], [0, 0, 1, 1], [], []>} : vector<4x32xf32>, vector<32x32xf32>, vector<4x32xf32> -> vector<4x32xf32>
    %c0_100 = arith.constant 0 : index
    %c0_101 = arith.constant 0 : index
    %180 = vector.load %arg7[%c0_100, %c0_101] : memref<1x32xf32, #tpu.memory_space<vmem>>, vector<1x32xf32>
    %181 = vector.broadcast %180 : vector<1x32xf32> to vector<4x32xf32>
    %182 = arith.addf %179, %181 : vector<4x32xf32>
    %183 = arith.index_cast %173 : i32 to index
    %c0_102 = arith.constant 0 : index
    %c0_103 = arith.constant 0 : index
    %184 = vector.load %arg1[%183, %c0_102, %c0_103] : memref<8x4x32xf32, #tpu.memory_space<vmem>>, vector<1x4x32xf32>
    %185 = vector.shape_cast %184 : vector<1x4x32xf32> to vector<4x32xf32>
    %186 = arith.addf %185, %175 : vector<4x32xf32>
    %187 = arith.negf %186 : vector<4x32xf32>
    %188 = math.exp %187 : vector<4x32xf32>
    %cst_104 = arith.constant 1.000000e+00 : f32
    %189 = vector.broadcast %cst_104 : f32 to vector<4x32xf32>
    %190 = arith.addf %189, %188 : vector<4x32xf32>
    %191 = arith.divf %189, %190 : vector<4x32xf32>
    %192 = arith.index_cast %173 : i32 to index
    %c0_105 = arith.constant 0 : index
    %c0_106 = arith.constant 0 : index
    %193 = vector.load %arg2[%192, %c0_105, %c0_106] : memref<8x4x32xf32, #tpu.memory_space<vmem>>, vector<1x4x32xf32>
    %194 = vector.shape_cast %193 : vector<1x4x32xf32> to vector<4x32xf32>
    %195 = arith.addf %194, %177 : vector<4x32xf32>
    %196 = arith.negf %195 : vector<4x32xf32>
    %197 = math.exp %196 : vector<4x32xf32>
    %cst_107 = arith.constant 1.000000e+00 : f32
    %198 = vector.broadcast %cst_107 : f32 to vector<4x32xf32>
    %199 = arith.addf %198, %197 : vector<4x32xf32>
    %200 = arith.divf %198, %199 : vector<4x32xf32>
    %201 = arith.index_cast %173 : i32 to index
    %c0_108 = arith.constant 0 : index
    %c0_109 = arith.constant 0 : index
    %202 = vector.load %arg3[%201, %c0_108, %c0_109] : memref<8x4x32xf32, #tpu.memory_space<vmem>>, vector<1x4x32xf32>
    %203 = vector.shape_cast %202 : vector<1x4x32xf32> to vector<4x32xf32>
    %204 = arith.mulf %191, %182 : vector<4x32xf32>
    %205 = arith.addf %203, %204 : vector<4x32xf32>
    %206 = math.tanh %205 : vector<4x32xf32>
    %cst_110 = arith.constant 1.000000e+00 : f32
    %207 = vector.broadcast %cst_110 : f32 to vector<4x32xf32>
    %208 = arith.subf %207, %200 : vector<4x32xf32>
    %209 = arith.mulf %208, %206 : vector<4x32xf32>
    %210 = arith.mulf %200, %168 : vector<4x32xf32>
    %211 = arith.addf %209, %210 : vector<4x32xf32>
    %212 = arith.index_cast %c4_i32 : i32 to index
    %c0_111 = arith.constant 0 : index
    %c0_112 = arith.constant 0 : index
    %213 = vector.load %arg8[%212, %c0_111, %c0_112] : memref<16x4x32xf32, #tpu.memory_space<vmem>>, vector<1x4x32xf32>
    %214 = vector.shape_cast %213 : vector<1x4x32xf32> to vector<4x32xf32>
    %215 = vector.shape_cast %211 : vector<4x32xf32> to vector<1x4x32xf32>
    tpu.vector_store %arg8[%212, %c0_111, %c0_112], %215 {strides = array<i32>} : memref<16x4x32xf32, #tpu.memory_space<vmem>>, vector<1x4x32xf32>,
    %c5_i32 = arith.constant 5 : i32
    %c8_i32_113 = arith.constant 8 : i32
    %216 = arith.remsi %c5_i32, %c8_i32_113 : i32
    %c0_114 = arith.constant 0 : index
    %c0_115 = arith.constant 0 : index
    %217 = vector.load %arg4[%c0_114, %c0_115] : memref<32x32xf32, #tpu.memory_space<vmem>>, vector<32x32xf32>
    %cst_116 = arith.constant dense<0.000000e+00> : vector<4x32xf32>
    %218 = tpu.matmul %211, %217, %cst_116 {dimension_numbers = #tpu.dot_dimension_numbers<[1], [0], [0], [1], [0, 0, 1, 1], [], []>} : vector<4x32xf32>, vector<32x32xf32>, vector<4x32xf32> -> vector<4x32xf32>
    %c0_117 = arith.constant 0 : index
    %c0_118 = arith.constant 0 : index
    %219 = vector.load %arg5[%c0_117, %c0_118] : memref<32x32xf32, #tpu.memory_space<vmem>>, vector<32x32xf32>
    %cst_119 = arith.constant dense<0.000000e+00> : vector<4x32xf32>
    %220 = tpu.matmul %211, %219, %cst_119 {dimension_numbers = #tpu.dot_dimension_numbers<[1], [0], [0], [1], [0, 0, 1, 1], [], []>} : vector<4x32xf32>, vector<32x32xf32>, vector<4x32xf32> -> vector<4x32xf32>
    %c0_120 = arith.constant 0 : index
    %c0_121 = arith.constant 0 : index
    %221 = vector.load %arg6[%c0_120, %c0_121] : memref<32x32xf32, #tpu.memory_space<vmem>>, vector<32x32xf32>
    %cst_122 = arith.constant dense<0.000000e+00> : vector<4x32xf32>
    %222 = tpu.matmul %211, %221, %cst_122 {dimension_numbers = #tpu.dot_dimension_numbers<[1], [0], [0], [1], [0, 0, 1, 1], [], []>} : vector<4x32xf32>, vector<32x32xf32>, vector<4x32xf32> -> vector<4x32xf32>
    %c0_123 = arith.constant 0 : index
    %c0_124 = arith.constant 0 : index
    %223 = vector.load %arg7[%c0_123, %c0_124] : memref<1x32xf32, #tpu.memory_space<vmem>>, vector<1x32xf32>
    %224 = vector.broadcast %223 : vector<1x32xf32> to vector<4x32xf32>
    %225 = arith.addf %222, %224 : vector<4x32xf32>
    %226 = arith.index_cast %216 : i32 to index
    %c0_125 = arith.constant 0 : index
    %c0_126 = arith.constant 0 : index
    %227 = vector.load %arg1[%226, %c0_125, %c0_126] : memref<8x4x32xf32, #tpu.memory_space<vmem>>, vector<1x4x32xf32>
    %228 = vector.shape_cast %227 : vector<1x4x32xf32> to vector<4x32xf32>
    %229 = arith.addf %228, %218 : vector<4x32xf32>
    %230 = arith.negf %229 : vector<4x32xf32>
    %231 = math.exp %230 : vector<4x32xf32>
    %cst_127 = arith.constant 1.000000e+00 : f32
    %232 = vector.broadcast %cst_127 : f32 to vector<4x32xf32>
    %233 = arith.addf %232, %231 : vector<4x32xf32>
    %234 = arith.divf %232, %233 : vector<4x32xf32>
    %235 = arith.index_cast %216 : i32 to index
    %c0_128 = arith.constant 0 : index
    %c0_129 = arith.constant 0 : index
    %236 = vector.load %arg2[%235, %c0_128, %c0_129] : memref<8x4x32xf32, #tpu.memory_space<vmem>>, vector<1x4x32xf32>
    %237 = vector.shape_cast %236 : vector<1x4x32xf32> to vector<4x32xf32>
    %238 = arith.addf %237, %220 : vector<4x32xf32>
    %239 = arith.negf %238 : vector<4x32xf32>
    %240 = math.exp %239 : vector<4x32xf32>
    %cst_130 = arith.constant 1.000000e+00 : f32
    %241 = vector.broadcast %cst_130 : f32 to vector<4x32xf32>
    %242 = arith.addf %241, %240 : vector<4x32xf32>
    %243 = arith.divf %241, %242 : vector<4x32xf32>
    %244 = arith.index_cast %216 : i32 to index
    %c0_131 = arith.constant 0 : index
    %c0_132 = arith.constant 0 : index
    %245 = vector.load %arg3[%244, %c0_131, %c0_132] : memref<8x4x32xf32, #tpu.memory_space<vmem>>, vector<1x4x32xf32>
    %246 = vector.shape_cast %245 : vector<1x4x32xf32> to vector<4x32xf32>
    %247 = arith.mulf %234, %225 : vector<4x32xf32>
    %248 = arith.addf %246, %247 : vector<4x32xf32>
    %249 = math.tanh %248 : vector<4x32xf32>
    %cst_133 = arith.constant 1.000000e+00 : f32
    %250 = vector.broadcast %cst_133 : f32 to vector<4x32xf32>
    %251 = arith.subf %250, %243 : vector<4x32xf32>
    %252 = arith.mulf %251, %249 : vector<4x32xf32>
    %253 = arith.mulf %243, %211 : vector<4x32xf32>
    %254 = arith.addf %252, %253 : vector<4x32xf32>
    %255 = arith.index_cast %c5_i32 : i32 to index
    %c0_134 = arith.constant 0 : index
    %c0_135 = arith.constant 0 : index
    %256 = vector.load %arg8[%255, %c0_134, %c0_135] : memref<16x4x32xf32, #tpu.memory_space<vmem>>, vector<1x4x32xf32>
    %257 = vector.shape_cast %256 : vector<1x4x32xf32> to vector<4x32xf32>
    %258 = vector.shape_cast %254 : vector<4x32xf32> to vector<1x4x32xf32>
    tpu.vector_store %arg8[%255, %c0_134, %c0_135], %258 {strides = array<i32>} : memref<16x4x32xf32, #tpu.memory_space<vmem>>, vector<1x4x32xf32>,
    %c6_i32 = arith.constant 6 : i32
    %c8_i32_136 = arith.constant 8 : i32
    %259 = arith.remsi %c6_i32, %c8_i32_136 : i32
    %c0_137 = arith.constant 0 : index
    %c0_138 = arith.constant 0 : index
    %260 = vector.load %arg4[%c0_137, %c0_138] : memref<32x32xf32, #tpu.memory_space<vmem>>, vector<32x32xf32>
    %cst_139 = arith.constant dense<0.000000e+00> : vector<4x32xf32>
    %261 = tpu.matmul %254, %260, %cst_139 {dimension_numbers = #tpu.dot_dimension_numbers<[1], [0], [0], [1], [0, 0, 1, 1], [], []>} : vector<4x32xf32>, vector<32x32xf32>, vector<4x32xf32> -> vector<4x32xf32>
    %c0_140 = arith.constant 0 : index
    %c0_141 = arith.constant 0 : index
    %262 = vector.load %arg5[%c0_140, %c0_141] : memref<32x32xf32, #tpu.memory_space<vmem>>, vector<32x32xf32>
    %cst_142 = arith.constant dense<0.000000e+00> : vector<4x32xf32>
    %263 = tpu.matmul %254, %262, %cst_142 {dimension_numbers = #tpu.dot_dimension_numbers<[1], [0], [0], [1], [0, 0, 1, 1], [], []>} : vector<4x32xf32>, vector<32x32xf32>, vector<4x32xf32> -> vector<4x32xf32>
    %c0_143 = arith.constant 0 : index
    %c0_144 = arith.constant 0 : index
    %264 = vector.load %arg6[%c0_143, %c0_144] : memref<32x32xf32, #tpu.memory_space<vmem>>, vector<32x32xf32>
    %cst_145 = arith.constant dense<0.000000e+00> : vector<4x32xf32>
    %265 = tpu.matmul %254, %264, %cst_145 {dimension_numbers = #tpu.dot_dimension_numbers<[1], [0], [0], [1], [0, 0, 1, 1], [], []>} : vector<4x32xf32>, vector<32x32xf32>, vector<4x32xf32> -> vector<4x32xf32>
    %c0_146 = arith.constant 0 : index
    %c0_147 = arith.constant 0 : index
    %266 = vector.load %arg7[%c0_146, %c0_147] : memref<1x32xf32, #tpu.memory_space<vmem>>, vector<1x32xf32>
    %267 = vector.broadcast %266 : vector<1x32xf32> to vector<4x32xf32>
    %268 = arith.addf %265, %267 : vector<4x32xf32>
    %269 = arith.index_cast %259 : i32 to index
    %c0_148 = arith.constant 0 : index
    %c0_149 = arith.constant 0 : index
    %270 = vector.load %arg1[%269, %c0_148, %c0_149] : memref<8x4x32xf32, #tpu.memory_space<vmem>>, vector<1x4x32xf32>
    %271 = vector.shape_cast %270 : vector<1x4x32xf32> to vector<4x32xf32>
    %272 = arith.addf %271, %261 : vector<4x32xf32>
    %273 = arith.negf %272 : vector<4x32xf32>
    %274 = math.exp %273 : vector<4x32xf32>
    %cst_150 = arith.constant 1.000000e+00 : f32
    %275 = vector.broadcast %cst_150 : f32 to vector<4x32xf32>
    %276 = arith.addf %275, %274 : vector<4x32xf32>
    %277 = arith.divf %275, %276 : vector<4x32xf32>
    %278 = arith.index_cast %259 : i32 to index
    %c0_151 = arith.constant 0 : index
    %c0_152 = arith.constant 0 : index
    %279 = vector.load %arg2[%278, %c0_151, %c0_152] : memref<8x4x32xf32, #tpu.memory_space<vmem>>, vector<1x4x32xf32>
    %280 = vector.shape_cast %279 : vector<1x4x32xf32> to vector<4x32xf32>
    %281 = arith.addf %280, %263 : vector<4x32xf32>
    %282 = arith.negf %281 : vector<4x32xf32>
    %283 = math.exp %282 : vector<4x32xf32>
    %cst_153 = arith.constant 1.000000e+00 : f32
    %284 = vector.broadcast %cst_153 : f32 to vector<4x32xf32>
    %285 = arith.addf %284, %283 : vector<4x32xf32>
    %286 = arith.divf %284, %285 : vector<4x32xf32>
    %287 = arith.index_cast %259 : i32 to index
    %c0_154 = arith.constant 0 : index
    %c0_155 = arith.constant 0 : index
    %288 = vector.load %arg3[%287, %c0_154, %c0_155] : memref<8x4x32xf32, #tpu.memory_space<vmem>>, vector<1x4x32xf32>
    %289 = vector.shape_cast %288 : vector<1x4x32xf32> to vector<4x32xf32>
    %290 = arith.mulf %277, %268 : vector<4x32xf32>
    %291 = arith.addf %289, %290 : vector<4x32xf32>
    %292 = math.tanh %291 : vector<4x32xf32>
    %cst_156 = arith.constant 1.000000e+00 : f32
    %293 = vector.broadcast %cst_156 : f32 to vector<4x32xf32>
    %294 = arith.subf %293, %286 : vector<4x32xf32>
    %295 = arith.mulf %294, %292 : vector<4x32xf32>
    %296 = arith.mulf %286, %254 : vector<4x32xf32>
    %297 = arith.addf %295, %296 : vector<4x32xf32>
    %298 = arith.index_cast %c6_i32 : i32 to index
    %c0_157 = arith.constant 0 : index
    %c0_158 = arith.constant 0 : index
    %299 = vector.load %arg8[%298, %c0_157, %c0_158] : memref<16x4x32xf32, #tpu.memory_space<vmem>>, vector<1x4x32xf32>
    %300 = vector.shape_cast %299 : vector<1x4x32xf32> to vector<4x32xf32>
    %301 = vector.shape_cast %297 : vector<4x32xf32> to vector<1x4x32xf32>
    tpu.vector_store %arg8[%298, %c0_157, %c0_158], %301 {strides = array<i32>} : memref<16x4x32xf32, #tpu.memory_space<vmem>>, vector<1x4x32xf32>,
    %c7_i32 = arith.constant 7 : i32
    %c8_i32_159 = arith.constant 8 : i32
    %302 = arith.remsi %c7_i32, %c8_i32_159 : i32
    %c0_160 = arith.constant 0 : index
    %c0_161 = arith.constant 0 : index
    %303 = vector.load %arg4[%c0_160, %c0_161] : memref<32x32xf32, #tpu.memory_space<vmem>>, vector<32x32xf32>
    %cst_162 = arith.constant dense<0.000000e+00> : vector<4x32xf32>
    %304 = tpu.matmul %297, %303, %cst_162 {dimension_numbers = #tpu.dot_dimension_numbers<[1], [0], [0], [1], [0, 0, 1, 1], [], []>} : vector<4x32xf32>, vector<32x32xf32>, vector<4x32xf32> -> vector<4x32xf32>
    %c0_163 = arith.constant 0 : index
    %c0_164 = arith.constant 0 : index
    %305 = vector.load %arg5[%c0_163, %c0_164] : memref<32x32xf32, #tpu.memory_space<vmem>>, vector<32x32xf32>
    %cst_165 = arith.constant dense<0.000000e+00> : vector<4x32xf32>
    %306 = tpu.matmul %297, %305, %cst_165 {dimension_numbers = #tpu.dot_dimension_numbers<[1], [0], [0], [1], [0, 0, 1, 1], [], []>} : vector<4x32xf32>, vector<32x32xf32>, vector<4x32xf32> -> vector<4x32xf32>
    %c0_166 = arith.constant 0 : index
    %c0_167 = arith.constant 0 : index
    %307 = vector.load %arg6[%c0_166, %c0_167] : memref<32x32xf32, #tpu.memory_space<vmem>>, vector<32x32xf32>
    %cst_168 = arith.constant dense<0.000000e+00> : vector<4x32xf32>
    %308 = tpu.matmul %297, %307, %cst_168 {dimension_numbers = #tpu.dot_dimension_numbers<[1], [0], [0], [1], [0, 0, 1, 1], [], []>} : vector<4x32xf32>, vector<32x32xf32>, vector<4x32xf32> -> vector<4x32xf32>
    %c0_169 = arith.constant 0 : index
    %c0_170 = arith.constant 0 : index
    %309 = vector.load %arg7[%c0_169, %c0_170] : memref<1x32xf32, #tpu.memory_space<vmem>>, vector<1x32xf32>
    %310 = vector.broadcast %309 : vector<1x32xf32> to vector<4x32xf32>
    %311 = arith.addf %308, %310 : vector<4x32xf32>
    %312 = arith.index_cast %302 : i32 to index
    %c0_171 = arith.constant 0 : index
    %c0_172 = arith.constant 0 : index
    %313 = vector.load %arg1[%312, %c0_171, %c0_172] : memref<8x4x32xf32, #tpu.memory_space<vmem>>, vector<1x4x32xf32>
    %314 = vector.shape_cast %313 : vector<1x4x32xf32> to vector<4x32xf32>
    %315 = arith.addf %314, %304 : vector<4x32xf32>
    %316 = arith.negf %315 : vector<4x32xf32>
    %317 = math.exp %316 : vector<4x32xf32>
    %cst_173 = arith.constant 1.000000e+00 : f32
    %318 = vector.broadcast %cst_173 : f32 to vector<4x32xf32>
    %319 = arith.addf %318, %317 : vector<4x32xf32>
    %320 = arith.divf %318, %319 : vector<4x32xf32>
    %321 = arith.index_cast %302 : i32 to index
    %c0_174 = arith.constant 0 : index
    %c0_175 = arith.constant 0 : index
    %322 = vector.load %arg2[%321, %c0_174, %c0_175] : memref<8x4x32xf32, #tpu.memory_space<vmem>>, vector<1x4x32xf32>
    %323 = vector.shape_cast %322 : vector<1x4x32xf32> to vector<4x32xf32>
    %324 = arith.addf %323, %306 : vector<4x32xf32>
    %325 = arith.negf %324 : vector<4x32xf32>
    %326 = math.exp %325 : vector<4x32xf32>
    %cst_176 = arith.constant 1.000000e+00 : f32
    %327 = vector.broadcast %cst_176 : f32 to vector<4x32xf32>
    %328 = arith.addf %327, %326 : vector<4x32xf32>
    %329 = arith.divf %327, %328 : vector<4x32xf32>
    %330 = arith.index_cast %302 : i32 to index
    %c0_177 = arith.constant 0 : index
    %c0_178 = arith.constant 0 : index
    %331 = vector.load %arg3[%330, %c0_177, %c0_178] : memref<8x4x32xf32, #tpu.memory_space<vmem>>, vector<1x4x32xf32>
    %332 = vector.shape_cast %331 : vector<1x4x32xf32> to vector<4x32xf32>
    %333 = arith.mulf %320, %311 : vector<4x32xf32>
    %334 = arith.addf %332, %333 : vector<4x32xf32>
    %335 = math.tanh %334 : vector<4x32xf32>
    %cst_179 = arith.constant 1.000000e+00 : f32
    %336 = vector.broadcast %cst_179 : f32 to vector<4x32xf32>
    %337 = arith.subf %336, %329 : vector<4x32xf32>
    %338 = arith.mulf %337, %335 : vector<4x32xf32>
    %339 = arith.mulf %329, %297 : vector<4x32xf32>
    %340 = arith.addf %338, %339 : vector<4x32xf32>
    %341 = arith.index_cast %c7_i32 : i32 to index
    %c0_180 = arith.constant 0 : index
    %c0_181 = arith.constant 0 : index
    %342 = vector.load %arg8[%341, %c0_180, %c0_181] : memref<16x4x32xf32, #tpu.memory_space<vmem>>, vector<1x4x32xf32>
    %343 = vector.shape_cast %342 : vector<1x4x32xf32> to vector<4x32xf32>
    %344 = vector.shape_cast %340 : vector<4x32xf32> to vector<1x4x32xf32>
    tpu.vector_store %arg8[%341, %c0_180, %c0_181], %344 {strides = array<i32>} : memref<16x4x32xf32, #tpu.memory_space<vmem>>, vector<1x4x32xf32>,
    %c8_i32_182 = arith.constant 8 : i32
    %c8_i32_183 = arith.constant 8 : i32
    %345 = arith.remsi %c8_i32_182, %c8_i32_183 : i32
    %c0_184 = arith.constant 0 : index
    %c0_185 = arith.constant 0 : index
    %346 = vector.load %arg4[%c0_184, %c0_185] : memref<32x32xf32, #tpu.memory_space<vmem>>, vector<32x32xf32>
    %cst_186 = arith.constant dense<0.000000e+00> : vector<4x32xf32>
    %347 = tpu.matmul %340, %346, %cst_186 {dimension_numbers = #tpu.dot_dimension_numbers<[1], [0], [0], [1], [0, 0, 1, 1], [], []>} : vector<4x32xf32>, vector<32x32xf32>, vector<4x32xf32> -> vector<4x32xf32>
    %c0_187 = arith.constant 0 : index
    %c0_188 = arith.constant 0 : index
    %348 = vector.load %arg5[%c0_187, %c0_188] : memref<32x32xf32, #tpu.memory_space<vmem>>, vector<32x32xf32>
    %cst_189 = arith.constant dense<0.000000e+00> : vector<4x32xf32>
    %349 = tpu.matmul %340, %348, %cst_189 {dimension_numbers = #tpu.dot_dimension_numbers<[1], [0], [0], [1], [0, 0, 1, 1], [], []>} : vector<4x32xf32>, vector<32x32xf32>, vector<4x32xf32> -> vector<4x32xf32>
    %c0_190 = arith.constant 0 : index
    %c0_191 = arith.constant 0 : index
    %350 = vector.load %arg6[%c0_190, %c0_191] : memref<32x32xf32, #tpu.memory_space<vmem>>, vector<32x32xf32>
    %cst_192 = arith.constant dense<0.000000e+00> : vector<4x32xf32>
    %351 = tpu.matmul %340, %350, %cst_192 {dimension_numbers = #tpu.dot_dimension_numbers<[1], [0], [0], [1], [0, 0, 1, 1], [], []>} : vector<4x32xf32>, vector<32x32xf32>, vector<4x32xf32> -> vector<4x32xf32>
    %c0_193 = arith.constant 0 : index
    %c0_194 = arith.constant 0 : index
    %352 = vector.load %arg7[%c0_193, %c0_194] : memref<1x32xf32, #tpu.memory_space<vmem>>, vector<1x32xf32>
    %353 = vector.broadcast %352 : vector<1x32xf32> to vector<4x32xf32>
    %354 = arith.addf %351, %353 : vector<4x32xf32>
    %355 = arith.index_cast %345 : i32 to index
    %c0_195 = arith.constant 0 : index
    %c0_196 = arith.constant 0 : index
    %356 = vector.load %arg1[%355, %c0_195, %c0_196] : memref<8x4x32xf32, #tpu.memory_space<vmem>>, vector<1x4x32xf32>
    %357 = vector.shape_cast %356 : vector<1x4x32xf32> to vector<4x32xf32>
    %358 = arith.addf %357, %347 : vector<4x32xf32>
    %359 = arith.negf %358 : vector<4x32xf32>
    %360 = math.exp %359 : vector<4x32xf32>
    %cst_197 = arith.constant 1.000000e+00 : f32
    %361 = vector.broadcast %cst_197 : f32 to vector<4x32xf32>
    %362 = arith.addf %361, %360 : vector<4x32xf32>
    %363 = arith.divf %361, %362 : vector<4x32xf32>
    %364 = arith.index_cast %345 : i32 to index
    %c0_198 = arith.constant 0 : index
    %c0_199 = arith.constant 0 : index
    %365 = vector.load %arg2[%364, %c0_198, %c0_199] : memref<8x4x32xf32, #tpu.memory_space<vmem>>, vector<1x4x32xf32>
    %366 = vector.shape_cast %365 : vector<1x4x32xf32> to vector<4x32xf32>
    %367 = arith.addf %366, %349 : vector<4x32xf32>
    %368 = arith.negf %367 : vector<4x32xf32>
    %369 = math.exp %368 : vector<4x32xf32>
    %cst_200 = arith.constant 1.000000e+00 : f32
    %370 = vector.broadcast %cst_200 : f32 to vector<4x32xf32>
    %371 = arith.addf %370, %369 : vector<4x32xf32>
    %372 = arith.divf %370, %371 : vector<4x32xf32>
    %373 = arith.index_cast %345 : i32 to index
    %c0_201 = arith.constant 0 : index
    %c0_202 = arith.constant 0 : index
    %374 = vector.load %arg3[%373, %c0_201, %c0_202] : memref<8x4x32xf32, #tpu.memory_space<vmem>>, vector<1x4x32xf32>
    %375 = vector.shape_cast %374 : vector<1x4x32xf32> to vector<4x32xf32>
    %376 = arith.mulf %363, %354 : vector<4x32xf32>
    %377 = arith.addf %375, %376 : vector<4x32xf32>
    %378 = math.tanh %377 : vector<4x32xf32>
    %cst_203 = arith.constant 1.000000e+00 : f32
    %379 = vector.broadcast %cst_203 : f32 to vector<4x32xf32>
    %380 = arith.subf %379, %372 : vector<4x32xf32>
    %381 = arith.mulf %380, %378 : vector<4x32xf32>
    %382 = arith.mulf %372, %340 : vector<4x32xf32>
    %383 = arith.addf %381, %382 : vector<4x32xf32>
    %384 = arith.index_cast %c8_i32_182 : i32 to index
    %c0_204 = arith.constant 0 : index
    %c0_205 = arith.constant 0 : index
    %385 = vector.load %arg8[%384, %c0_204, %c0_205] : memref<16x4x32xf32, #tpu.memory_space<vmem>>, vector<1x4x32xf32>
    %386 = vector.shape_cast %385 : vector<1x4x32xf32> to vector<4x32xf32>
    %387 = vector.shape_cast %383 : vector<4x32xf32> to vector<1x4x32xf32>
    tpu.vector_store %arg8[%384, %c0_204, %c0_205], %387 {strides = array<i32>} : memref<16x4x32xf32, #tpu.memory_space<vmem>>, vector<1x4x32xf32>,
    %c9_i32 = arith.constant 9 : i32
    %c8_i32_206 = arith.constant 8 : i32
    %388 = arith.remsi %c9_i32, %c8_i32_206 : i32
    %c0_207 = arith.constant 0 : index
    %c0_208 = arith.constant 0 : index
    %389 = vector.load %arg4[%c0_207, %c0_208] : memref<32x32xf32, #tpu.memory_space<vmem>>, vector<32x32xf32>
    %cst_209 = arith.constant dense<0.000000e+00> : vector<4x32xf32>
    %390 = tpu.matmul %383, %389, %cst_209 {dimension_numbers = #tpu.dot_dimension_numbers<[1], [0], [0], [1], [0, 0, 1, 1], [], []>} : vector<4x32xf32>, vector<32x32xf32>, vector<4x32xf32> -> vector<4x32xf32>
    %c0_210 = arith.constant 0 : index
    %c0_211 = arith.constant 0 : index
    %391 = vector.load %arg5[%c0_210, %c0_211] : memref<32x32xf32, #tpu.memory_space<vmem>>, vector<32x32xf32>
    %cst_212 = arith.constant dense<0.000000e+00> : vector<4x32xf32>
    %392 = tpu.matmul %383, %391, %cst_212 {dimension_numbers = #tpu.dot_dimension_numbers<[1], [0], [0], [1], [0, 0, 1, 1], [], []>} : vector<4x32xf32>, vector<32x32xf32>, vector<4x32xf32> -> vector<4x32xf32>
    %c0_213 = arith.constant 0 : index
    %c0_214 = arith.constant 0 : index
    %393 = vector.load %arg6[%c0_213, %c0_214] : memref<32x32xf32, #tpu.memory_space<vmem>>, vector<32x32xf32>
    %cst_215 = arith.constant dense<0.000000e+00> : vector<4x32xf32>
    %394 = tpu.matmul %383, %393, %cst_215 {dimension_numbers = #tpu.dot_dimension_numbers<[1], [0], [0], [1], [0, 0, 1, 1], [], []>} : vector<4x32xf32>, vector<32x32xf32>, vector<4x32xf32> -> vector<4x32xf32>
    %c0_216 = arith.constant 0 : index
    %c0_217 = arith.constant 0 : index
    %395 = vector.load %arg7[%c0_216, %c0_217] : memref<1x32xf32, #tpu.memory_space<vmem>>, vector<1x32xf32>
    %396 = vector.broadcast %395 : vector<1x32xf32> to vector<4x32xf32>
    %397 = arith.addf %394, %396 : vector<4x32xf32>
    %398 = arith.index_cast %388 : i32 to index
    %c0_218 = arith.constant 0 : index
    %c0_219 = arith.constant 0 : index
    %399 = vector.load %arg1[%398, %c0_218, %c0_219] : memref<8x4x32xf32, #tpu.memory_space<vmem>>, vector<1x4x32xf32>
    %400 = vector.shape_cast %399 : vector<1x4x32xf32> to vector<4x32xf32>
    %401 = arith.addf %400, %390 : vector<4x32xf32>
    %402 = arith.negf %401 : vector<4x32xf32>
    %403 = math.exp %402 : vector<4x32xf32>
    %cst_220 = arith.constant 1.000000e+00 : f32
    %404 = vector.broadcast %cst_220 : f32 to vector<4x32xf32>
    %405 = arith.addf %404, %403 : vector<4x32xf32>
    %406 = arith.divf %404, %405 : vector<4x32xf32>
    %407 = arith.index_cast %388 : i32 to index
    %c0_221 = arith.constant 0 : index
    %c0_222 = arith.constant 0 : index
    %408 = vector.load %arg2[%407, %c0_221, %c0_222] : memref<8x4x32xf32, #tpu.memory_space<vmem>>, vector<1x4x32xf32>
    %409 = vector.shape_cast %408 : vector<1x4x32xf32> to vector<4x32xf32>
    %410 = arith.addf %409, %392 : vector<4x32xf32>
    %411 = arith.negf %410 : vector<4x32xf32>
    %412 = math.exp %411 : vector<4x32xf32>
    %cst_223 = arith.constant 1.000000e+00 : f32
    %413 = vector.broadcast %cst_223 : f32 to vector<4x32xf32>
    %414 = arith.addf %413, %412 : vector<4x32xf32>
    %415 = arith.divf %413, %414 : vector<4x32xf32>
    %416 = arith.index_cast %388 : i32 to index
    %c0_224 = arith.constant 0 : index
    %c0_225 = arith.constant 0 : index
    %417 = vector.load %arg3[%416, %c0_224, %c0_225] : memref<8x4x32xf32, #tpu.memory_space<vmem>>, vector<1x4x32xf32>
    %418 = vector.shape_cast %417 : vector<1x4x32xf32> to vector<4x32xf32>
    %419 = arith.mulf %406, %397 : vector<4x32xf32>
    %420 = arith.addf %418, %419 : vector<4x32xf32>
    %421 = math.tanh %420 : vector<4x32xf32>
    %cst_226 = arith.constant 1.000000e+00 : f32
    %422 = vector.broadcast %cst_226 : f32 to vector<4x32xf32>
    %423 = arith.subf %422, %415 : vector<4x32xf32>
    %424 = arith.mulf %423, %421 : vector<4x32xf32>
    %425 = arith.mulf %415, %383 : vector<4x32xf32>
    %426 = arith.addf %424, %425 : vector<4x32xf32>
    %427 = arith.index_cast %c9_i32 : i32 to index
    %c0_227 = arith.constant 0 : index
    %c0_228 = arith.constant 0 : index
    %428 = vector.load %arg8[%427, %c0_227, %c0_228] : memref<16x4x32xf32, #tpu.memory_space<vmem>>, vector<1x4x32xf32>
    %429 = vector.shape_cast %428 : vector<1x4x32xf32> to vector<4x32xf32>
    %430 = vector.shape_cast %426 : vector<4x32xf32> to vector<1x4x32xf32>
    tpu.vector_store %arg8[%427, %c0_227, %c0_228], %430 {strides = array<i32>} : memref<16x4x32xf32, #tpu.memory_space<vmem>>, vector<1x4x32xf32>,
    %c10_i32 = arith.constant 10 : i32
    %c8_i32_229 = arith.constant 8 : i32
    %431 = arith.remsi %c10_i32, %c8_i32_229 : i32
    %c0_230 = arith.constant 0 : index
    %c0_231 = arith.constant 0 : index
    %432 = vector.load %arg4[%c0_230, %c0_231] : memref<32x32xf32, #tpu.memory_space<vmem>>, vector<32x32xf32>
    %cst_232 = arith.constant dense<0.000000e+00> : vector<4x32xf32>
    %433 = tpu.matmul %426, %432, %cst_232 {dimension_numbers = #tpu.dot_dimension_numbers<[1], [0], [0], [1], [0, 0, 1, 1], [], []>} : vector<4x32xf32>, vector<32x32xf32>, vector<4x32xf32> -> vector<4x32xf32>
    %c0_233 = arith.constant 0 : index
    %c0_234 = arith.constant 0 : index
    %434 = vector.load %arg5[%c0_233, %c0_234] : memref<32x32xf32, #tpu.memory_space<vmem>>, vector<32x32xf32>
    %cst_235 = arith.constant dense<0.000000e+00> : vector<4x32xf32>
    %435 = tpu.matmul %426, %434, %cst_235 {dimension_numbers = #tpu.dot_dimension_numbers<[1], [0], [0], [1], [0, 0, 1, 1], [], []>} : vector<4x32xf32>, vector<32x32xf32>, vector<4x32xf32> -> vector<4x32xf32>
    %c0_236 = arith.constant 0 : index
    %c0_237 = arith.constant 0 : index
    %436 = vector.load %arg6[%c0_236, %c0_237] : memref<32x32xf32, #tpu.memory_space<vmem>>, vector<32x32xf32>
    %cst_238 = arith.constant dense<0.000000e+00> : vector<4x32xf32>
    %437 = tpu.matmul %426, %436, %cst_238 {dimension_numbers = #tpu.dot_dimension_numbers<[1], [0], [0], [1], [0, 0, 1, 1], [], []>} : vector<4x32xf32>, vector<32x32xf32>, vector<4x32xf32> -> vector<4x32xf32>
    %c0_239 = arith.constant 0 : index
    %c0_240 = arith.constant 0 : index
    %438 = vector.load %arg7[%c0_239, %c0_240] : memref<1x32xf32, #tpu.memory_space<vmem>>, vector<1x32xf32>
    %439 = vector.broadcast %438 : vector<1x32xf32> to vector<4x32xf32>
    %440 = arith.addf %437, %439 : vector<4x32xf32>
    %441 = arith.index_cast %431 : i32 to index
    %c0_241 = arith.constant 0 : index
    %c0_242 = arith.constant 0 : index
    %442 = vector.load %arg1[%441, %c0_241, %c0_242] : memref<8x4x32xf32, #tpu.memory_space<vmem>>, vector<1x4x32xf32>
    %443 = vector.shape_cast %442 : vector<1x4x32xf32> to vector<4x32xf32>
    %444 = arith.addf %443, %433 : vector<4x32xf32>
    %445 = arith.negf %444 : vector<4x32xf32>
    %446 = math.exp %445 : vector<4x32xf32>
    %cst_243 = arith.constant 1.000000e+00 : f32
    %447 = vector.broadcast %cst_243 : f32 to vector<4x32xf32>
    %448 = arith.addf %447, %446 : vector<4x32xf32>
    %449 = arith.divf %447, %448 : vector<4x32xf32>
    %450 = arith.index_cast %431 : i32 to index
    %c0_244 = arith.constant 0 : index
    %c0_245 = arith.constant 0 : index
    %451 = vector.load %arg2[%450, %c0_244, %c0_245] : memref<8x4x32xf32, #tpu.memory_space<vmem>>, vector<1x4x32xf32>
    %452 = vector.shape_cast %451 : vector<1x4x32xf32> to vector<4x32xf32>
    %453 = arith.addf %452, %435 : vector<4x32xf32>
    %454 = arith.negf %453 : vector<4x32xf32>
    %455 = math.exp %454 : vector<4x32xf32>
    %cst_246 = arith.constant 1.000000e+00 : f32
    %456 = vector.broadcast %cst_246 : f32 to vector<4x32xf32>
    %457 = arith.addf %456, %455 : vector<4x32xf32>
    %458 = arith.divf %456, %457 : vector<4x32xf32>
    %459 = arith.index_cast %431 : i32 to index
    %c0_247 = arith.constant 0 : index
    %c0_248 = arith.constant 0 : index
    %460 = vector.load %arg3[%459, %c0_247, %c0_248] : memref<8x4x32xf32, #tpu.memory_space<vmem>>, vector<1x4x32xf32>
    %461 = vector.shape_cast %460 : vector<1x4x32xf32> to vector<4x32xf32>
    %462 = arith.mulf %449, %440 : vector<4x32xf32>
    %463 = arith.addf %461, %462 : vector<4x32xf32>
    %464 = math.tanh %463 : vector<4x32xf32>
    %cst_249 = arith.constant 1.000000e+00 : f32
    %465 = vector.broadcast %cst_249 : f32 to vector<4x32xf32>
    %466 = arith.subf %465, %458 : vector<4x32xf32>
    %467 = arith.mulf %466, %464 : vector<4x32xf32>
    %468 = arith.mulf %458, %426 : vector<4x32xf32>
    %469 = arith.addf %467, %468 : vector<4x32xf32>
    %470 = arith.index_cast %c10_i32 : i32 to index
    %c0_250 = arith.constant 0 : index
    %c0_251 = arith.constant 0 : index
    %471 = vector.load %arg8[%470, %c0_250, %c0_251] : memref<16x4x32xf32, #tpu.memory_space<vmem>>, vector<1x4x32xf32>
    %472 = vector.shape_cast %471 : vector<1x4x32xf32> to vector<4x32xf32>
    %473 = vector.shape_cast %469 : vector<4x32xf32> to vector<1x4x32xf32>
    tpu.vector_store %arg8[%470, %c0_250, %c0_251], %473 {strides = array<i32>} : memref<16x4x32xf32, #tpu.memory_space<vmem>>, vector<1x4x32xf32>,
    %c11_i32 = arith.constant 11 : i32
    %c8_i32_252 = arith.constant 8 : i32
    %474 = arith.remsi %c11_i32, %c8_i32_252 : i32
    %c0_253 = arith.constant 0 : index
    %c0_254 = arith.constant 0 : index
    %475 = vector.load %arg4[%c0_253, %c0_254] : memref<32x32xf32, #tpu.memory_space<vmem>>, vector<32x32xf32>
    %cst_255 = arith.constant dense<0.000000e+00> : vector<4x32xf32>
    %476 = tpu.matmul %469, %475, %cst_255 {dimension_numbers = #tpu.dot_dimension_numbers<[1], [0], [0], [1], [0, 0, 1, 1], [], []>} : vector<4x32xf32>, vector<32x32xf32>, vector<4x32xf32> -> vector<4x32xf32>
    %c0_256 = arith.constant 0 : index
    %c0_257 = arith.constant 0 : index
    %477 = vector.load %arg5[%c0_256, %c0_257] : memref<32x32xf32, #tpu.memory_space<vmem>>, vector<32x32xf32>
    %cst_258 = arith.constant dense<0.000000e+00> : vector<4x32xf32>
    %478 = tpu.matmul %469, %477, %cst_258 {dimension_numbers = #tpu.dot_dimension_numbers<[1], [0], [0], [1], [0, 0, 1, 1], [], []>} : vector<4x32xf32>, vector<32x32xf32>, vector<4x32xf32> -> vector<4x32xf32>
    %c0_259 = arith.constant 0 : index
    %c0_260 = arith.constant 0 : index
    %479 = vector.load %arg6[%c0_259, %c0_260] : memref<32x32xf32, #tpu.memory_space<vmem>>, vector<32x32xf32>
    %cst_261 = arith.constant dense<0.000000e+00> : vector<4x32xf32>
    %480 = tpu.matmul %469, %479, %cst_261 {dimension_numbers = #tpu.dot_dimension_numbers<[1], [0], [0], [1], [0, 0, 1, 1], [], []>} : vector<4x32xf32>, vector<32x32xf32>, vector<4x32xf32> -> vector<4x32xf32>
    %c0_262 = arith.constant 0 : index
    %c0_263 = arith.constant 0 : index
    %481 = vector.load %arg7[%c0_262, %c0_263] : memref<1x32xf32, #tpu.memory_space<vmem>>, vector<1x32xf32>
    %482 = vector.broadcast %481 : vector<1x32xf32> to vector<4x32xf32>
    %483 = arith.addf %480, %482 : vector<4x32xf32>
    %484 = arith.index_cast %474 : i32 to index
    %c0_264 = arith.constant 0 : index
    %c0_265 = arith.constant 0 : index
    %485 = vector.load %arg1[%484, %c0_264, %c0_265] : memref<8x4x32xf32, #tpu.memory_space<vmem>>, vector<1x4x32xf32>
    %486 = vector.shape_cast %485 : vector<1x4x32xf32> to vector<4x32xf32>
    %487 = arith.addf %486, %476 : vector<4x32xf32>
    %488 = arith.negf %487 : vector<4x32xf32>
    %489 = math.exp %488 : vector<4x32xf32>
    %cst_266 = arith.constant 1.000000e+00 : f32
    %490 = vector.broadcast %cst_266 : f32 to vector<4x32xf32>
    %491 = arith.addf %490, %489 : vector<4x32xf32>
    %492 = arith.divf %490, %491 : vector<4x32xf32>
    %493 = arith.index_cast %474 : i32 to index
    %c0_267 = arith.constant 0 : index
    %c0_268 = arith.constant 0 : index
    %494 = vector.load %arg2[%493, %c0_267, %c0_268] : memref<8x4x32xf32, #tpu.memory_space<vmem>>, vector<1x4x32xf32>
    %495 = vector.shape_cast %494 : vector<1x4x32xf32> to vector<4x32xf32>
    %496 = arith.addf %495, %478 : vector<4x32xf32>
    %497 = arith.negf %496 : vector<4x32xf32>
    %498 = math.exp %497 : vector<4x32xf32>
    %cst_269 = arith.constant 1.000000e+00 : f32
    %499 = vector.broadcast %cst_269 : f32 to vector<4x32xf32>
    %500 = arith.addf %499, %498 : vector<4x32xf32>
    %501 = arith.divf %499, %500 : vector<4x32xf32>
    %502 = arith.index_cast %474 : i32 to index
    %c0_270 = arith.constant 0 : index
    %c0_271 = arith.constant 0 : index
    %503 = vector.load %arg3[%502, %c0_270, %c0_271] : memref<8x4x32xf32, #tpu.memory_space<vmem>>, vector<1x4x32xf32>
    %504 = vector.shape_cast %503 : vector<1x4x32xf32> to vector<4x32xf32>
    %505 = arith.mulf %492, %483 : vector<4x32xf32>
    %506 = arith.addf %504, %505 : vector<4x32xf32>
    %507 = math.tanh %506 : vector<4x32xf32>
    %cst_272 = arith.constant 1.000000e+00 : f32
    %508 = vector.broadcast %cst_272 : f32 to vector<4x32xf32>
    %509 = arith.subf %508, %501 : vector<4x32xf32>
    %510 = arith.mulf %509, %507 : vector<4x32xf32>
    %511 = arith.mulf %501, %469 : vector<4x32xf32>
    %512 = arith.addf %510, %511 : vector<4x32xf32>
    %513 = arith.index_cast %c11_i32 : i32 to index
    %c0_273 = arith.constant 0 : index
    %c0_274 = arith.constant 0 : index
    %514 = vector.load %arg8[%513, %c0_273, %c0_274] : memref<16x4x32xf32, #tpu.memory_space<vmem>>, vector<1x4x32xf32>
    %515 = vector.shape_cast %514 : vector<1x4x32xf32> to vector<4x32xf32>
    %516 = vector.shape_cast %512 : vector<4x32xf32> to vector<1x4x32xf32>
    tpu.vector_store %arg8[%513, %c0_273, %c0_274], %516 {strides = array<i32>} : memref<16x4x32xf32, #tpu.memory_space<vmem>>, vector<1x4x32xf32>,
    %c12_i32 = arith.constant 12 : i32
    %c8_i32_275 = arith.constant 8 : i32
    %517 = arith.remsi %c12_i32, %c8_i32_275 : i32
    %c0_276 = arith.constant 0 : index
    %c0_277 = arith.constant 0 : index
    %518 = vector.load %arg4[%c0_276, %c0_277] : memref<32x32xf32, #tpu.memory_space<vmem>>, vector<32x32xf32>
    %cst_278 = arith.constant dense<0.000000e+00> : vector<4x32xf32>
    %519 = tpu.matmul %512, %518, %cst_278 {dimension_numbers = #tpu.dot_dimension_numbers<[1], [0], [0], [1], [0, 0, 1, 1], [], []>} : vector<4x32xf32>, vector<32x32xf32>, vector<4x32xf32> -> vector<4x32xf32>
    %c0_279 = arith.constant 0 : index
    %c0_280 = arith.constant 0 : index
    %520 = vector.load %arg5[%c0_279, %c0_280] : memref<32x32xf32, #tpu.memory_space<vmem>>, vector<32x32xf32>
    %cst_281 = arith.constant dense<0.000000e+00> : vector<4x32xf32>
    %521 = tpu.matmul %512, %520, %cst_281 {dimension_numbers = #tpu.dot_dimension_numbers<[1], [0], [0], [1], [0, 0, 1, 1], [], []>} : vector<4x32xf32>, vector<32x32xf32>, vector<4x32xf32> -> vector<4x32xf32>
    %c0_282 = arith.constant 0 : index
    %c0_283 = arith.constant 0 : index
    %522 = vector.load %arg6[%c0_282, %c0_283] : memref<32x32xf32, #tpu.memory_space<vmem>>, vector<32x32xf32>
    %cst_284 = arith.constant dense<0.000000e+00> : vector<4x32xf32>
    %523 = tpu.matmul %512, %522, %cst_284 {dimension_numbers = #tpu.dot_dimension_numbers<[1], [0], [0], [1], [0, 0, 1, 1], [], []>} : vector<4x32xf32>, vector<32x32xf32>, vector<4x32xf32> -> vector<4x32xf32>
    %c0_285 = arith.constant 0 : index
    %c0_286 = arith.constant 0 : index
    %524 = vector.load %arg7[%c0_285, %c0_286] : memref<1x32xf32, #tpu.memory_space<vmem>>, vector<1x32xf32>
    %525 = vector.broadcast %524 : vector<1x32xf32> to vector<4x32xf32>
    %526 = arith.addf %523, %525 : vector<4x32xf32>
    %527 = arith.index_cast %517 : i32 to index
    %c0_287 = arith.constant 0 : index
    %c0_288 = arith.constant 0 : index
    %528 = vector.load %arg1[%527, %c0_287, %c0_288] : memref<8x4x32xf32, #tpu.memory_space<vmem>>, vector<1x4x32xf32>
    %529 = vector.shape_cast %528 : vector<1x4x32xf32> to vector<4x32xf32>
    %530 = arith.addf %529, %519 : vector<4x32xf32>
    %531 = arith.negf %530 : vector<4x32xf32>
    %532 = math.exp %531 : vector<4x32xf32>
    %cst_289 = arith.constant 1.000000e+00 : f32
    %533 = vector.broadcast %cst_289 : f32 to vector<4x32xf32>
    %534 = arith.addf %533, %532 : vector<4x32xf32>
    %535 = arith.divf %533, %534 : vector<4x32xf32>
    %536 = arith.index_cast %517 : i32 to index
    %c0_290 = arith.constant 0 : index
    %c0_291 = arith.constant 0 : index
    %537 = vector.load %arg2[%536, %c0_290, %c0_291] : memref<8x4x32xf32, #tpu.memory_space<vmem>>, vector<1x4x32xf32>
    %538 = vector.shape_cast %537 : vector<1x4x32xf32> to vector<4x32xf32>
    %539 = arith.addf %538, %521 : vector<4x32xf32>
    %540 = arith.negf %539 : vector<4x32xf32>
    %541 = math.exp %540 : vector<4x32xf32>
    %cst_292 = arith.constant 1.000000e+00 : f32
    %542 = vector.broadcast %cst_292 : f32 to vector<4x32xf32>
    %543 = arith.addf %542, %541 : vector<4x32xf32>
    %544 = arith.divf %542, %543 : vector<4x32xf32>
    %545 = arith.index_cast %517 : i32 to index
    %c0_293 = arith.constant 0 : index
    %c0_294 = arith.constant 0 : index
    %546 = vector.load %arg3[%545, %c0_293, %c0_294] : memref<8x4x32xf32, #tpu.memory_space<vmem>>, vector<1x4x32xf32>
    %547 = vector.shape_cast %546 : vector<1x4x32xf32> to vector<4x32xf32>
    %548 = arith.mulf %535, %526 : vector<4x32xf32>
    %549 = arith.addf %547, %548 : vector<4x32xf32>
    %550 = math.tanh %549 : vector<4x32xf32>
    %cst_295 = arith.constant 1.000000e+00 : f32
    %551 = vector.broadcast %cst_295 : f32 to vector<4x32xf32>
    %552 = arith.subf %551, %544 : vector<4x32xf32>
    %553 = arith.mulf %552, %550 : vector<4x32xf32>
    %554 = arith.mulf %544, %512 : vector<4x32xf32>
    %555 = arith.addf %553, %554 : vector<4x32xf32>
    %556 = arith.index_cast %c12_i32 : i32 to index
    %c0_296 = arith.constant 0 : index
    %c0_297 = arith.constant 0 : index
    %557 = vector.load %arg8[%556, %c0_296, %c0_297] : memref<16x4x32xf32, #tpu.memory_space<vmem>>, vector<1x4x32xf32>
    %558 = vector.shape_cast %557 : vector<1x4x32xf32> to vector<4x32xf32>
    %559 = vector.shape_cast %555 : vector<4x32xf32> to vector<1x4x32xf32>
    tpu.vector_store %arg8[%556, %c0_296, %c0_297], %559 {strides = array<i32>} : memref<16x4x32xf32, #tpu.memory_space<vmem>>, vector<1x4x32xf32>,
    %c13_i32 = arith.constant 13 : i32
    %c8_i32_298 = arith.constant 8 : i32
    %560 = arith.remsi %c13_i32, %c8_i32_298 : i32
    %c0_299 = arith.constant 0 : index
    %c0_300 = arith.constant 0 : index
    %561 = vector.load %arg4[%c0_299, %c0_300] : memref<32x32xf32, #tpu.memory_space<vmem>>, vector<32x32xf32>
    %cst_301 = arith.constant dense<0.000000e+00> : vector<4x32xf32>
    %562 = tpu.matmul %555, %561, %cst_301 {dimension_numbers = #tpu.dot_dimension_numbers<[1], [0], [0], [1], [0, 0, 1, 1], [], []>} : vector<4x32xf32>, vector<32x32xf32>, vector<4x32xf32> -> vector<4x32xf32>
    %c0_302 = arith.constant 0 : index
    %c0_303 = arith.constant 0 : index
    %563 = vector.load %arg5[%c0_302, %c0_303] : memref<32x32xf32, #tpu.memory_space<vmem>>, vector<32x32xf32>
    %cst_304 = arith.constant dense<0.000000e+00> : vector<4x32xf32>
    %564 = tpu.matmul %555, %563, %cst_304 {dimension_numbers = #tpu.dot_dimension_numbers<[1], [0], [0], [1], [0, 0, 1, 1], [], []>} : vector<4x32xf32>, vector<32x32xf32>, vector<4x32xf32> -> vector<4x32xf32>
    %c0_305 = arith.constant 0 : index
    %c0_306 = arith.constant 0 : index
    %565 = vector.load %arg6[%c0_305, %c0_306] : memref<32x32xf32, #tpu.memory_space<vmem>>, vector<32x32xf32>
    %cst_307 = arith.constant dense<0.000000e+00> : vector<4x32xf32>
    %566 = tpu.matmul %555, %565, %cst_307 {dimension_numbers = #tpu.dot_dimension_numbers<[1], [0], [0], [1], [0, 0, 1, 1], [], []>} : vector<4x32xf32>, vector<32x32xf32>, vector<4x32xf32> -> vector<4x32xf32>
    %c0_308 = arith.constant 0 : index
    %c0_309 = arith.constant 0 : index
    %567 = vector.load %arg7[%c0_308, %c0_309] : memref<1x32xf32, #tpu.memory_space<vmem>>, vector<1x32xf32>
    %568 = vector.broadcast %567 : vector<1x32xf32> to vector<4x32xf32>
    %569 = arith.addf %566, %568 : vector<4x32xf32>
    %570 = arith.index_cast %560 : i32 to index
    %c0_310 = arith.constant 0 : index
    %c0_311 = arith.constant 0 : index
    %571 = vector.load %arg1[%570, %c0_310, %c0_311] : memref<8x4x32xf32, #tpu.memory_space<vmem>>, vector<1x4x32xf32>
    %572 = vector.shape_cast %571 : vector<1x4x32xf32> to vector<4x32xf32>
    %573 = arith.addf %572, %562 : vector<4x32xf32>
    %574 = arith.negf %573 : vector<4x32xf32>
    %575 = math.exp %574 : vector<4x32xf32>
    %cst_312 = arith.constant 1.000000e+00 : f32
    %576 = vector.broadcast %cst_312 : f32 to vector<4x32xf32>
    %577 = arith.addf %576, %575 : vector<4x32xf32>
    %578 = arith.divf %576, %577 : vector<4x32xf32>
    %579 = arith.index_cast %560 : i32 to index
    %c0_313 = arith.constant 0 : index
    %c0_314 = arith.constant 0 : index
    %580 = vector.load %arg2[%579, %c0_313, %c0_314] : memref<8x4x32xf32, #tpu.memory_space<vmem>>, vector<1x4x32xf32>
    %581 = vector.shape_cast %580 : vector<1x4x32xf32> to vector<4x32xf32>
    %582 = arith.addf %581, %564 : vector<4x32xf32>
    %583 = arith.negf %582 : vector<4x32xf32>
    %584 = math.exp %583 : vector<4x32xf32>
    %cst_315 = arith.constant 1.000000e+00 : f32
    %585 = vector.broadcast %cst_315 : f32 to vector<4x32xf32>
    %586 = arith.addf %585, %584 : vector<4x32xf32>
    %587 = arith.divf %585, %586 : vector<4x32xf32>
    %588 = arith.index_cast %560 : i32 to index
    %c0_316 = arith.constant 0 : index
    %c0_317 = arith.constant 0 : index
    %589 = vector.load %arg3[%588, %c0_316, %c0_317] : memref<8x4x32xf32, #tpu.memory_space<vmem>>, vector<1x4x32xf32>
    %590 = vector.shape_cast %589 : vector<1x4x32xf32> to vector<4x32xf32>
    %591 = arith.mulf %578, %569 : vector<4x32xf32>
    %592 = arith.addf %590, %591 : vector<4x32xf32>
    %593 = math.tanh %592 : vector<4x32xf32>
    %cst_318 = arith.constant 1.000000e+00 : f32
    %594 = vector.broadcast %cst_318 : f32 to vector<4x32xf32>
    %595 = arith.subf %594, %587 : vector<4x32xf32>
    %596 = arith.mulf %595, %593 : vector<4x32xf32>
    %597 = arith.mulf %587, %555 : vector<4x32xf32>
    %598 = arith.addf %596, %597 : vector<4x32xf32>
    %599 = arith.index_cast %c13_i32 : i32 to index
    %c0_319 = arith.constant 0 : index
    %c0_320 = arith.constant 0 : index
    %600 = vector.load %arg8[%599, %c0_319, %c0_320] : memref<16x4x32xf32, #tpu.memory_space<vmem>>, vector<1x4x32xf32>
    %601 = vector.shape_cast %600 : vector<1x4x32xf32> to vector<4x32xf32>
    %602 = vector.shape_cast %598 : vector<4x32xf32> to vector<1x4x32xf32>
    tpu.vector_store %arg8[%599, %c0_319, %c0_320], %602 {strides = array<i32>} : memref<16x4x32xf32, #tpu.memory_space<vmem>>, vector<1x4x32xf32>,
    %c14_i32 = arith.constant 14 : i32
    %c8_i32_321 = arith.constant 8 : i32
    %603 = arith.remsi %c14_i32, %c8_i32_321 : i32
    %c0_322 = arith.constant 0 : index
    %c0_323 = arith.constant 0 : index
    %604 = vector.load %arg4[%c0_322, %c0_323] : memref<32x32xf32, #tpu.memory_space<vmem>>, vector<32x32xf32>
    %cst_324 = arith.constant dense<0.000000e+00> : vector<4x32xf32>
    %605 = tpu.matmul %598, %604, %cst_324 {dimension_numbers = #tpu.dot_dimension_numbers<[1], [0], [0], [1], [0, 0, 1, 1], [], []>} : vector<4x32xf32>, vector<32x32xf32>, vector<4x32xf32> -> vector<4x32xf32>
    %c0_325 = arith.constant 0 : index
    %c0_326 = arith.constant 0 : index
    %606 = vector.load %arg5[%c0_325, %c0_326] : memref<32x32xf32, #tpu.memory_space<vmem>>, vector<32x32xf32>
    %cst_327 = arith.constant dense<0.000000e+00> : vector<4x32xf32>
    %607 = tpu.matmul %598, %606, %cst_327 {dimension_numbers = #tpu.dot_dimension_numbers<[1], [0], [0], [1], [0, 0, 1, 1], [], []>} : vector<4x32xf32>, vector<32x32xf32>, vector<4x32xf32> -> vector<4x32xf32>
    %c0_328 = arith.constant 0 : index
    %c0_329 = arith.constant 0 : index
    %608 = vector.load %arg6[%c0_328, %c0_329] : memref<32x32xf32, #tpu.memory_space<vmem>>, vector<32x32xf32>
    %cst_330 = arith.constant dense<0.000000e+00> : vector<4x32xf32>
    %609 = tpu.matmul %598, %608, %cst_330 {dimension_numbers = #tpu.dot_dimension_numbers<[1], [0], [0], [1], [0, 0, 1, 1], [], []>} : vector<4x32xf32>, vector<32x32xf32>, vector<4x32xf32> -> vector<4x32xf32>
    %c0_331 = arith.constant 0 : index
    %c0_332 = arith.constant 0 : index
    %610 = vector.load %arg7[%c0_331, %c0_332] : memref<1x32xf32, #tpu.memory_space<vmem>>, vector<1x32xf32>
    %611 = vector.broadcast %610 : vector<1x32xf32> to vector<4x32xf32>
    %612 = arith.addf %609, %611 : vector<4x32xf32>
    %613 = arith.index_cast %603 : i32 to index
    %c0_333 = arith.constant 0 : index
    %c0_334 = arith.constant 0 : index
    %614 = vector.load %arg1[%613, %c0_333, %c0_334] : memref<8x4x32xf32, #tpu.memory_space<vmem>>, vector<1x4x32xf32>
    %615 = vector.shape_cast %614 : vector<1x4x32xf32> to vector<4x32xf32>
    %616 = arith.addf %615, %605 : vector<4x32xf32>
    %617 = arith.negf %616 : vector<4x32xf32>
    %618 = math.exp %617 : vector<4x32xf32>
    %cst_335 = arith.constant 1.000000e+00 : f32
    %619 = vector.broadcast %cst_335 : f32 to vector<4x32xf32>
    %620 = arith.addf %619, %618 : vector<4x32xf32>
    %621 = arith.divf %619, %620 : vector<4x32xf32>
    %622 = arith.index_cast %603 : i32 to index
    %c0_336 = arith.constant 0 : index
    %c0_337 = arith.constant 0 : index
    %623 = vector.load %arg2[%622, %c0_336, %c0_337] : memref<8x4x32xf32, #tpu.memory_space<vmem>>, vector<1x4x32xf32>
    %624 = vector.shape_cast %623 : vector<1x4x32xf32> to vector<4x32xf32>
    %625 = arith.addf %624, %607 : vector<4x32xf32>
    %626 = arith.negf %625 : vector<4x32xf32>
    %627 = math.exp %626 : vector<4x32xf32>
    %cst_338 = arith.constant 1.000000e+00 : f32
    %628 = vector.broadcast %cst_338 : f32 to vector<4x32xf32>
    %629 = arith.addf %628, %627 : vector<4x32xf32>
    %630 = arith.divf %628, %629 : vector<4x32xf32>
    %631 = arith.index_cast %603 : i32 to index
    %c0_339 = arith.constant 0 : index
    %c0_340 = arith.constant 0 : index
    %632 = vector.load %arg3[%631, %c0_339, %c0_340] : memref<8x4x32xf32, #tpu.memory_space<vmem>>, vector<1x4x32xf32>
    %633 = vector.shape_cast %632 : vector<1x4x32xf32> to vector<4x32xf32>
    %634 = arith.mulf %621, %612 : vector<4x32xf32>
    %635 = arith.addf %633, %634 : vector<4x32xf32>
    %636 = math.tanh %635 : vector<4x32xf32>
    %cst_341 = arith.constant 1.000000e+00 : f32
    %637 = vector.broadcast %cst_341 : f32 to vector<4x32xf32>
    %638 = arith.subf %637, %630 : vector<4x32xf32>
    %639 = arith.mulf %638, %636 : vector<4x32xf32>
    %640 = arith.mulf %630, %598 : vector<4x32xf32>
    %641 = arith.addf %639, %640 : vector<4x32xf32>
    %642 = arith.index_cast %c14_i32 : i32 to index
    %c0_342 = arith.constant 0 : index
    %c0_343 = arith.constant 0 : index
    %643 = vector.load %arg8[%642, %c0_342, %c0_343] : memref<16x4x32xf32, #tpu.memory_space<vmem>>, vector<1x4x32xf32>
    %644 = vector.shape_cast %643 : vector<1x4x32xf32> to vector<4x32xf32>
    %645 = vector.shape_cast %641 : vector<4x32xf32> to vector<1x4x32xf32>
    tpu.vector_store %arg8[%642, %c0_342, %c0_343], %645 {strides = array<i32>} : memref<16x4x32xf32, #tpu.memory_space<vmem>>, vector<1x4x32xf32>,
    %c15_i32 = arith.constant 15 : i32
    %c8_i32_344 = arith.constant 8 : i32
    %646 = arith.remsi %c15_i32, %c8_i32_344 : i32
    %c0_345 = arith.constant 0 : index
    %c0_346 = arith.constant 0 : index
    %647 = vector.load %arg4[%c0_345, %c0_346] : memref<32x32xf32, #tpu.memory_space<vmem>>, vector<32x32xf32>
    %cst_347 = arith.constant dense<0.000000e+00> : vector<4x32xf32>
    %648 = tpu.matmul %641, %647, %cst_347 {dimension_numbers = #tpu.dot_dimension_numbers<[1], [0], [0], [1], [0, 0, 1, 1], [], []>} : vector<4x32xf32>, vector<32x32xf32>, vector<4x32xf32> -> vector<4x32xf32>
    %c0_348 = arith.constant 0 : index
    %c0_349 = arith.constant 0 : index
    %649 = vector.load %arg5[%c0_348, %c0_349] : memref<32x32xf32, #tpu.memory_space<vmem>>, vector<32x32xf32>
    %cst_350 = arith.constant dense<0.000000e+00> : vector<4x32xf32>
    %650 = tpu.matmul %641, %649, %cst_350 {dimension_numbers = #tpu.dot_dimension_numbers<[1], [0], [0], [1], [0, 0, 1, 1], [], []>} : vector<4x32xf32>, vector<32x32xf32>, vector<4x32xf32> -> vector<4x32xf32>
    %c0_351 = arith.constant 0 : index
    %c0_352 = arith.constant 0 : index
    %651 = vector.load %arg6[%c0_351, %c0_352] : memref<32x32xf32, #tpu.memory_space<vmem>>, vector<32x32xf32>
    %cst_353 = arith.constant dense<0.000000e+00> : vector<4x32xf32>
    %652 = tpu.matmul %641, %651, %cst_353 {dimension_numbers = #tpu.dot_dimension_numbers<[1], [0], [0], [1], [0, 0, 1, 1], [], []>} : vector<4x32xf32>, vector<32x32xf32>, vector<4x32xf32> -> vector<4x32xf32>
    %c0_354 = arith.constant 0 : index
    %c0_355 = arith.constant 0 : index
    %653 = vector.load %arg7[%c0_354, %c0_355] : memref<1x32xf32, #tpu.memory_space<vmem>>, vector<1x32xf32>
    %654 = vector.broadcast %653 : vector<1x32xf32> to vector<4x32xf32>
    %655 = arith.addf %652, %654 : vector<4x32xf32>
    %656 = arith.index_cast %646 : i32 to index
    %c0_356 = arith.constant 0 : index
    %c0_357 = arith.constant 0 : index
    %657 = vector.load %arg1[%656, %c0_356, %c0_357] : memref<8x4x32xf32, #tpu.memory_space<vmem>>, vector<1x4x32xf32>
    %658 = vector.shape_cast %657 : vector<1x4x32xf32> to vector<4x32xf32>
    %659 = arith.addf %658, %648 : vector<4x32xf32>
    %660 = arith.negf %659 : vector<4x32xf32>
    %661 = math.exp %660 : vector<4x32xf32>
    %cst_358 = arith.constant 1.000000e+00 : f32
    %662 = vector.broadcast %cst_358 : f32 to vector<4x32xf32>
    %663 = arith.addf %662, %661 : vector<4x32xf32>
    %664 = arith.divf %662, %663 : vector<4x32xf32>
    %665 = arith.index_cast %646 : i32 to index
    %c0_359 = arith.constant 0 : index
    %c0_360 = arith.constant 0 : index
    %666 = vector.load %arg2[%665, %c0_359, %c0_360] : memref<8x4x32xf32, #tpu.memory_space<vmem>>, vector<1x4x32xf32>
    %667 = vector.shape_cast %666 : vector<1x4x32xf32> to vector<4x32xf32>
    %668 = arith.addf %667, %650 : vector<4x32xf32>
    %669 = arith.negf %668 : vector<4x32xf32>
    %670 = math.exp %669 : vector<4x32xf32>
    %cst_361 = arith.constant 1.000000e+00 : f32
    %671 = vector.broadcast %cst_361 : f32 to vector<4x32xf32>
    %672 = arith.addf %671, %670 : vector<4x32xf32>
    %673 = arith.divf %671, %672 : vector<4x32xf32>
    %674 = arith.index_cast %646 : i32 to index
    %c0_362 = arith.constant 0 : index
    %c0_363 = arith.constant 0 : index
    %675 = vector.load %arg3[%674, %c0_362, %c0_363] : memref<8x4x32xf32, #tpu.memory_space<vmem>>, vector<1x4x32xf32>
    %676 = vector.shape_cast %675 : vector<1x4x32xf32> to vector<4x32xf32>
    %677 = arith.mulf %664, %655 : vector<4x32xf32>
    %678 = arith.addf %676, %677 : vector<4x32xf32>
    %679 = math.tanh %678 : vector<4x32xf32>
    %cst_364 = arith.constant 1.000000e+00 : f32
    %680 = vector.broadcast %cst_364 : f32 to vector<4x32xf32>
    %681 = arith.subf %680, %673 : vector<4x32xf32>
    %682 = arith.mulf %681, %679 : vector<4x32xf32>
    %683 = arith.mulf %673, %641 : vector<4x32xf32>
    %684 = arith.addf %682, %683 : vector<4x32xf32>
    %685 = arith.index_cast %c15_i32 : i32 to index
    %c0_365 = arith.constant 0 : index
    %c0_366 = arith.constant 0 : index
    %686 = vector.load %arg8[%685, %c0_365, %c0_366] : memref<16x4x32xf32, #tpu.memory_space<vmem>>, vector<1x4x32xf32>
    %687 = vector.shape_cast %686 : vector<1x4x32xf32> to vector<4x32xf32>
    %688 = vector.shape_cast %684 : vector<4x32xf32> to vector<1x4x32xf32>
    tpu.vector_store %arg8[%685, %c0_365, %c0_366], %688 {strides = array<i32>} : memref<16x4x32xf32, #tpu.memory_space<vmem>>, vector<1x4x32xf32>,
    %c16_i32 = arith.constant 16 : i32
    return
  }
  func.func @transform_0(%arg0: i32) -> (i32, i32, i32) {
    %c0_i32 = arith.constant 0 : i32
    %c0_i32_0 = arith.constant 0 : i32
    %c0_i32_1 = arith.constant 0 : i32
    %c0_i32_2 = arith.constant 0 : i32
    return %c0_i32, %c0_i32_0, %c0_i32_1 : i32, i32, i32
  }
  func.func @transform_1(%arg0: i32) -> (i32, i32, i32) {
    %c0_i32 = arith.constant 0 : i32
    %c0_i32_0 = arith.constant 0 : i32
    %c0_i32_1 = arith.constant 0 : i32
    %c0_i32_2 = arith.constant 0 : i32
    return %c0_i32, %c0_i32_0, %c0_i32_1 : i32, i32, i32
  }
  func.func @transform_2(%arg0: i32) -> (i32, i32, i32) {
    %c0_i32 = arith.constant 0 : i32
    %c0_i32_0 = arith.constant 0 : i32
    %c0_i32_1 = arith.constant 0 : i32
    %c0_i32_2 = arith.constant 0 : i32
    return %c0_i32, %c0_i32_0, %c0_i32_1 : i32, i32, i32
  }
  func.func @transform_3(%arg0: i32) -> (i32, i32) {
    %c0_i32 = arith.constant 0 : i32
    %c0_i32_0 = arith.constant 0 : i32
    %c0_i32_1 = arith.constant 0 : i32
    return %c0_i32, %c0_i32_0 : i32, i32
  }
  func.func @transform_4(%arg0: i32) -> (i32, i32) {
    %c0_i32 = arith.constant 0 : i32
    %c0_i32_0 = arith.constant 0 : i32
    %c0_i32_1 = arith.constant 0 : i32
    return %c0_i32, %c0_i32_0 : i32, i32
  }
  func.func @transform_5(%arg0: i32) -> (i32, i32) {
    %c0_i32 = arith.constant 0 : i32
    %c0_i32_0 = arith.constant 0 : i32
    %c0_i32_1 = arith.constant 0 : i32
    return %c0_i32, %c0_i32_0 : i32, i32
  }
  func.func @transform_6(%arg0: i32) -> (i32, i32) {
    %c0_i32 = arith.constant 0 : i32
    %c0_i32_0 = arith.constant 0 : i32
    %c0_i32_1 = arith.constant 0 : i32
    return %c0_i32, %c0_i32_0 : i32, i32
  }
  func.func @transform_7(%arg0: i32) -> (i32, i32, i32) {
    %c0_i32 = arith.constant 0 : i32
    %c0_i32_0 = arith.constant 0 : i32
    %c0_i32_1 = arith.constant 0 : i32
    %c0_i32_2 = arith.constant 0 : i32
    return %c0_i32, %c0_i32_0, %c0_i32_1 : i32, i32, i32
  }
}

</mosaic_0001>

<llo_original>
// kernel: gru_head_v2_forward.1
$region0: #{gru_head_v2_forward.1}
  #allocation0 [shape = 'u32[]', space=smem, size = 0x4, offset = 0x4, fixed_abs, tag = 'smem constant byte address 0x4 - core index']
  #allocation1 [shape = 'u32[72,128]{1,0:T(1,128)}', space=vmem, size = 0x9000, scoped, tag = 'internal scratch']
  %s0 = inlined_call_operand.vmem [shape: f32[8,4,32], index: 0, kind: input, shape index: {}]
  %s1 = inlined_call_operand.vmem [shape: f32[8,4,32], index: 1, kind: input, shape index: {}]
  %s2 = inlined_call_operand.vmem [shape: f32[8,4,32], index: 2, kind: input, shape index: {}]
  %s3 = inlined_call_operand.vmem [shape: f32[32,32], index: 3, kind: input, shape index: {}]
  %s4 = inlined_call_operand.vmem [shape: f32[32,32], index: 4, kind: input, shape index: {}]
  %s5 = inlined_call_operand.vmem [shape: f32[32,32], index: 5, kind: input, shape index: {}]
  %s6 = inlined_call_operand.vmem [shape: f32[1,32], index: 6, kind: input, shape index: {}]
  %s7 = inlined_call_operand.vmem [shape: f32[16,4,32], index: 7, kind: output, shape index: {}]
  %s8 = sld [smem:[#allocation0]]
  $region38: #{gru_head_v2_forward.1} parent=0
    _
  %s10 = ssub.s32 1, %s8
  %s11 = scalar_select 0, %s10, %s8
  // Predicated region
  $region2: #{gru_head_v2_forward.1} parent=0 // pred_check
    _
  $region3: #{gru_head_v2_forward.1} parent=0 // pred_check_branch
    %13 = sbr.rel (0) target = $region5
  $region4: #{gru_head_v2_forward.1} parent=0 // pred_region
    _
  $region5: #{gru_head_v2_forward.1} parent=0 // pred_fallthru
    _
  // Predicated region
  $region6: #{gru_head_v2_forward.1} parent=0 // pred_check
    _
  $region7: #{gru_head_v2_forward.1} parent=0 // pred_check_branch
    %15 = sbr.rel (0) target = $region9
  $region8: #{gru_head_v2_forward.1} parent=0 // pred_region
    _
  $region9: #{gru_head_v2_forward.1} parent=0 // pred_fallthru
    _
  // Predicated region
  $region10: #{gru_head_v2_forward.1} parent=0 // pred_check
    _
  $region11: #{gru_head_v2_forward.1} parent=0 // pred_check_branch
    %17 = sbr.rel (0) target = $region13
  $region12: #{gru_head_v2_forward.1} parent=0 // pred_region
    _
  $region13: #{gru_head_v2_forward.1} parent=0 // pred_fallthru
    _
  // Predicated region
  $region14: #{gru_head_v2_forward.1} parent=0 // pred_check
    _
  $region15: #{gru_head_v2_forward.1} parent=0 // pred_check_branch
    %19 = sbr.rel (0) target = $region17
  $region16: #{gru_head_v2_forward.1} parent=0 // pred_region
    _
  $region17: #{gru_head_v2_forward.1} parent=0 // pred_fallthru
    _
  // Predicated region
  $region18: #{gru_head_v2_forward.1} parent=0 // pred_check
    _
  $region19: #{gru_head_v2_forward.1} parent=0 // pred_check_branch
    %21 = sbr.rel (0) target = $region21
  $region20: #{gru_head_v2_forward.1} parent=0 // pred_region
    _
  $region21: #{gru_head_v2_forward.1} parent=0 // pred_fallthru
    _
  // Predicated region
  $region22: #{gru_head_v2_forward.1} parent=0 // pred_check
    _
  $region23: #{gru_head_v2_forward.1} parent=0 // pred_check_branch
    %23 = sbr.rel (0) target = $region25
  $region24: #{gru_head_v2_forward.1} parent=0 // pred_region
    _
  $region25: #{gru_head_v2_forward.1} parent=0 // pred_fallthru
    _
  // Predicated region
  $region26: #{gru_head_v2_forward.1} parent=0 // pred_check
    _
  $region27: #{gru_head_v2_forward.1} parent=0 // pred_check_branch
    %25 = sbr.rel (0) target = $region29
  $region28: #{gru_head_v2_forward.1} parent=0 // pred_region
    _
  $region29: #{gru_head_v2_forward.1} parent=0 // pred_fallthru
    _
  %v26 = vld [vmem:[%s3] sm:$0xff]
  %v27 = vld [vmem:[%s3 + $0x8] sm:$0xff]
  %v28 = vld [vmem:[%s3 + $0x10] sm:$0xff]
  %v29 = vld [vmem:[%s3 + $0x18] sm:$0xff]
  %vm30 = vcmask 261120
  %v32 = vsel %vm30, 0.0, 0
  %34 = vmatpush.msra.mxu0 0.0
  %35 = vmatpush.msra.mxu0 0.0
  %36 = vmatpush.msra.mxu0 0.0
  %37 = vmatpush.msra.mxu0 0.0
  %38 = vmatpush.msra.mxu0 0.0
  %39 = vmatpush.msra.mxu0 0.0
  %40 = vmatpush.msra.mxu0 0.0
  %41 = vmatpush.msra.mxu0 0.0
  %42 = vmatpush.msra.mxu0 0.0
  %43 = vmatpush.msra.mxu0 0.0
  %44 = vmatpush.msra.mxu0 0.0
  %45 = vmatpush.msra.mxu0 0.0
  %46 = vmatpush.msra.mxu0 %v29
  %47 = vmatpush.msra.mxu0 %v28
  %48 = vmatpush.msra.mxu0 %v27
  %49 = vmatpush.msra.mxu0 %v26
  %50 = vmatmul.f32.gmra.mxu0 %v32
  %v51 = vpop.f32.mrf.mxu0
  %v52 = vadd.f32 0.0, %v51
  %53 = vdwg.mxu0
  %v54 = vld [vmem:[%s4] sm:$0xff]
  %v55 = vld [vmem:[%s4 + $0x8] sm:$0xff]
  %v56 = vld [vmem:[%s4 + $0x10] sm:$0xff]
  %v57 = vld [vmem:[%s4 + $0x18] sm:$0xff]
  %58 = vmatpush.msra.mxu0 0.0
  %59 = vmatpush.msra.mxu0 0.0
  %60 = vmatpush.msra.mxu0 0.0
  %61 = vmatpush.msra.mxu0 0.0
  %62 = vmatpush.msra.mxu0 0.0
  %63 = vmatpush.msra.mxu0 0.0
  %64 = vmatpush.msra.mxu0 0.0
  %65 = vmatpush.msra.mxu0 0.0
  %66 = vmatpush.msra.mxu0 0.0
  %67 = vmatpush.msra.mxu0 0.0
  %68 = vmatpush.msra.mxu0 0.0
  %69 = vmatpush.msra.mxu0 0.0
  %70 = vmatpush.msra.mxu0 %v57
  %71 = vmatpush.msra.mxu0 %v56
  %72 = vmatpush.msra.mxu0 %v55
  %73 = vmatpush.msra.mxu0 %v54
  %74 = vmatmul.f32.gmra.mxu0 %v32
  %v75 = vpop.f32.mrf.mxu0
  %v76 = vadd.f32 0.0, %v75
  %77 = vdwg.mxu0
  %v78 = vld [vmem:[%s5] sm:$0xff]
  %v79 = vld [vmem:[%s5 + $0x8] sm:$0xff]
  %v80 = vld [vmem:[%s5 + $0x10] sm:$0xff]
  %v81 = vld [vmem:[%s5 + $0x18] sm:$0xff]
  %v82 = vld [vmem:[%s6] sm:$0x1]
  %v84 = vperm.slane %v82, 0
  %86 = vmatpush.msra.mxu0 0.0
  %87 = vmatpush.msra.mxu0 0.0
  %88 = vmatpush.msra.mxu0 0.0
  %89 = vmatpush.msra.mxu0 0.0
  %90 = vmatpush.msra.mxu0 0.0
  %91 = vmatpush.msra.mxu0 0.0
  %92 = vmatpush.msra.mxu0 0.0
  %93 = vmatpush.msra.mxu0 0.0
  %94 = vmatpush.msra.mxu0 0.0
  %95 = vmatpush.msra.mxu0 0.0
  %96 = vmatpush.msra.mxu0 0.0
  %97 = vmatpush.msra.mxu0 0.0
  %98 = vmatpush.msra.mxu0 %v81
  %99 = vmatpush.msra.mxu0 %v80
  %100 = vmatpush.msra.mxu0 %v79
  %101 = vmatpush.msra.mxu0 %v78
  %102 = vmatmul.f32.gmra.mxu0 %v32
  %v103 = vpop.f32.mrf.mxu0
  %v104 = vadd.f32 %v84, %v103
  %105 = vdwg.mxu0
  %v106 = vld [vmem:[%s0] sm:$0xf]
  %v107 = vadd.f32 %v106, %v52
  %v108 = vxor.u32 %v107, 2147483648
  %v109 = vmul.f32 %v108, 1.442695
  %v110 = vpow.pop %v109
  %v111 = vadd.f32 %v110, 1.0
  %v112 = vrcp.pop %v111
  %v113 = vmul.f32 %v111, %v112
  %v114 = vsub.f32 1.0, %v113
  %v115 = vmul.f32 %v112, %v114
  %v116 = vadd.f32 %v112, %v115
  %vm117 = vweird.f32 %v111
  %vm118 = vweird.f32 %v112
  %vm119 = vmor %vm117, %vm118
  %v120 = vsel %vm119, %v112, %v116
  %v121 = vand.u32 2147483647, %v111
  %vm122 = vcmp.eq.f32.partialorder %v121, 8.507059e+37
  %v123 = vand.u32 %v111, 2147483648
  %v124 = vor.u32 1.1754944e-38, %v123
  %v125 = vsel %vm122, %v124, %v120
  %v126 = vmul.f32 1.0, %v125
  %v127 = vld [vmem:[%s1] sm:$0xf]
  %v128 = vadd.f32 %v127, %v76
  %v129 = vxor.u32 %v128, 2147483648
  %v130 = vmul.f32 %v129, 1.442695
  %v131 = vpow.pop %v130
  %v132 = vadd.f32 %v131, 1.0
  %v133 = vrcp.pop %v132
  %v134 = vmul.f32 %v132, %v133
  %v135 = vsub.f32 1.0, %v134
  %v136 = vmul.f32 %v133, %v135
  %v137 = vadd.f32 %v133, %v136
  %vm138 = vweird.f32 %v132
  %vm139 = vweird.f32 %v133
  %vm140 = vmor %vm138, %vm139
  %v141 = vsel %vm140, %v133, %v137
  %v142 = vand.u32 2147483647, %v132
  %vm143 = vcmp.eq.f32.partialorder %v142, 8.507059e+37
  %v144 = vand.u32 %v132, 2147483648
  %v145 = vor.u32 1.1754944e-38, %v144
  %v146 = vsel %vm143, %v145, %v141
  %v147 = vmul.f32 1.0, %v146
  %v148 = vld [vmem:[%s2] sm:$0xf]
  %v149 = vmul.f32 %v126, %v104
  %v150 = vadd.f32 %v148, %v149
  %v151 = vtanh.pop %v150
  %v152 = vsub.f32 1.0, %v147
  %v153 = vmul.f32 %v152, %v151
  %v154 = vmul.f32 %v147, 0.0
  %v155 = vadd.f32 %v153, %v154
  %vm156 = vcmask 257024
  %157 = vst.msk [vmem:[%s7] sm:$0xf] %vm156, %v155
  %v158 = vld [vmem:[%s3] sm:$0xff]
  %v159 = vld [vmem:[%s3 + $0x8] sm:$0xff]
  %v160 = vld [vmem:[%s3 + $0x10] sm:$0xff]
  %v161 = vld [vmem:[%s3 + $0x18] sm:$0xff]
  %v163 = vsel %vm30, %v155, 0
  %165 = vmatpush.msra.mxu0 0.0
  %166 = vmatpush.msra.mxu0 0.0
  %167 = vmatpush.msra.mxu0 0.0
  %168 = vmatpush.msra.mxu0 0.0
  %169 = vmatpush.msra.mxu0 0.0
  %170 = vmatpush.msra.mxu0 0.0
  %171 = vmatpush.msra.mxu0 0.0
  %172 = vmatpush.msra.mxu0 0.0
  %173 = vmatpush.msra.mxu0 0.0
  %174 = vmatpush.msra.mxu0 0.0
  %175 = vmatpush.msra.mxu0 0.0
  %176 = vmatpush.msra.mxu0 0.0
  %177 = vmatpush.msra.mxu0 %v161
  %178 = vmatpush.msra.mxu0 %v160
  %179 = vmatpush.msra.mxu0 %v159
  %180 = vmatpush.msra.mxu0 %v158
  %181 = vmatmul.f32.gmra.mxu0 %v163
  %v182 = vpop.f32.mrf.mxu0
  %v183 = vadd.f32 0.0, %v182
  %184 = vdwg.mxu0
  %v185 = vld [vmem:[%s4] sm:$0xff]
  %v186 = vld [vmem:[%s4 + $0x8] sm:$0xff]
  %v187 = vld [vmem:[%s4 + $0x10] sm:$0xff]
  %v188 = vld [vmem:[%s4 + $0x18] sm:$0xff]
  %189 = vmatpush.msra.mxu0 0.0
  %190 = vmatpush.msra.mxu0 0.0
  %191 = vmatpush.msra.mxu0 0.0
  %192 = vmatpush.msra.mxu0 0.0
  %193 = vmatpush.msra.mxu0 0.0
  %194 = vmatpush.msra.mxu0 0.0
  %195 = vmatpush.msra.mxu0 0.0
  %196 = vmatpush.msra.mxu0 0.0
  %197 = vmatpush.msra.mxu0 0.0
  %198 = vmatpush.msra.mxu0 0.0
  %199 = vmatpush.msra.mxu0 0.0
  %200 = vmatpush.msra.mxu0 0.0
  %201 = vmatpush.msra.mxu0 %v188
  %202 = vmatpush.msra.mxu0 %v187
  %203 = vmatpush.msra.mxu0 %v186
  %204 = vmatpush.msra.mxu0 %v185
  %205 = vmatmul.f32.gmra.mxu0 %v163
  %v206 = vpop.f32.mrf.mxu0
  %v207 = vadd.f32 0.0, %v206
  %208 = vdwg.mxu0
  %v209 = vld [vmem:[%s5] sm:$0xff]
  %v210 = vld [vmem:[%s5 + $0x8] sm:$0xff]
  %v211 = vld [vmem:[%s5 + $0x10] sm:$0xff]
  %v212 = vld [vmem:[%s5 + $0x18] sm:$0xff]
  %v213 = vld [vmem:[%s6] sm:$0x1]
  %v215 = vperm.slane %v213, 0
  %217 = vmatpush.msra.mxu0 0.0
  %218 = vmatpush.msra.mxu0 0.0
  %219 = vmatpush.msra.mxu0 0.0
  %220 = vmatpush.msra.mxu0 0.0
  %221 = vmatpush.msra.mxu0 0.0
  %222 = vmatpush.msra.mxu0 0.0
  %223 = vmatpush.msra.mxu0 0.0
  %224 = vmatpush.msra.mxu0 0.0
  %225 = vmatpush.msra.mxu0 0.0
  %226 = vmatpush.msra.mxu0 0.0
  %227 = vmatpush.msra.mxu0 0.0
  %228 = vmatpush.msra.mxu0 0.0
  %229 = vmatpush.msra.mxu0 %v212
  %230 = vmatpush.msra.mxu0 %v211
  %231 = vmatpush.msra.mxu0 %v210
  %232 = vmatpush.msra.mxu0 %v209
  %233 = vmatmul.f32.gmra.mxu0 %v163
  %v234 = vpop.f32.mrf.mxu0
  %v235 = vadd.f32 %v215, %v234
  %236 = vdwg.mxu0
  %s237 = scalar_lea.vmem %s0, 4
  %v238 = vld [vmem:[%s237] sm:$0xf]
  %v239 = vadd.f32 %v238, %v183
  %v240 = vxor.u32 %v239, 2147483648
  %v241 = vmul.f32 %v240, 1.442695
  %v242 = vpow.pop %v241
  %v243 = vadd.f32 %v242, 1.0
  %v244 = vrcp.pop %v243
  %v245 = vmul.f32 %v243, %v244
  %v246 = vsub.f32 1.0, %v245
  %v247 = vmul.f32 %v244, %v246
  %v248 = vadd.f32 %v244, %v247
  %vm249 = vweird.f32 %v243
  %vm250 = vweird.f32 %v244
  %vm251 = vmor %vm249, %vm250
  %v252 = vsel %vm251, %v244, %v248
  %v253 = vand.u32 2147483647, %v243
  %vm254 = vcmp.eq.f32.partialorder %v253, 8.507059e+37
  %v255 = vand.u32 %v243, 2147483648
  %v256 = vor.u32 1.1754944e-38, %v255
  %v257 = vsel %vm254, %v256, %v252
  %v258 = vmul.f32 1.0, %v257
  %s259 = scalar_lea.vmem %s1, 4
  %v260 = vld [vmem:[%s259] sm:$0xf]
  %v261 = vadd.f32 %v260, %v207
  %v262 = vxor.u32 %v261, 2147483648
  %v263 = vmul.f32 %v262, 1.442695
  %v264 = vpow.pop %v263
  %v265 = vadd.f32 %v264, 1.0
  %v266 = vrcp.pop %v265
  %v267 = vmul.f32 %v265, %v266
  %v268 = vsub.f32 1.0, %v267
  %v269 = vmul.f32 %v266, %v268
  %v270 = vadd.f32 %v266, %v269
  %vm271 = vweird.f32 %v265
  %vm272 = vweird.f32 %v266
  %vm273 = vmor %vm271, %vm272
  %v274 = vsel %vm273, %v266, %v270
  %v275 = vand.u32 2147483647, %v265
  %vm276 = vcmp.eq.f32.partialorder %v275, 8.507059e+37
  %v277 = vand.u32 %v265, 2147483648
  %v278 = vor.u32 1.1754944e-38, %v277
  %v279 = vsel %vm276, %v278, %v274
  %v280 = vmul.f32 1.0, %v279
  %s281 = scalar_lea.vmem %s2, 4
  %v282 = vld [vmem:[%s281] sm:$0xf]
  %v283 = vmul.f32 %v258, %v235
  %v284 = vadd.f32 %v282, %v283
  %v285 = vtanh.pop %v284
  %v286 = vsub.f32 1.0, %v280
  %v287 = vmul.f32 %v286, %v285
  %v288 = vmul.f32 %v280, %v155
  %v289 = vadd.f32 %v287, %v288
  %s290 = scalar_lea.vmem %s7, 4
  %291 = vst.msk [vmem:[%s290] sm:$0xf] %vm156, %v289
  %v292 = vld [vmem:[%s3] sm:$0xff]
  %v293 = vld [vmem:[%s3 + $0x8] sm:$0xff]
  %v294 = vld [vmem:[%s3 + $0x10] sm:$0xff]
  %v295 = vld [vmem:[%s3 + $0x18] sm:$0xff]
  %v297 = vsel %vm30, %v289, 0
  %299 = vmatpush.msra.mxu0 0.0
  %300 = vmatpush.msra.mxu0 0.0
  %301 = vmatpush.msra.mxu0 0.0
  %302 = vmatpush.msra.mxu0 0.0
  %303 = vmatpush.msra.mxu0 0.0
  %304 = vmatpush.msra.mxu0 0.0
  %305 = vmatpush.msra.mxu0 0.0
  %306 = vmatpush.msra.mxu0 0.0
  %307 = vmatpush.msra.mxu0 0.0
  %308 = vmatpush.msra.mxu0 0.0
  %309 = vmatpush.msra.mxu0 0.0
  %310 = vmatpush.msra.mxu0 0.0
  %311 = vmatpush.msra.mxu0 %v295
  %312 = vmatpush.msra.mxu0 %v294
  %313 = vmatpush.msra.mxu0 %v293
  %314 = vmatpush.msra.mxu0 %v292
  %315 = vmatmul.f32.gmra.mxu0 %v297
  %v316 = vpop.f32.mrf.mxu0
  %v317 = vadd.f32 0.0, %v316
  %318 = vdwg.mxu0
  %v319 = vld [vmem:[%s4] sm:$0xff]
  %v320 = vld [vmem:[%s4 + $0x8] sm:$0xff]
  %v321 = vld [vmem:[%s4 + $0x10] sm:$0xff]
  %v322 = vld [vmem:[%s4 + $0x18] sm:$0xff]
  %323 = vmatpush.msra.mxu0 0.0
  %324 = vmatpush.msra.mxu0 0.0
  %325 = vmatpush.msra.mxu0 0.0
  %326 = vmatpush.msra.mxu0 0.0
  %327 = vmatpush.msra.mxu0 0.0
  %328 = vmatpush.msra.mxu0 0.0
  %329 = vmatpush.msra.mxu0 0.0
  %330 = vmatpush.msra.mxu0 0.0
  %331 = vmatpush.msra.mxu0 0.0
  %332 = vmatpush.msra.mxu0 0.0
  %333 = vmatpush.msra.mxu0 0.0
  %334 = vmatpush.msra.mxu0 0.0
  %335 = vmatpush.msra.mxu0 %v322
  %336 = vmatpush.msra.mxu0 %v321
  %337 = vmatpush.msra.mxu0 %v320
  %338 = vmatpush.msra.mxu0 %v319
  %339 = vmatmul.f32.gmra.mxu0 %v297
  %v340 = vpop.f32.mrf.mxu0
  %v341 = vadd.f32 0.0, %v340
  %342 = vdwg.mxu0
  %v343 = vld [vmem:[%s5] sm:$0xff]
  %v344 = vld [vmem:[%s5 + $0x8] sm:$0xff]
  %v345 = vld [vmem:[%s5 + $0x10] sm:$0xff]
  %v346 = vld [vmem:[%s5 + $0x18] sm:$0xff]
  %v347 = vld [vmem:[%s6] sm:$0x1]
  %v349 = vperm.slane %v347, 0
  %351 = vmatpush.msra.mxu0 0.0
  %352 = vmatpush.msra.mxu0 0.0
  %353 = vmatpush.msra.mxu0 0.0
  %354 = vmatpush.msra.mxu0 0.0
  %355 = vmatpush.msra.mxu0 0.0
  %356 = vmatpush.msra.mxu0 0.0
  %357 = vmatpush.msra.mxu0 0.0
  %358 = vmatpush.msra.mxu0 0.0
  %359 = vmatpush.msra.mxu0 0.0
  %360 = vmatpush.msra.mxu0 0.0
  %361 = vmatpush.msra.mxu0 0.0
  %362 = vmatpush.msra.mxu0 0.0
  %363 = vmatpush.msra.mxu0 %v346
  %364 = vmatpush.msra.mxu0 %v345
  %365 = vmatpush.msra.mxu0 %v344
  %366 = vmatpush.msra.mxu0 %v343
  %367 = vmatmul.f32.gmra.mxu0 %v297
  %v368 = vpop.f32.mrf.mxu0
  %v369 = vadd.f32 %v349, %v368
  %370 = vdwg.mxu0
  %s371 = scalar_lea.vmem %s0, 8
  %v372 = vld [vmem:[%s371] sm:$0xf]
  %v373 = vadd.f32 %v372, %v317
  %v374 = vxor.u32 %v373, 2147483648
  %v375 = vmul.f32 %v374, 1.442695
  %v376 = vpow.pop %v375
  %v377 = vadd.f32 %v376, 1.0
  %v378 = vrcp.pop %v377
  %v379 = vmul.f32 %v377, %v378
  %v380 = vsub.f32 1.0, %v379
  %v381 = vmul.f32 %v378, %v380
  %v382 = vadd.f32 %v378, %v381
  %vm383 = vweird.f32 %v377
  %vm384 = vweird.f32 %v378
  %vm385 = vmor %vm383, %vm384
  %v386 = vsel %vm385, %v378, %v382
  %v387 = vand.u32 2147483647, %v377
  %vm388 = vcmp.eq.f32.partialorder %v387, 8.507059e+37
  %v389 = vand.u32 %v377, 2147483648
  %v390 = vor.u32 1.1754944e-38, %v389
  %v391 = vsel %vm388, %v390, %v386
  %v392 = vmul.f32 1.0, %v391
  %s393 = scalar_lea.vmem %s1, 8
  %v394 = vld [vmem:[%s393] sm:$0xf]
  %v395 = vadd.f32 %v394, %v341
  %v396 = vxor.u32 %v395, 2147483648
  %v397 = vmul.f32 %v396, 1.442695
  %v398 = vpow.pop %v397
  %v399 = vadd.f32 %v398, 1.0
  %v400 = vrcp.pop %v399
  %v401 = vmul.f32 %v399, %v400
  %v402 = vsub.f32 1.0, %v401
  %v403 = vmul.f32 %v400, %v402
  %v404 = vadd.f32 %v400, %v403
  %vm405 = vweird.f32 %v399
  %vm406 = vweird.f32 %v400
  %vm407 = vmor %vm405, %vm406
  %v408 = vsel %vm407, %v400, %v404
  %v409 = vand.u32 2147483647, %v399
  %vm410 = vcmp.eq.f32.partialorder %v409, 8.507059e+37
  %v411 = vand.u32 %v399, 2147483648
  %v412 = vor.u32 1.1754944e-38, %v411
  %v413 = vsel %vm410, %v412, %v408
  %v414 = vmul.f32 1.0, %v413
  %s415 = scalar_lea.vmem %s2, 8
  %v416 = vld [vmem:[%s415] sm:$0xf]
  %v417 = vmul.f32 %v392, %v369
  %v418 = vadd.f32 %v416, %v417
  %v419 = vtanh.pop %v418
  %v420 = vsub.f32 1.0, %v414
  %v421 = vmul.f32 %v420, %v419
  %v422 = vmul.f32 %v414, %v289
  %v423 = vadd.f32 %v421, %v422
  %s424 = scalar_lea.vmem %s7, 8
  %425 = vst.msk [vmem:[%s424] sm:$0xf] %vm156, %v423
  %v426 = vld [vmem:[%s3] sm:$0xff]
  %v427 = vld [vmem:[%s3 + $0x8] sm:$0xff]
  %v428 = vld [vmem:[%s3 + $0x10] sm:$0xff]
  %v429 = vld [vmem:[%s3 + $0x18] sm:$0xff]
  %v431 = vsel %vm30, %v423, 0
  %433 = vmatpush.msra.mxu0 0.0
  %434 = vmatpush.msra.mxu0 0.0
  %435 = vmatpush.msra.mxu0 0.0
  %436 = vmatpush.msra.mxu0 0.0
  %437 = vmatpush.msra.mxu0 0.0
  %438 = vmatpush.msra.mxu0 0.0
  %439 = vmatpush.msra.mxu0 0.0
  %440 = vmatpush.msra.mxu0 0.0
  %441 = vmatpush.msra.mxu0 0.0
  %442 = vmatpush.msra.mxu0 0.0
  %443 = vmatpush.msra.mxu0 0.0
  %444 = vmatpush.msra.mxu0 0.0
  %445 = vmatpush.msra.mxu0 %v429
  %446 = vmatpush.msra.mxu0 %v428
  %447 = vmatpush.msra.mxu0 %v427
  %448 = vmatpush.msra.mxu0 %v426
  %449 = vmatmul.f32.gmra.mxu0 %v431
  %v450 = vpop.f32.mrf.mxu0
  %v451 = vadd.f32 0.0, %v450
  %452 = vdwg.mxu0
  %v453 = vld [vmem:[%s4] sm:$0xff]
  %v454 = vld [vmem:[%s4 + $0x8] sm:$0xff]
  %v455 = vld [vmem:[%s4 + $0x10] sm:$0xff]
  %v456 = vld [vmem:[%s4 + $0x18] sm:$0xff]
  %457 = vmatpush.msra.mxu0 0.0
  %458 = vmatpush.msra.mxu0 0.0
  %459 = vmatpush.msra.mxu0 0.0
  %460 = vmatpush.msra.mxu0 0.0
  %461 = vmatpush.msra.mxu0 0.0
  %462 = vmatpush.msra.mxu0 0.0
  %463 = vmatpush.msra.mxu0 0.0
  %464 = vmatpush.msra.mxu0 0.0
  %465 = vmatpush.msra.mxu0 0.0
  %466 = vmatpush.msra.mxu0 0.0
  %467 = vmatpush.msra.mxu0 0.0
  %468 = vmatpush.msra.mxu0 0.0
  %469 = vmatpush.msra.mxu0 %v456
  %470 = vmatpush.msra.mxu0 %v455
  %471 = vmatpush.msra.mxu0 %v454
  %472 = vmatpush.msra.mxu0 %v453
  %473 = vmatmul.f32.gmra.mxu0 %v431
  %v474 = vpop.f32.mrf.mxu0
  %v475 = vadd.f32 0.0, %v474
  %476 = vdwg.mxu0
  %v477 = vld [vmem:[%s5] sm:$0xff]
  %v478 = vld [vmem:[%s5 + $0x8] sm:$0xff]
  %v479 = vld [vmem:[%s5 + $0x10] sm:$0xff]
  %v480 = vld [vmem:[%s5 + $0x18] sm:$0xff]
  %v481 = vld [vmem:[%s6] sm:$0x1]
  %v483 = vperm.slane %v481, 0
  %485 = vmatpush.msra.mxu0 0.0
  %486 = vmatpush.msra.mxu0 0.0
  %487 = vmatpush.msra.mxu0 0.0
  %488 = vmatpush.msra.mxu0 0.0
  %489 = vmatpush.msra.mxu0 0.0
  %490 = vmatpush.msra.mxu0 0.0
  %491 = vmatpush.msra.mxu0 0.0
  %492 = vmatpush.msra.mxu0 0.0
  %493 = vmatpush.msra.mxu0 0.0
  %494 = vmatpush.msra.mxu0 0.0
  %495 = vmatpush.msra.mxu0 0.0
  %496 = vmatpush.msra.mxu0 0.0
  %497 = vmatpush.msra.mxu0 %v480
  %498 = vmatpush.msra.mxu0 %v479
  %499 = vmatpush.msra.mxu0 %v478
  %500 = vmatpush.msra.mxu0 %v477
  %501 = vmatmul.f32.gmra.mxu0 %v431
  %v502 = vpop.f32.mrf.mxu0
  %v503 = vadd.f32 %v483, %v502
  %504 = vdwg.mxu0
  %s505 = scalar_lea.vmem %s0, 12
  %v506 = vld [vmem:[%s505] sm:$0xf]
  %v507 = vadd.f32 %v506, %v451
  %v508 = vxor.u32 %v507, 2147483648
  %v509 = vmul.f32 %v508, 1.442695
  %v510 = vpow.pop %v509
  %v511 = vadd.f32 %v510, 1.0
  %v512 = vrcp.pop %v511
  %v513 = vmul.f32 %v511, %v512
  %v514 = vsub.f32 1.0, %v513
  %v515 = vmul.f32 %v512, %v514
  %v516 = vadd.f32 %v512, %v515
  %vm517 = vweird.f32 %v511
  %vm518 = vweird.f32 %v512
  %vm519 = vmor %vm517, %vm518
  %v520 = vsel %vm519, %v512, %v516
  %v521 = vand.u32 2147483647, %v511
  %vm522 = vcmp.eq.f32.partialorder %v521, 8.507059e+37
  %v523 = vand.u32 %v511, 2147483648
  %v524 = vor.u32 1.1754944e-38, %v523
  %v525 = vsel %vm522, %v524, %v520
  %v526 = vmul.f32 1.0, %v525
  %s527 = scalar_lea.vmem %s1, 12
  %v528 = vld [vmem:[%s527] sm:$0xf]
  %v529 = vadd.f32 %v528, %v475
  %v530 = vxor.u32 %v529, 2147483648
  %v531 = vmul.f32 %v530, 1.442695
  %v532 = vpow.pop %v531
  %v533 = vadd.f32 %v532, 1.0
  %v534 = vrcp.pop %v533
  %v535 = vmul.f32 %v533, %v534
  %v536 = vsub.f32 1.0, %v535
  %v537 = vmul.f32 %v534, %v536
  %v538 = vadd.f32 %v534, %v537
  %vm539 = vweird.f32 %v533
  %vm540 = vweird.f32 %v534
  %vm541 = vmor %vm539, %vm540
  %v542 = vsel %vm541, %v534, %v538
  %v543 = vand.u32 2147483647, %v533
  %vm544 = vcmp.eq.f32.partialorder %v543, 8.507059e+37
  %v545 = vand.u32 %v533, 2147483648
  %v546 = vor.u32 1.1754944e-38, %v545
  %v547 = vsel %vm544, %v546, %v542
  %v548 = vmul.f32 1.0, %v547
  %s549 = scalar_lea.vmem %s2, 12
  %v550 = vld [vmem:[%s549] sm:$0xf]
  %v551 = vmul.f32 %v526, %v503
  %v552 = vadd.f32 %v550, %v551
  %v553 = vtanh.pop %v552
  %v554 = vsub.f32 1.0, %v548
  %v555 = vmul.f32 %v554, %v553
  %v556 = vmul.f32 %v548, %v423
  %v557 = vadd.f32 %v555, %v556
  %s558 = scalar_lea.vmem %s7, 12
  %559 = vst.msk [vmem:[%s558] sm:$0xf] %vm156, %v557
  %v560 = vld [vmem:[%s3] sm:$0xff]
  %v561 = vld [vmem:[%s3 + $0x8] sm:$0xff]
  %v562 = vld [vmem:[%s3 + $0x10] sm:$0xff]
  %v563 = vld [vmem:[%s3 + $0x18] sm:$0xff]
  %v565 = vsel %vm30, %v557, 0
  %567 = vmatpush.msra.mxu0 0.0
  %568 = vmatpush.msra.mxu0 0.0
  %569 = vmatpush.msra.mxu0 0.0
  %570 = vmatpush.msra.mxu0 0.0
  %571 = vmatpush.msra.mxu0 0.0
  %572 = vmatpush.msra.mxu0 0.0
  %573 = vmatpush.msra.mxu0 0.0
  %574 = vmatpush.msra.mxu0 0.0
  %575 = vmatpush.msra.mxu0 0.0
  %576 = vmatpush.msra.mxu0 0.0
  %577 = vmatpush.msra.mxu0 0.0
  %578 = vmatpush.msra.mxu0 0.0
  %579 = vmatpush.msra.mxu0 %v563
  %580 = vmatpush.msra.mxu0 %v562
  %581 = vmatpush.msra.mxu0 %v561
  %582 = vmatpush.msra.mxu0 %v560
  %583 = vmatmul.f32.gmra.mxu0 %v565
  %v584 = vpop.f32.mrf.mxu0
  %v585 = vadd.f32 0.0, %v584
  %586 = vdwg.mxu0
  %v587 = vld [vmem:[%s4] sm:$0xff]
  %v588 = vld [vmem:[%s4 + $0x8] sm:$0xff]
  %v589 = vld [vmem:[%s4 + $0x10] sm:$0xff]
  %v590 = vld [vmem:[%s4 + $0x18] sm:$0xff]
  %591 = vmatpush.msra.mxu0 0.0
  %592 = vmatpush.msra.mxu0 0.0
  %593 = vmatpush.msra.mxu0 0.0
  %594 = vmatpush.msra.mxu0 0.0
  %595 = vmatpush.msra.mxu0 0.0
  %596 = vmatpush.msra.mxu0 0.0
  %597 = vmatpush.msra.mxu0 0.0
  %598 = vmatpush.msra.mxu0 0.0
  %599 = vmatpush.msra.mxu0 0.0
  %600 = vmatpush.msra.mxu0 0.0
  %601 = vmatpush.msra.mxu0 0.0
  %602 = vmatpush.msra.mxu0 0.0
  %603 = vmatpush.msra.mxu0 %v590
  %604 = vmatpush.msra.mxu0 %v589
  %605 = vmatpush.msra.mxu0 %v588
  %606 = vmatpush.msra.mxu0 %v587
  %607 = vmatmul.f32.gmra.mxu0 %v565
  %v608 = vpop.f32.mrf.mxu0
  %v609 = vadd.f32 0.0, %v608
  %610 = vdwg.mxu0
  %v611 = vld [vmem:[%s5] sm:$0xff]
  %v612 = vld [vmem:[%s5 + $0x8] sm:$0xff]
  %v613 = vld [vmem:[%s5 + $0x10] sm:$0xff]
  %v614 = vld [vmem:[%s5 + $0x18] sm:$0xff]
  %v615 = vld [vmem:[%s6] sm:$0x1]
  %v617 = vperm.slane %v615, 0
  %619 = vmatpush.msra.mxu0 0.0
  %620 = vmatpush.msra.mxu0 0.0
  %621 = vmatpush.msra.mxu0 0.0
  %622 = vmatpush.msra.mxu0 0.0
  %623 = vmatpush.msra.mxu0 0.0
  %624 = vmatpush.msra.mxu0 0.0
  %625 = vmatpush.msra.mxu0 0.0
  %626 = vmatpush.msra.mxu0 0.0
  %627 = vmatpush.msra.mxu0 0.0
  %628 = vmatpush.msra.mxu0 0.0
  %629 = vmatpush.msra.mxu0 0.0
  %630 = vmatpush.msra.mxu0 0.0
  %631 = vmatpush.msra.mxu0 %v614
  %632 = vmatpush.msra.mxu0 %v613
  %633 = vmatpush.msra.mxu0 %v612
  %634 = vmatpush.msra.mxu0 %v611
  %635 = vmatmul.f32.gmra.mxu0 %v565
  %v636 = vpop.f32.mrf.mxu0
  %v637 = vadd.f32 %v617, %v636
  %638 = vdwg.mxu0
  %s639 = scalar_lea.vmem %s0, 16
  %v640 = vld [vmem:[%s639] sm:$0xf]
  %v641 = vadd.f32 %v640, %v585
  %v642 = vxor.u32 %v641, 2147483648
  %v643 = vmul.f32 %v642, 1.442695
  %v644 = vpow.pop %v643
  %v645 = vadd.f32 %v644, 1.0
  %v646 = vrcp.pop %v645
  %v647 = vmul.f32 %v645, %v646
  %v648 = vsub.f32 1.0, %v647
  %v649 = vmul.f32 %v646, %v648
  %v650 = vadd.f32 %v646, %v649
  %vm651 = vweird.f32 %v645
  %vm652 = vweird.f32 %v646
  %vm653 = vmor %vm651, %vm652
  %v654 = vsel %vm653, %v646, %v650
  %v655 = vand.u32 2147483647, %v645
  %vm656 = vcmp.eq.f32.partialorder %v655, 8.507059e+37
  %v657 = vand.u32 %v645, 2147483648
  %v658 = vor.u32 1.1754944e-38, %v657
  %v659 = vsel %vm656, %v658, %v654
  %v660 = vmul.f32 1.0, %v659
  %s661 = scalar_lea.vmem %s1, 16
  %v662 = vld [vmem:[%s661] sm:$0xf]
  %v663 = vadd.f32 %v662, %v609
  %v664 = vxor.u32 %v663, 2147483648
  %v665 = vmul.f32 %v664, 1.442695
  %v666 = vpow.pop %v665
  %v667 = vadd.f32 %v666, 1.0
  %v668 = vrcp.pop %v667
  %v669 = vmul.f32 %v667, %v668
  %v670 = vsub.f32 1.0, %v669
  %v671 = vmul.f32 %v668, %v670
  %v672 = vadd.f32 %v668, %v671
  %vm673 = vweird.f32 %v667
  %vm674 = vweird.f32 %v668
  %vm675 = vmor %vm673, %vm674
  %v676 = vsel %vm675, %v668, %v672
  %v677 = vand.u32 2147483647, %v667
  %vm678 = vcmp.eq.f32.partialorder %v677, 8.507059e+37
  %v679 = vand.u32 %v667, 2147483648
  %v680 = vor.u32 1.1754944e-38, %v679
  %v681 = vsel %vm678, %v680, %v676
  %v682 = vmul.f32 1.0, %v681
  %s683 = scalar_lea.vmem %s2, 16
  %v684 = vld [vmem:[%s683] sm:$0xf]
  %v685 = vmul.f32 %v660, %v637
  %v686 = vadd.f32 %v684, %v685
  %v687 = vtanh.pop %v686
  %v688 = vsub.f32 1.0, %v682
  %v689 = vmul.f32 %v688, %v687
  %v690 = vmul.f32 %v682, %v557
  %v691 = vadd.f32 %v689, %v690
  %s692 = scalar_lea.vmem %s7, 16
  %693 = vst.msk [vmem:[%s692] sm:$0xf] %vm156, %v691
  %v694 = vld [vmem:[%s3] sm:$0xff]
  %v695 = vld [vmem:[%s3 + $0x8] sm:$0xff]
  %v696 = vld [vmem:[%s3 + $0x10] sm:$0xff]
  %v697 = vld [vmem:[%s3 + $0x18] sm:$0xff]
  %v699 = vsel %vm30, %v691, 0
  %701 = vmatpush.msra.mxu0 0.0
  %702 = vmatpush.msra.mxu0 0.0
  %703 = vmatpush.msra.mxu0 0.0
  %704 = vmatpush.msra.mxu0 0.0
  %705 = vmatpush.msra.mxu0 0.0
  %706 = vmatpush.msra.mxu0 0.0
  %707 = vmatpush.msra.mxu0 0.0
  %708 = vmatpush.msra.mxu0 0.0
  %709 = vmatpush.msra.mxu0 0.0
  %710 = vmatpush.msra.mxu0 0.0
  %711 = vmatpush.msra.mxu0 0.0
  %712 = vmatpush.msra.mxu0 0.0
  %713 = vmatpush.msra.mxu0 %v697
  %714 = vmatpush.msra.mxu0 %v696
  %715 = vmatpush.msra.mxu0 %v695
  %716 = vmatpush.msra.mxu0 %v694
  %717 = vmatmul.f32.gmra.mxu0 %v699
  %v718 = vpop.f32.mrf.mxu0
  %v719 = vadd.f32 0.0, %v718
  %720 = vdwg.mxu0
  %v721 = vld [vmem:[%s4] sm:$0xff]
  %v722 = vld [vmem:[%s4 + $0x8] sm:$0xff]
  %v723 = vld [vmem:[%s4 + $0x10] sm:$0xff]
  %v724 = vld [vmem:[%s4 + $0x18] sm:$0xff]
  %725 = vmatpush.msra.mxu0 0.0
  %726 = vmatpush.msra.mxu0 0.0
  %727 = vmatpush.msra.mxu0 0.0
  %728 = vmatpush.msra.mxu0 0.0
  %729 = vmatpush.msra.mxu0 0.0
  %730 = vmatpush.msra.mxu0 0.0
  %731 = vmatpush.msra.mxu0 0.0
  %732 = vmatpush.msra.mxu0 0.0
  %733 = vmatpush.msra.mxu0 0.0
  %734 = vmatpush.msra.mxu0 0.0
  %735 = vmatpush.msra.mxu0 0.0
  %736 = vmatpush.msra.mxu0 0.0
  %737 = vmatpush.msra.mxu0 %v724
  %738 = vmatpush.msra.mxu0 %v723
  %739 = vmatpush.msra.mxu0 %v722
  %740 = vmatpush.msra.mxu0 %v721
  %741 = vmatmul.f32.gmra.mxu0 %v699
  %v742 = vpop.f32.mrf.mxu0
  %v743 = vadd.f32 0.0, %v742
  %744 = vdwg.mxu0
  %v745 = vld [vmem:[%s5] sm:$0xff]
  %v746 = vld [vmem:[%s5 + $0x8] sm:$0xff]
  %v747 = vld [vmem:[%s5 + $0x10] sm:$0xff]
  %v748 = vld [vmem:[%s5 + $0x18] sm:$0xff]
  %v749 = vld [vmem:[%s6] sm:$0x1]
  %v751 = vperm.slane %v749, 0
  %753 = vmatpush.msra.mxu0 0.0
  %754 = vmatpush.msra.mxu0 0.0
  %755 = vmatpush.msra.mxu0 0.0
  %756 = vmatpush.msra.mxu0 0.0
  %757 = vmatpush.msra.mxu0 0.0
  %758 = vmatpush.msra.mxu0 0.0
  %759 = vmatpush.msra.mxu0 0.0
  %760 = vmatpush.msra.mxu0 0.0
  %761 = vmatpush.msra.mxu0 0.0
  %762 = vmatpush.msra.mxu0 0.0
  %763 = vmatpush.msra.mxu0 0.0
  %764 = vmatpush.msra.mxu0 0.0
  %765 = vmatpush.msra.mxu0 %v748
  %766 = vmatpush.msra.mxu0 %v747
  %767 = vmatpush.msra.mxu0 %v746
  %768 = vmatpush.msra.mxu0 %v745
  %769 = vmatmul.f32.gmra.mxu0 %v699
  %v770 = vpop.f32.mrf.mxu0
  %v771 = vadd.f32 %v751, %v770
  %772 = vdwg.mxu0
  %s773 = scalar_lea.vmem %s0, 20
  %v774 = vld [vmem:[%s773] sm:$0xf]
  %v775 = vadd.f32 %v774, %v719
  %v776 = vxor.u32 %v775, 2147483648
  %v777 = vmul.f32 %v776, 1.442695
  %v778 = vpow.pop %v777
  %v779 = vadd.f32 %v778, 1.0
  %v780 = vrcp.pop %v779
  %v781 = vmul.f32 %v779, %v780
  %v782 = vsub.f32 1.0, %v781
  %v783 = vmul.f32 %v780, %v782
  %v784 = vadd.f32 %v780, %v783
  %vm785 = vweird.f32 %v779
  %vm786 = vweird.f32 %v780
  %vm787 = vmor %vm785, %vm786
  %v788 = vsel %vm787, %v780, %v784
  %v789 = vand.u32 2147483647, %v779
  %vm790 = vcmp.eq.f32.partialorder %v789, 8.507059e+37
  %v791 = vand.u32 %v779, 2147483648
  %v792 = vor.u32 1.1754944e-38, %v791
  %v793 = vsel %vm790, %v792, %v788
  %v794 = vmul.f32 1.0, %v793
  %s795 = scalar_lea.vmem %s1, 20
  %v796 = vld [vmem:[%s795] sm:$0xf]
  %v797 = vadd.f32 %v796, %v743
  %v798 = vxor.u32 %v797, 2147483648
  %v799 = vmul.f32 %v798, 1.442695
  %v800 = vpow.pop %v799
  %v801 = vadd.f32 %v800, 1.0
  %v802 = vrcp.pop %v801
  %v803 = vmul.f32 %v801, %v802
  %v804 = vsub.f32 1.0, %v803
  %v805 = vmul.f32 %v802, %v804
  %v806 = vadd.f32 %v802, %v805
  %vm807 = vweird.f32 %v801
  %vm808 = vweird.f32 %v802
  %vm809 = vmor %vm807, %vm808
  %v810 = vsel %vm809, %v802, %v806
  %v811 = vand.u32 2147483647, %v801
  %vm812 = vcmp.eq.f32.partialorder %v811, 8.507059e+37
  %v813 = vand.u32 %v801, 2147483648
  %v814 = vor.u32 1.1754944e-38, %v813
  %v815 = vsel %vm812, %v814, %v810
  %v816 = vmul.f32 1.0, %v815
  %s817 = scalar_lea.vmem %s2, 20
  %v818 = vld [vmem:[%s817] sm:$0xf]
  %v819 = vmul.f32 %v794, %v771
  %v820 = vadd.f32 %v818, %v819
  %v821 = vtanh.pop %v820
  %v822 = vsub.f32 1.0, %v816
  %v823 = vmul.f32 %v822, %v821
  %v824 = vmul.f32 %v816, %v691
  %v825 = vadd.f32 %v823, %v824
  %s826 = scalar_lea.vmem %s7, 20
  %827 = vst.msk [vmem:[%s826] sm:$0xf] %vm156, %v825
  %v828 = vld [vmem:[%s3] sm:$0xff]
  %v829 = vld [vmem:[%s3 + $0x8] sm:$0xff]
  %v830 = vld [vmem:[%s3 + $0x10] sm:$0xff]
  %v831 = vld [vmem:[%s3 + $0x18] sm:$0xff]
  %v833 = vsel %vm30, %v825, 0
  %835 = vmatpush.msra.mxu0 0.0
  %836 = vmatpush.msra.mxu0 0.0
  %837 = vmatpush.msra.mxu0 0.0
  %838 = vmatpush.msra.mxu0 0.0
  %839 = vmatpush.msra.mxu0 0.0
  %840 = vmatpush.msra.mxu0 0.0
  %841 = vmatpush.msra.mxu0 0.0
  %842 = vmatpush.msra.mxu0 0.0
  %843 = vmatpush.msra.mxu0 0.0
  %844 = vmatpush.msra.mxu0 0.0
  %845 = vmatpush.msra.mxu0 0.0
  %846 = vmatpush.msra.mxu0 0.0
  %847 = vmatpush.msra.mxu0 %v831
  %848 = vmatpush.msra.mxu0 %v830
  %849 = vmatpush.msra.mxu0 %v829
  %850 = vmatpush.msra.mxu0 %v828
  %851 = vmatmul.f32.gmra.mxu0 %v833
  %v852 = vpop.f32.mrf.mxu0
  %v853 = vadd.f32 0.0, %v852
  %854 = vdwg.mxu0
  %v855 = vld [vmem:[%s4] sm:$0xff]
  %v856 = vld [vmem:[%s4 + $0x8] sm:$0xff]
  %v857 = vld [vmem:[%s4 + $0x10] sm:$0xff]
  %v858 = vld [vmem:[%s4 + $0x18] sm:$0xff]
  %859 = vmatpush.msra.mxu0 0.0
  %860 = vmatpush.msra.mxu0 0.0
  %861 = vmatpush.msra.mxu0 0.0
  %862 = vmatpush.msra.mxu0 0.0
  %863 = vmatpush.msra.mxu0 0.0
  %864 = vmatpush.msra.mxu0 0.0
  %865 = vmatpush.msra.mxu0 0.0
  %866 = vmatpush.msra.mxu0 0.0
  %867 = vmatpush.msra.mxu0 0.0
  %868 = vmatpush.msra.mxu0 0.0
  %869 = vmatpush.msra.mxu0 0.0
  %870 = vmatpush.msra.mxu0 0.0
  %871 = vmatpush.msra.mxu0 %v858
  %872 = vmatpush.msra.mxu0 %v857
  %873 = vmatpush.msra.mxu0 %v856
  %874 = vmatpush.msra.mxu0 %v855
  %875 = vmatmul.f32.gmra.mxu0 %v833
  %v876 = vpop.f32.mrf.mxu0
  %v877 = vadd.f32 0.0, %v876
  %878 = vdwg.mxu0
  %v879 = vld [vmem:[%s5] sm:$0xff]
  %v880 = vld [vmem:[%s5 + $0x8] sm:$0xff]
  %v881 = vld [vmem:[%s5 + $0x10] sm:$0xff]
  %v882 = vld [vmem:[%s5 + $0x18] sm:$0xff]
  %v883 = vld [vmem:[%s6] sm:$0x1]
  %v885 = vperm.slane %v883, 0
  %887 = vmatpush.msra.mxu0 0.0
  %888 = vmatpush.msra.mxu0 0.0
  %889 = vmatpush.msra.mxu0 0.0
  %890 = vmatpush.msra.mxu0 0.0
  %891 = vmatpush.msra.mxu0 0.0
  %892 = vmatpush.msra.mxu0 0.0
  %893 = vmatpush.msra.mxu0 0.0
  %894 = vmatpush.msra.mxu0 0.0
  %895 = vmatpush.msra.mxu0 0.0
  %896 = vmatpush.msra.mxu0 0.0
  %897 = vmatpush.msra.mxu0 0.0
  %898 = vmatpush.msra.mxu0 0.0
  %899 = vmatpush.msra.mxu0 %v882
  %900 = vmatpush.msra.mxu0 %v881
  %901 = vmatpush.msra.mxu0 %v880
  %902 = vmatpush.msra.mxu0 %v879
  %903 = vmatmul.f32.gmra.mxu0 %v833
  %v904 = vpop.f32.mrf.mxu0
  %v905 = vadd.f32 %v885, %v904
  %906 = vdwg.mxu0
  %s907 = scalar_lea.vmem %s0, 24
  %v908 = vld [vmem:[%s907] sm:$0xf]
  %v909 = vadd.f32 %v908, %v853
  %v910 = vxor.u32 %v909, 2147483648
  %v911 = vmul.f32 %v910, 1.442695
  %v912 = vpow.pop %v911
  %v913 = vadd.f32 %v912, 1.0
  %v914 = vrcp.pop %v913
  %v915 = vmul.f32 %v913, %v914
  %v916 = vsub.f32 1.0, %v915
  %v917 = vmul.f32 %v914, %v916
  %v918 = vadd.f32 %v914, %v917
  %vm919 = vweird.f32 %v913
  %vm920 = vweird.f32 %v914
  %vm921 = vmor %vm919, %vm920
  %v922 = vsel %vm921, %v914, %v918
  %v923 = vand.u32 2147483647, %v913
  %vm924 = vcmp.eq.f32.partialorder %v923, 8.507059e+37
  %v925 = vand.u32 %v913, 2147483648
  %v926 = vor.u32 1.1754944e-38, %v925
  %v927 = vsel %vm924, %v926, %v922
  %v928 = vmul.f32 1.0, %v927
  %s929 = scalar_lea.vmem %s1, 24
  %v930 = vld [vmem:[%s929] sm:$0xf]
  %v931 = vadd.f32 %v930, %v877
  %v932 = vxor.u32 %v931, 2147483648
  %v933 = vmul.f32 %v932, 1.442695
  %v934 = vpow.pop %v933
  %v935 = vadd.f32 %v934, 1.0
  %v936 = vrcp.pop %v935
  %v937 = vmul.f32 %v935, %v936
  %v938 = vsub.f32 1.0, %v937
  %v939 = vmul.f32 %v936, %v938
  %v940 = vadd.f32 %v936, %v939
  %vm941 = vweird.f32 %v935
  %vm942 = vweird.f32 %v936
  %vm943 = vmor %vm941, %vm942
  %v944 = vsel %vm943, %v936, %v940
  %v945 = vand.u32 2147483647, %v935
  %vm946 = vcmp.eq.f32.partialorder %v945, 8.507059e+37
  %v947 = vand.u32 %v935, 2147483648
  %v948 = vor.u32 1.1754944e-38, %v947
  %v949 = vsel %vm946, %v948, %v944
  %v950 = vmul.f32 1.0, %v949
  %s951 = scalar_lea.vmem %s2, 24
  %v952 = vld [vmem:[%s951] sm:$0xf]
  %v953 = vmul.f32 %v928, %v905
  %v954 = vadd.f32 %v952, %v953
  %v955 = vtanh.pop %v954
  %v956 = vsub.f32 1.0, %v950
  %v957 = vmul.f32 %v956, %v955
  %v958 = vmul.f32 %v950, %v825
  %v959 = vadd.f32 %v957, %v958
  %s960 = scalar_lea.vmem %s7, 24
  %961 = vst.msk [vmem:[%s960] sm:$0xf] %vm156, %v959
  %v962 = vld [vmem:[%s3] sm:$0xff]
  %v963 = vld [vmem:[%s3 + $0x8] sm:$0xff]
  %v964 = vld [vmem:[%s3 + $0x10] sm:$0xff]
  %v965 = vld [vmem:[%s3 + $0x18] sm:$0xff]
  %v967 = vsel %vm30, %v959, 0
  %969 = vmatpush.msra.mxu0 0.0
  %970 = vmatpush.msra.mxu0 0.0
  %971 = vmatpush.msra.mxu0 0.0
  %972 = vmatpush.msra.mxu0 0.0
  %973 = vmatpush.msra.mxu0 0.0
  %974 = vmatpush.msra.mxu0 0.0
  %975 = vmatpush.msra.mxu0 0.0
  %976 = vmatpush.msra.mxu0 0.0
  %977 = vmatpush.msra.mxu0 0.0
  %978 = vmatpush.msra.mxu0 0.0
  %979 = vmatpush.msra.mxu0 0.0
  %980 = vmatpush.msra.mxu0 0.0
  %981 = vmatpush.msra.mxu0 %v965
  %982 = vmatpush.msra.mxu0 %v964
  %983 = vmatpush.msra.mxu0 %v963
  %984 = vmatpush.msra.mxu0 %v962
  %985 = vmatmul.f32.gmra.mxu0 %v967
  %v986 = vpop.f32.mrf.mxu0
  %v987 = vadd.f32 0.0, %v986
  %988 = vdwg.mxu0
  %v989 = vld [vmem:[%s4] sm:$0xff]
  %v990 = vld [vmem:[%s4 + $0x8] sm:$0xff]
  %v991 = vld [vmem:[%s4 + $0x10] sm:$0xff]
  %v992 = vld [vmem:[%s4 + $0x18] sm:$0xff]
  %993 = vmatpush.msra.mxu0 0.0
  %994 = vmatpush.msra.mxu0 0.0
  %995 = vmatpush.msra.mxu0 0.0
  %996 = vmatpush.msra.mxu0 0.0
  %997 = vmatpush.msra.mxu0 0.0
  %998 = vmatpush.msra.mxu0 0.0
  %999 = vmatpush.msra.mxu0 0.0
  %1000 = vmatpush.msra.mxu0 0.0
  %1001 = vmatpush.msra.mxu0 0.0
  %1002 = vmatpush.msra.mxu0 0.0
  %1003 = vmatpush.msra.mxu0 0.0
  %1004 = vmatpush.msra.mxu0 0.0
  %1005 = vmatpush.msra.mxu0 %v992
  %1006 = vmatpush.msra.mxu0 %v991
  %1007 = vmatpush.msra.mxu0 %v990
  %1008 = vmatpush.msra.mxu0 %v989
  %1009 = vmatmul.f32.gmra.mxu0 %v967
  %v1010 = vpop.f32.mrf.mxu0
  %v1011 = vadd.f32 0.0, %v1010
  %1012 = vdwg.mxu0
  %v1013 = vld [vmem:[%s5] sm:$0xff]
  %v1014 = vld [vmem:[%s5 + $0x8] sm:$0xff]
  %v1015 = vld [vmem:[%s5 + $0x10] sm:$0xff]
  %v1016 = vld [vmem:[%s5 + $0x18] sm:$0xff]
  %v1017 = vld [vmem:[%s6] sm:$0x1]
  %v1019 = vperm.slane %v1017, 0
  %1021 = vmatpush.msra.mxu0 0.0
  %1022 = vmatpush.msra.mxu0 0.0
  %1023 = vmatpush.msra.mxu0 0.0
  %1024 = vmatpush.msra.mxu0 0.0
  %1025 = vmatpush.msra.mxu0 0.0
  %1026 = vmatpush.msra.mxu0 0.0
  %1027 = vmatpush.msra.mxu0 0.0
  %1028 = vmatpush.msra.mxu0 0.0
  %1029 = vmatpush.msra.mxu0 0.0
  %1030 = vmatpush.msra.mxu0 0.0
  %1031 = vmatpush.msra.mxu0 0.0
  %1032 = vmatpush.msra.mxu0 0.0
  %1033 = vmatpush.msra.mxu0 %v1016
  %1034 = vmatpush.msra.mxu0 %v1015
  %1035 = vmatpush.msra.mxu0 %v1014
  %1036 = vmatpush.msra.mxu0 %v1013
  %1037 = vmatmul.f32.gmra.mxu0 %v967
  %v1038 = vpop.f32.mrf.mxu0
  %v1039 = vadd.f32 %v1019, %v1038
  %1040 = vdwg.mxu0
  %s1041 = scalar_lea.vmem %s0, 28
  %v1042 = vld [vmem:[%s1041] sm:$0xf]
  %v1043 = vadd.f32 %v1042, %v987
  %v1044 = vxor.u32 %v1043, 2147483648
  %v1045 = vmul.f32 %v1044, 1.442695
  %v1046 = vpow.pop %v1045
  %v1047 = vadd.f32 %v1046, 1.0
  %v1048 = vrcp.pop %v1047
  %v1049 = vmul.f32 %v1047, %v1048
  %v1050 = vsub.f32 1.0, %v1049
  %v1051 = vmul.f32 %v1048, %v1050
  %v1052 = vadd.f32 %v1048, %v1051
  %vm1053 = vweird.f32 %v1047
  %vm1054 = vweird.f32 %v1048
  %vm1055 = vmor %vm1053, %vm1054
  %v1056 = vsel %vm1055, %v1048, %v1052
  %v1057 = vand.u32 2147483647, %v1047
  %vm1058 = vcmp.eq.f32.partialorder %v1057, 8.507059e+37
  %v1059 = vand.u32 %v1047, 2147483648
  %v1060 = vor.u32 1.1754944e-38, %v1059
  %v1061 = vsel %vm1058, %v1060, %v1056
  %v1062 = vmul.f32 1.0, %v1061
  %s1063 = scalar_lea.vmem %s1, 28
  %v1064 = vld [vmem:[%s1063] sm:$0xf]
  %v1065 = vadd.f32 %v1064, %v1011
  %v1066 = vxor.u32 %v1065, 2147483648
  %v1067 = vmul.f32 %v1066, 1.442695
  %v1068 = vpow.pop %v1067
  %v1069 = vadd.f32 %v1068, 1.0
  %v1070 = vrcp.pop %v1069
  %v1071 = vmul.f32 %v1069, %v1070
  %v1072 = vsub.f32 1.0, %v1071
  %v1073 = vmul.f32 %v1070, %v1072
  %v1074 = vadd.f32 %v1070, %v1073
  %vm1075 = vweird.f32 %v1069
  %vm1076 = vweird.f32 %v1070
  %vm1077 = vmor %vm1075, %vm1076
  %v1078 = vsel %vm1077, %v1070, %v1074
  %v1079 = vand.u32 2147483647, %v1069
  %vm1080 = vcmp.eq.f32.partialorder %v1079, 8.507059e+37
  %v1081 = vand.u32 %v1069, 2147483648
  %v1082 = vor.u32 1.1754944e-38, %v1081
  %v1083 = vsel %vm1080, %v1082, %v1078
  %v1084 = vmul.f32 1.0, %v1083
  %s1085 = scalar_lea.vmem %s2, 28
  %v1086 = vld [vmem:[%s1085] sm:$0xf]
  %v1087 = vmul.f32 %v1062, %v1039
  %v1088 = vadd.f32 %v1086, %v1087
  %v1089 = vtanh.pop %v1088
  %v1090 = vsub.f32 1.0, %v1084
  %v1091 = vmul.f32 %v1090, %v1089
  %v1092 = vmul.f32 %v1084, %v959
  %v1093 = vadd.f32 %v1091, %v1092
  %s1094 = scalar_lea.vmem %s7, 28
  %1095 = vst.msk [vmem:[%s1094] sm:$0xf] %vm156, %v1093
  %v1096 = vld [vmem:[%s3] sm:$0xff]
  %v1097 = vld [vmem:[%s3 + $0x8] sm:$0xff]
  %v1098 = vld [vmem:[%s3 + $0x10] sm:$0xff]
  %v1099 = vld [vmem:[%s3 + $0x18] sm:$0xff]
  %v1101 = vsel %vm30, %v1093, 0
  %1103 = vmatpush.msra.mxu0 0.0
  %1104 = vmatpush.msra.mxu0 0.0
  %1105 = vmatpush.msra.mxu0 0.0
  %1106 = vmatpush.msra.mxu0 0.0
  %1107 = vmatpush.msra.mxu0 0.0
  %1108 = vmatpush.msra.mxu0 0.0
  %1109 = vmatpush.msra.mxu0 0.0
  %1110 = vmatpush.msra.mxu0 0.0
  %1111 = vmatpush.msra.mxu0 0.0
  %1112 = vmatpush.msra.mxu0 0.0
  %1113 = vmatpush.msra.mxu0 0.0
  %1114 = vmatpush.msra.mxu0 0.0
  %1115 = vmatpush.msra.mxu0 %v1099
  %1116 = vmatpush.msra.mxu0 %v1098
  %1117 = vmatpush.msra.mxu0 %v1097
  %1118 = vmatpush.msra.mxu0 %v1096
  %1119 = vmatmul.f32.gmra.mxu0 %v1101
  %v1120 = vpop.f32.mrf.mxu0
  %v1121 = vadd.f32 0.0, %v1120
  %1122 = vdwg.mxu0
  %v1123 = vld [vmem:[%s4] sm:$0xff]
  %v1124 = vld [vmem:[%s4 + $0x8] sm:$0xff]
  %v1125 = vld [vmem:[%s4 + $0x10] sm:$0xff]
  %v1126 = vld [vmem:[%s4 + $0x18] sm:$0xff]
  %1127 = vmatpush.msra.mxu0 0.0
  %1128 = vmatpush.msra.mxu0 0.0
  %1129 = vmatpush.msra.mxu0 0.0
  %1130 = vmatpush.msra.mxu0 0.0
  %1131 = vmatpush.msra.mxu0 0.0
  %1132 = vmatpush.msra.mxu0 0.0
  %1133 = vmatpush.msra.mxu0 0.0
  %1134 = vmatpush.msra.mxu0 0.0
  %1135 = vmatpush.msra.mxu0 0.0
  %1136 = vmatpush.msra.mxu0 0.0
  %1137 = vmatpush.msra.mxu0 0.0
  %1138 = vmatpush.msra.mxu0 0.0
  %1139 = vmatpush.msra.mxu0 %v1126
  %1140 = vmatpush.msra.mxu0 %v1125
  %1141 = vmatpush.msra.mxu0 %v1124
  %1142 = vmatpush.msra.mxu0 %v1123
  %1143 = vmatmul.f32.gmra.mxu0 %v1101
  %v1144 = vpop.f32.mrf.mxu0
  %v1145 = vadd.f32 0.0, %v1144
  %1146 = vdwg.mxu0
  %v1147 = vld [vmem:[%s5] sm:$0xff]
  %v1148 = vld [vmem:[%s5 + $0x8] sm:$0xff]
  %v1149 = vld [vmem:[%s5 + $0x10] sm:$0xff]
  %v1150 = vld [vmem:[%s5 + $0x18] sm:$0xff]
  %v1151 = vld [vmem:[%s6] sm:$0x1]
  %v1153 = vperm.slane %v1151, 0
  %1155 = vmatpush.msra.mxu0 0.0
  %1156 = vmatpush.msra.mxu0 0.0
  %1157 = vmatpush.msra.mxu0 0.0
  %1158 = vmatpush.msra.mxu0 0.0
  %1159 = vmatpush.msra.mxu0 0.0
  %1160 = vmatpush.msra.mxu0 0.0
  %1161 = vmatpush.msra.mxu0 0.0
  %1162 = vmatpush.msra.mxu0 0.0
  %1163 = vmatpush.msra.mxu0 0.0
  %1164 = vmatpush.msra.mxu0 0.0
  %1165 = vmatpush.msra.mxu0 0.0
  %1166 = vmatpush.msra.mxu0 0.0
  %1167 = vmatpush.msra.mxu0 %v1150
  %1168 = vmatpush.msra.mxu0 %v1149
  %1169 = vmatpush.msra.mxu0 %v1148
  %1170 = vmatpush.msra.mxu0 %v1147
  %1171 = vmatmul.f32.gmra.mxu0 %v1101
  %v1172 = vpop.f32.mrf.mxu0
  %v1173 = vadd.f32 %v1153, %v1172
  %1174 = vdwg.mxu0
  %v1175 = vld [vmem:[%s0] sm:$0xf]
  %v1176 = vadd.f32 %v1175, %v1121
  %v1177 = vxor.u32 %v1176, 2147483648
  %v1178 = vmul.f32 %v1177, 1.442695
  %v1179 = vpow.pop %v1178
  %v1180 = vadd.f32 %v1179, 1.0
  %v1181 = vrcp.pop %v1180
  %v1182 = vmul.f32 %v1180, %v1181
  %v1183 = vsub.f32 1.0, %v1182
  %v1184 = vmul.f32 %v1181, %v1183
  %v1185 = vadd.f32 %v1181, %v1184
  %vm1186 = vweird.f32 %v1180
  %vm1187 = vweird.f32 %v1181
  %vm1188 = vmor %vm1186, %vm1187
  %v1189 = vsel %vm1188, %v1181, %v1185
  %v1190 = vand.u32 2147483647, %v1180
  %vm1191 = vcmp.eq.f32.partialorder %v1190, 8.507059e+37
  %v1192 = vand.u32 %v1180, 2147483648
  %v1193 = vor.u32 1.1754944e-38, %v1192
  %v1194 = vsel %vm1191, %v1193, %v1189
  %v1195 = vmul.f32 1.0, %v1194
  %v1196 = vld [vmem:[%s1] sm:$0xf]
  %v1197 = vadd.f32 %v1196, %v1145
  %v1198 = vxor.u32 %v1197, 2147483648
  %v1199 = vmul.f32 %v1198, 1.442695
  %v1200 = vpow.pop %v1199
  %v1201 = vadd.f32 %v1200, 1.0
  %v1202 = vrcp.pop %v1201
  %v1203 = vmul.f32 %v1201, %v1202
  %v1204 = vsub.f32 1.0, %v1203
  %v1205 = vmul.f32 %v1202, %v1204
  %v1206 = vadd.f32 %v1202, %v1205
  %vm1207 = vweird.f32 %v1201
  %vm1208 = vweird.f32 %v1202
  %vm1209 = vmor %vm1207, %vm1208
  %v1210 = vsel %vm1209, %v1202, %v1206
  %v1211 = vand.u32 2147483647, %v1201
  %vm1212 = vcmp.eq.f32.partialorder %v1211, 8.507059e+37
  %v1213 = vand.u32 %v1201, 2147483648
  %v1214 = vor.u32 1.1754944e-38, %v1213
  %v1215 = vsel %vm1212, %v1214, %v1210
  %v1216 = vmul.f32 1.0, %v1215
  %v1217 = vld [vmem:[%s2] sm:$0xf]
  %v1218 = vmul.f32 %v1195, %v1173
  %v1219 = vadd.f32 %v1217, %v1218
  %v1220 = vtanh.pop %v1219
  %v1221 = vsub.f32 1.0, %v1216
  %v1222 = vmul.f32 %v1221, %v1220
  %v1223 = vmul.f32 %v1216, %v1093
  %v1224 = vadd.f32 %v1222, %v1223
  %s1225 = scalar_lea.vmem %s7, 32
  %1226 = vst.msk [vmem:[%s1225] sm:$0xf] %vm156, %v1224
  %v1227 = vld [vmem:[%s3] sm:$0xff]
  %v1228 = vld [vmem:[%s3 + $0x8] sm:$0xff]
  %v1229 = vld [vmem:[%s3 + $0x10] sm:$0xff]
  %v1230 = vld [vmem:[%s3 + $0x18] sm:$0xff]
  %v1232 = vsel %vm30, %v1224, 0
  %1234 = vmatpush.msra.mxu0 0.0
  %1235 = vmatpush.msra.mxu0 0.0
  %1236 = vmatpush.msra.mxu0 0.0
  %1237 = vmatpush.msra.mxu0 0.0
  %1238 = vmatpush.msra.mxu0 0.0
  %1239 = vmatpush.msra.mxu0 0.0
  %1240 = vmatpush.msra.mxu0 0.0
  %1241 = vmatpush.msra.mxu0 0.0
  %1242 = vmatpush.msra.mxu0 0.0
  %1243 = vmatpush.msra.mxu0 0.0
  %1244 = vmatpush.msra.mxu0 0.0
  %1245 = vmatpush.msra.mxu0 0.0
  %1246 = vmatpush.msra.mxu0 %v1230
  %1247 = vmatpush.msra.mxu0 %v1229
  %1248 = vmatpush.msra.mxu0 %v1228
  %1249 = vmatpush.msra.mxu0 %v1227
  %1250 = vmatmul.f32.gmra.mxu0 %v1232
  %v1251 = vpop.f32.mrf.mxu0
  %v1252 = vadd.f32 0.0, %v1251
  %1253 = vdwg.mxu0
  %v1254 = vld [vmem:[%s4] sm:$0xff]
  %v1255 = vld [vmem:[%s4 + $0x8] sm:$0xff]
  %v1256 = vld [vmem:[%s4 + $0x10] sm:$0xff]
  %v1257 = vld [vmem:[%s4 + $0x18] sm:$0xff]
  %1258 = vmatpush.msra.mxu0 0.0
  %1259 = vmatpush.msra.mxu0 0.0
  %1260 = vmatpush.msra.mxu0 0.0
  %1261 = vmatpush.msra.mxu0 0.0
  %1262 = vmatpush.msra.mxu0 0.0
  %1263 = vmatpush.msra.mxu0 0.0
  %1264 = vmatpush.msra.mxu0 0.0
  %1265 = vmatpush.msra.mxu0 0.0
  %1266 = vmatpush.msra.mxu0 0.0
  %1267 = vmatpush.msra.mxu0 0.0
  %1268 = vmatpush.msra.mxu0 0.0
  %1269 = vmatpush.msra.mxu0 0.0
  %1270 = vmatpush.msra.mxu0 %v1257
  %1271 = vmatpush.msra.mxu0 %v1256
  %1272 = vmatpush.msra.mxu0 %v1255
  %1273 = vmatpush.msra.mxu0 %v1254
  %1274 = vmatmul.f32.gmra.mxu0 %v1232
  %v1275 = vpop.f32.mrf.mxu0
  %v1276 = vadd.f32 0.0, %v1275
  %1277 = vdwg.mxu0
  %v1278 = vld [vmem:[%s5] sm:$0xff]
  %v1279 = vld [vmem:[%s5 + $0x8] sm:$0xff]
  %v1280 = vld [vmem:[%s5 + $0x10] sm:$0xff]
  %v1281 = vld [vmem:[%s5 + $0x18] sm:$0xff]
  %v1282 = vld [vmem:[%s6] sm:$0x1]
  %v1284 = vperm.slane %v1282, 0
  %1286 = vmatpush.msra.mxu0 0.0
  %1287 = vmatpush.msra.mxu0 0.0
  %1288 = vmatpush.msra.mxu0 0.0
  %1289 = vmatpush.msra.mxu0 0.0
  %1290 = vmatpush.msra.mxu0 0.0
  %1291 = vmatpush.msra.mxu0 0.0
  %1292 = vmatpush.msra.mxu0 0.0
  %1293 = vmatpush.msra.mxu0 0.0
  %1294 = vmatpush.msra.mxu0 0.0
  %1295 = vmatpush.msra.mxu0 0.0
  %1296 = vmatpush.msra.mxu0 0.0
  %1297 = vmatpush.msra.mxu0 0.0
  %1298 = vmatpush.msra.mxu0 %v1281
  %1299 = vmatpush.msra.mxu0 %v1280
  %1300 = vmatpush.msra.mxu0 %v1279
  %1301 = vmatpush.msra.mxu0 %v1278
  %1302 = vmatmul.f32.gmra.mxu0 %v1232
  %v1303 = vpop.f32.mrf.mxu0
  %v1304 = vadd.f32 %v1284, %v1303
  %1305 = vdwg.mxu0
  %v1306 = vld [vmem:[%s237] sm:$0xf]
  %v1307 = vadd.f32 %v1306, %v1252
  %v1308 = vxor.u32 %v1307, 2147483648
  %v1309 = vmul.f32 %v1308, 1.442695
  %v1310 = vpow.pop %v1309
  %v1311 = vadd.f32 %v1310, 1.0
  %v1312 = vrcp.pop %v1311
  %v1313 = vmul.f32 %v1311, %v1312
  %v1314 = vsub.f32 1.0, %v1313
  %v1315 = vmul.f32 %v1312, %v1314
  %v1316 = vadd.f32 %v1312, %v1315
  %vm1317 = vweird.f32 %v1311
  %vm1318 = vweird.f32 %v1312
  %vm1319 = vmor %vm1317, %vm1318
  %v1320 = vsel %vm1319, %v1312, %v1316
  %v1321 = vand.u32 2147483647, %v1311
  %vm1322 = vcmp.eq.f32.partialorder %v1321, 8.507059e+37
  %v1323 = vand.u32 %v1311, 2147483648
  %v1324 = vor.u32 1.1754944e-38, %v1323
  %v1325 = vsel %vm1322, %v1324, %v1320
  %v1326 = vmul.f32 1.0, %v1325
  %v1327 = vld [vmem:[%s259] sm:$0xf]
  %v1328 = vadd.f32 %v1327, %v1276
  %v1329 = vxor.u32 %v1328, 2147483648
  %v1330 = vmul.f32 %v1329, 1.442695
  %v1331 = vpow.pop %v1330
  %v1332 = vadd.f32 %v1331, 1.0
  %v1333 = vrcp.pop %v1332
  %v1334 = vmul.f32 %v1332, %v1333
  %v1335 = vsub.f32 1.0, %v1334
  %v1336 = vmul.f32 %v1333, %v1335
  %v1337 = vadd.f32 %v1333, %v1336
  %vm1338 = vweird.f32 %v1332
  %vm1339 = vweird.f32 %v1333
  %vm1340 = vmor %vm1338, %vm1339
  %v1341 = vsel %vm1340, %v1333, %v1337
  %v1342 = vand.u32 2147483647, %v1332
  %vm1343 = vcmp.eq.f32.partialorder %v1342, 8.507059e+37
  %v1344 = vand.u32 %v1332, 2147483648
  %v1345 = vor.u32 1.1754944e-38, %v1344
  %v1346 = vsel %vm1343, %v1345, %v1341
  %v1347 = vmul.f32 1.0, %v1346
  %v1348 = vld [vmem:[%s281] sm:$0xf]
  %v1349 = vmul.f32 %v1326, %v1304
  %v1350 = vadd.f32 %v1348, %v1349
  %v1351 = vtanh.pop %v1350
  %v1352 = vsub.f32 1.0, %v1347
  %v1353 = vmul.f32 %v1352, %v1351
  %v1354 = vmul.f32 %v1347, %v1224
  %v1355 = vadd.f32 %v1353, %v1354
  %s1356 = scalar_lea.vmem %s7, 36
  %1357 = vst.msk [vmem:[%s1356] sm:$0xf] %vm156, %v1355
  %v1358 = vld [vmem:[%s3] sm:$0xff]
  %v1359 = vld [vmem:[%s3 + $0x8] sm:$0xff]
  %v1360 = vld [vmem:[%s3 + $0x10] sm:$0xff]
  %v1361 = vld [vmem:[%s3 + $0x18] sm:$0xff]
  %v1363 = vsel %vm30, %v1355, 0
  %1365 = vmatpush.msra.mxu0 0.0
  %1366 = vmatpush.msra.mxu0 0.0
  %1367 = vmatpush.msra.mxu0 0.0
  %1368 = vmatpush.msra.mxu0 0.0
  %1369 = vmatpush.msra.mxu0 0.0
  %1370 = vmatpush.msra.mxu0 0.0
  %1371 = vmatpush.msra.mxu0 0.0
  %1372 = vmatpush.msra.mxu0 0.0
  %1373 = vmatpush.msra.mxu0 0.0
  %1374 = vmatpush.msra.mxu0 0.0
  %1375 = vmatpush.msra.mxu0 0.0
  %1376 = vmatpush.msra.mxu0 0.0
  %1377 = vmatpush.msra.mxu0 %v1361
  %1378 = vmatpush.msra.mxu0 %v1360
  %1379 = vmatpush.msra.mxu0 %v1359
  %1380 = vmatpush.msra.mxu0 %v1358
  %1381 = vmatmul.f32.gmra.mxu0 %v1363
  %v1382 = vpop.f32.mrf.mxu0
  %v1383 = vadd.f32 0.0, %v1382
  %1384 = vdwg.mxu0
  %v1385 = vld [vmem:[%s4] sm:$0xff]
  %v1386 = vld [vmem:[%s4 + $0x8] sm:$0xff]
  %v1387 = vld [vmem:[%s4 + $0x10] sm:$0xff]
  %v1388 = vld [vmem:[%s4 + $0x18] sm:$0xff]
  %1389 = vmatpush.msra.mxu0 0.0
  %1390 = vmatpush.msra.mxu0 0.0
  %1391 = vmatpush.msra.mxu0 0.0
  %1392 = vmatpush.msra.mxu0 0.0
  %1393 = vmatpush.msra.mxu0 0.0
  %1394 = vmatpush.msra.mxu0 0.0
  %1395 = vmatpush.msra.mxu0 0.0
  %1396 = vmatpush.msra.mxu0 0.0
  %1397 = vmatpush.msra.mxu0 0.0
  %1398 = vmatpush.msra.mxu0 0.0
  %1399 = vmatpush.msra.mxu0 0.0
  %1400 = vmatpush.msra.mxu0 0.0
  %1401 = vmatpush.msra.mxu0 %v1388
  %1402 = vmatpush.msra.mxu0 %v1387
  %1403 = vmatpush.msra.mxu0 %v1386
  %1404 = vmatpush.msra.mxu0 %v1385
  %1405 = vmatmul.f32.gmra.mxu0 %v1363
  %v1406 = vpop.f32.mrf.mxu0
  %v1407 = vadd.f32 0.0, %v1406
  %1408 = vdwg.mxu0
  %v1409 = vld [vmem:[%s5] sm:$0xff]
  %v1410 = vld [vmem:[%s5 + $0x8] sm:$0xff]
  %v1411 = vld [vmem:[%s5 + $0x10] sm:$0xff]
  %v1412 = vld [vmem:[%s5 + $0x18] sm:$0xff]
  %v1413 = vld [vmem:[%s6] sm:$0x1]
  %v1415 = vperm.slane %v1413, 0
  %1417 = vmatpush.msra.mxu0 0.0
  %1418 = vmatpush.msra.mxu0 0.0
  %1419 = vmatpush.msra.mxu0 0.0
  %1420 = vmatpush.msra.mxu0 0.0
  %1421 = vmatpush.msra.mxu0 0.0
  %1422 = vmatpush.msra.mxu0 0.0
  %1423 = vmatpush.msra.mxu0 0.0
  %1424 = vmatpush.msra.mxu0 0.0
  %1425 = vmatpush.msra.mxu0 0.0
  %1426 = vmatpush.msra.mxu0 0.0
  %1427 = vmatpush.msra.mxu0 0.0
  %1428 = vmatpush.msra.mxu0 0.0
  %1429 = vmatpush.msra.mxu0 %v1412
  %1430 = vmatpush.msra.mxu0 %v1411
  %1431 = vmatpush.msra.mxu0 %v1410
  %1432 = vmatpush.msra.mxu0 %v1409
  %1433 = vmatmul.f32.gmra.mxu0 %v1363
  %v1434 = vpop.f32.mrf.mxu0
  %v1435 = vadd.f32 %v1415, %v1434
  %1436 = vdwg.mxu0
  %v1437 = vld [vmem:[%s371] sm:$0xf]
  %v1438 = vadd.f32 %v1437, %v1383
  %v1439 = vxor.u32 %v1438, 2147483648
  %v1440 = vmul.f32 %v1439, 1.442695
  %v1441 = vpow.pop %v1440
  %v1442 = vadd.f32 %v1441, 1.0
  %v1443 = vrcp.pop %v1442
  %v1444 = vmul.f32 %v1442, %v1443
  %v1445 = vsub.f32 1.0, %v1444
  %v1446 = vmul.f32 %v1443, %v1445
  %v1447 = vadd.f32 %v1443, %v1446
  %vm1448 = vweird.f32 %v1442
  %vm1449 = vweird.f32 %v1443
  %vm1450 = vmor %vm1448, %vm1449
  %v1451 = vsel %vm1450, %v1443, %v1447
  %v1452 = vand.u32 2147483647, %v1442
  %vm1453 = vcmp.eq.f32.partialorder %v1452, 8.507059e+37
  %v1454 = vand.u32 %v1442, 2147483648
  %v1455 = vor.u32 1.1754944e-38, %v1454
  %v1456 = vsel %vm1453, %v1455, %v1451
  %v1457 = vmul.f32 1.0, %v1456
  %v1458 = vld [vmem:[%s393] sm:$0xf]
  %v1459 = vadd.f32 %v1458, %v1407
  %v1460 = vxor.u32 %v1459, 2147483648
  %v1461 = vmul.f32 %v1460, 1.442695
  %v1462 = vpow.pop %v1461
  %v1463 = vadd.f32 %v1462, 1.0
  %v1464 = vrcp.pop %v1463
  %v1465 = vmul.f32 %v1463, %v1464
  %v1466 = vsub.f32 1.0, %v1465
  %v1467 = vmul.f32 %v1464, %v1466
  %v1468 = vadd.f32 %v1464, %v1467
  %vm1469 = vweird.f32 %v1463
  %vm1470 = vweird.f32 %v1464
  %vm1471 = vmor %vm1469, %vm1470
  %v1472 = vsel %vm1471, %v1464, %v1468
  %v1473 = vand.u32 2147483647, %v1463
  %vm1474 = vcmp.eq.f32.partialorder %v1473, 8.507059e+37
  %v1475 = vand.u32 %v1463, 2147483648
  %v1476 = vor.u32 1.1754944e-38, %v1475
  %v1477 = vsel %vm1474, %v1476, %v1472
  %v1478 = vmul.f32 1.0, %v1477
  %v1479 = vld [vmem:[%s415] sm:$0xf]
  %v1480 = vmul.f32 %v1457, %v1435
  %v1481 = vadd.f32 %v1479, %v1480
  %v1482 = vtanh.pop %v1481
  %v1483 = vsub.f32 1.0, %v1478
  %v1484 = vmul.f32 %v1483, %v1482
  %v1485 = vmul.f32 %v1478, %v1355
  %v1486 = vadd.f32 %v1484, %v1485
  %s1487 = scalar_lea.vmem %s7, 40
  %1488 = vst.msk [vmem:[%s1487] sm:$0xf] %vm156, %v1486
  %v1489 = vld [vmem:[%s3] sm:$0xff]
  %v1490 = vld [vmem:[%s3 + $0x8] sm:$0xff]
  %v1491 = vld [vmem:[%s3 + $0x10] sm:$0xff]
  %v1492 = vld [vmem:[%s3 + $0x18] sm:$0xff]
  %v1494 = vsel %vm30, %v1486, 0
  %1496 = vmatpush.msra.mxu0 0.0
  %1497 = vmatpush.msra.mxu0 0.0
  %1498 = vmatpush.msra.mxu0 0.0
  %1499 = vmatpush.msra.mxu0 0.0
  %1500 = vmatpush.msra.mxu0 0.0
  %1501 = vmatpush.msra.mxu0 0.0
  %1502 = vmatpush.msra.mxu0 0.0
  %1503 = vmatpush.msra.mxu0 0.0
  %1504 = vmatpush.msra.mxu0 0.0
  %1505 = vmatpush.msra.mxu0 0.0
  %1506 = vmatpush.msra.mxu0 0.0
  %1507 = vmatpush.msra.mxu0 0.0
  %1508 = vmatpush.msra.mxu0 %v1492
  %1509 = vmatpush.msra.mxu0 %v1491
  %1510 = vmatpush.msra.mxu0 %v1490
  %1511 = vmatpush.msra.mxu0 %v1489
  %1512 = vmatmul.f32.gmra.mxu0 %v1494
  %v1513 = vpop.f32.mrf.mxu0
  %v1514 = vadd.f32 0.0, %v1513
  %1515 = vdwg.mxu0
  %v1516 = vld [vmem:[%s4] sm:$0xff]
  %v1517 = vld [vmem:[%s4 + $0x8] sm:$0xff]
  %v1518 = vld [vmem:[%s4 + $0x10] sm:$0xff]
  %v1519 = vld [vmem:[%s4 + $0x18] sm:$0xff]
  %1520 = vmatpush.msra.mxu0 0.0
  %1521 = vmatpush.msra.mxu0 0.0
  %1522 = vmatpush.msra.mxu0 0.0
  %1523 = vmatpush.msra.mxu0 0.0
  %1524 = vmatpush.msra.mxu0 0.0
  %1525 = vmatpush.msra.mxu0 0.0
  %1526 = vmatpush.msra.mxu0 0.0
  %1527 = vmatpush.msra.mxu0 0.0
  %1528 = vmatpush.msra.mxu0 0.0
  %1529 = vmatpush.msra.mxu0 0.0
  %1530 = vmatpush.msra.mxu0 0.0
  %1531 = vmatpush.msra.mxu0 0.0
  %1532 = vmatpush.msra.mxu0 %v1519
  %1533 = vmatpush.msra.mxu0 %v1518
  %1534 = vmatpush.msra.mxu0 %v1517
  %1535 = vmatpush.msra.mxu0 %v1516
  %1536 = vmatmul.f32.gmra.mxu0 %v1494
  %v1537 = vpop.f32.mrf.mxu0
  %v1538 = vadd.f32 0.0, %v1537
  %1539 = vdwg.mxu0
  %v1540 = vld [vmem:[%s5] sm:$0xff]
  %v1541 = vld [vmem:[%s5 + $0x8] sm:$0xff]
  %v1542 = vld [vmem:[%s5 + $0x10] sm:$0xff]
  %v1543 = vld [vmem:[%s5 + $0x18] sm:$0xff]
  %v1544 = vld [vmem:[%s6] sm:$0x1]
  %v1546 = vperm.slane %v1544, 0
  %1548 = vmatpush.msra.mxu0 0.0
  %1549 = vmatpush.msra.mxu0 0.0
  %1550 = vmatpush.msra.mxu0 0.0
  %1551 = vmatpush.msra.mxu0 0.0
  %1552 = vmatpush.msra.mxu0 0.0
  %1553 = vmatpush.msra.mxu0 0.0
  %1554 = vmatpush.msra.mxu0 0.0
  %1555 = vmatpush.msra.mxu0 0.0
  %1556 = vmatpush.msra.mxu0 0.0
  %1557 = vmatpush.msra.mxu0 0.0
  %1558 = vmatpush.msra.mxu0 0.0
  %1559 = vmatpush.msra.mxu0 0.0
  %1560 = vmatpush.msra.mxu0 %v1543
  %1561 = vmatpush.msra.mxu0 %v1542
  %1562 = vmatpush.msra.mxu0 %v1541
  %1563 = vmatpush.msra.mxu0 %v1540
  %1564 = vmatmul.f32.gmra.mxu0 %v1494
  %v1565 = vpop.f32.mrf.mxu0
  %v1566 = vadd.f32 %v1546, %v1565
  %1567 = vdwg.mxu0
  %v1568 = vld [vmem:[%s505] sm:$0xf]
  %v1569 = vadd.f32 %v1568, %v1514
  %v1570 = vxor.u32 %v1569, 2147483648
  %v1571 = vmul.f32 %v1570, 1.442695
  %v1572 = vpow.pop %v1571
  %v1573 = vadd.f32 %v1572, 1.0
  %v1574 = vrcp.pop %v1573
  %v1575 = vmul.f32 %v1573, %v1574
  %v1576 = vsub.f32 1.0, %v1575
  %v1577 = vmul.f32 %v1574, %v1576
  %v1578 = vadd.f32 %v1574, %v1577
  %vm1579 = vweird.f32 %v1573
  %vm1580 = vweird.f32 %v1574
  %vm1581 = vmor %vm1579, %vm1580
  %v1582 = vsel %vm1581, %v1574, %v1578
  %v1583 = vand.u32 2147483647, %v1573
  %vm1584 = vcmp.eq.f32.partialorder %v1583, 8.507059e+37
  %v1585 = vand.u32 %v1573, 2147483648
  %v1586 = vor.u32 1.1754944e-38, %v1585
  %v1587 = vsel %vm1584, %v1586, %v1582
  %v1588 = vmul.f32 1.0, %v1587
  %v1589 = vld [vmem:[%s527] sm:$0xf]
  %v1590 = vadd.f32 %v1589, %v1538
  %v1591 = vxor.u32 %v1590, 2147483648
  %v1592 = vmul.f32 %v1591, 1.442695
  %v1593 = vpow.pop %v1592
  %v1594 = vadd.f32 %v1593, 1.0
  %v1595 = vrcp.pop %v1594
  %v1596 = vmul.f32 %v1594, %v1595
  %v1597 = vsub.f32 1.0, %v1596
  %v1598 = vmul.f32 %v1595, %v1597
  %v1599 = vadd.f32 %v1595, %v1598
  %vm1600 = vweird.f32 %v1594
  %vm1601 = vweird.f32 %v1595
  %vm1602 = vmor %vm1600, %vm1601
  %v1603 = vsel %vm1602, %v1595, %v1599
  %v1604 = vand.u32 2147483647, %v1594
  %vm1605 = vcmp.eq.f32.partialorder %v1604, 8.507059e+37
  %v1606 = vand.u32 %v1594, 2147483648
  %v1607 = vor.u32 1.1754944e-38, %v1606
  %v1608 = vsel %vm1605, %v1607, %v1603
  %v1609 = vmul.f32 1.0, %v1608
  %v1610 = vld [vmem:[%s549] sm:$0xf]
  %v1611 = vmul.f32 %v1588, %v1566
  %v1612 = vadd.f32 %v1610, %v1611
  %v1613 = vtanh.pop %v1612
  %v1614 = vsub.f32 1.0, %v1609
  %v1615 = vmul.f32 %v1614, %v1613
  %v1616 = vmul.f32 %v1609, %v1486
  %v1617 = vadd.f32 %v1615, %v1616
  %s1618 = scalar_lea.vmem %s7, 44
  %1619 = vst.msk [vmem:[%s1618] sm:$0xf] %vm156, %v1617
  %v1620 = vld [vmem:[%s3] sm:$0xff]
  %v1621 = vld [vmem:[%s3 + $0x8] sm:$0xff]
  %v1622 = vld [vmem:[%s3 + $0x10] sm:$0xff]
  %v1623 = vld [vmem:[%s3 + $0x18] sm:$0xff]
  %v1625 = vsel %vm30, %v1617, 0
  %1627 = vmatpush.msra.mxu0 0.0
  %1628 = vmatpush.msra.mxu0 0.0
  %1629 = vmatpush.msra.mxu0 0.0
  %1630 = vmatpush.msra.mxu0 0.0
  %1631 = vmatpush.msra.mxu0 0.0
  %1632 = vmatpush.msra.mxu0 0.0
  %1633 = vmatpush.msra.mxu0 0.0
  %1634 = vmatpush.msra.mxu0 0.0
  %1635 = vmatpush.msra.mxu0 0.0
  %1636 = vmatpush.msra.mxu0 0.0
  %1637 = vmatpush.msra.mxu0 0.0
  %1638 = vmatpush.msra.mxu0 0.0
  %1639 = vmatpush.msra.mxu0 %v1623
  %1640 = vmatpush.msra.mxu0 %v1622
  %1641 = vmatpush.msra.mxu0 %v1621
  %1642 = vmatpush.msra.mxu0 %v1620
  %1643 = vmatmul.f32.gmra.mxu0 %v1625
  %v1644 = vpop.f32.mrf.mxu0
  %v1645 = vadd.f32 0.0, %v1644
  %1646 = vdwg.mxu0
  %v1647 = vld [vmem:[%s4] sm:$0xff]
  %v1648 = vld [vmem:[%s4 + $0x8] sm:$0xff]
  %v1649 = vld [vmem:[%s4 + $0x10] sm:$0xff]
  %v1650 = vld [vmem:[%s4 + $0x18] sm:$0xff]
  %1651 = vmatpush.msra.mxu0 0.0
  %1652 = vmatpush.msra.mxu0 0.0
  %1653 = vmatpush.msra.mxu0 0.0
  %1654 = vmatpush.msra.mxu0 0.0
  %1655 = vmatpush.msra.mxu0 0.0
  %1656 = vmatpush.msra.mxu0 0.0
  %1657 = vmatpush.msra.mxu0 0.0
  %1658 = vmatpush.msra.mxu0 0.0
  %1659 = vmatpush.msra.mxu0 0.0
  %1660 = vmatpush.msra.mxu0 0.0
  %1661 = vmatpush.msra.mxu0 0.0
  %1662 = vmatpush.msra.mxu0 0.0
  %1663 = vmatpush.msra.mxu0 %v1650
  %1664 = vmatpush.msra.mxu0 %v1649
  %1665 = vmatpush.msra.mxu0 %v1648
  %1666 = vmatpush.msra.mxu0 %v1647
  %1667 = vmatmul.f32.gmra.mxu0 %v1625
  %v1668 = vpop.f32.mrf.mxu0
  %v1669 = vadd.f32 0.0, %v1668
  %1670 = vdwg.mxu0
  %v1671 = vld [vmem:[%s5] sm:$0xff]
  %v1672 = vld [vmem:[%s5 + $0x8] sm:$0xff]
  %v1673 = vld [vmem:[%s5 + $0x10] sm:$0xff]
  %v1674 = vld [vmem:[%s5 + $0x18] sm:$0xff]
  %v1675 = vld [vmem:[%s6] sm:$0x1]
  %v1677 = vperm.slane %v1675, 0
  %1679 = vmatpush.msra.mxu0 0.0
  %1680 = vmatpush.msra.mxu0 0.0
  %1681 = vmatpush.msra.mxu0 0.0
  %1682 = vmatpush.msra.mxu0 0.0
  %1683 = vmatpush.msra.mxu0 0.0
  %1684 = vmatpush.msra.mxu0 0.0
  %1685 = vmatpush.msra.mxu0 0.0
  %1686 = vmatpush.msra.mxu0 0.0
  %1687 = vmatpush.msra.mxu0 0.0
  %1688 = vmatpush.msra.mxu0 0.0
  %1689 = vmatpush.msra.mxu0 0.0
  %1690 = vmatpush.msra.mxu0 0.0
  %1691 = vmatpush.msra.mxu0 %v1674
  %1692 = vmatpush.msra.mxu0 %v1673
  %1693 = vmatpush.msra.mxu0 %v1672
  %1694 = vmatpush.msra.mxu0 %v1671
  %1695 = vmatmul.f32.gmra.mxu0 %v1625
  %v1696 = vpop.f32.mrf.mxu0
  %v1697 = vadd.f32 %v1677, %v1696
  %1698 = vdwg.mxu0
  %v1699 = vld [vmem:[%s639] sm:$0xf]
  %v1700 = vadd.f32 %v1699, %v1645
  %v1701 = vxor.u32 %v1700, 2147483648
  %v1702 = vmul.f32 %v1701, 1.442695
  %v1703 = vpow.pop %v1702
  %v1704 = vadd.f32 %v1703, 1.0
  %v1705 = vrcp.pop %v1704
  %v1706 = vmul.f32 %v1704, %v1705
  %v1707 = vsub.f32 1.0, %v1706
  %v1708 = vmul.f32 %v1705, %v1707
  %v1709 = vadd.f32 %v1705, %v1708
  %vm1710 = vweird.f32 %v1704
  %vm1711 = vweird.f32 %v1705
  %vm1712 = vmor %vm1710, %vm1711
  %v1713 = vsel %vm1712, %v1705, %v1709
  %v1714 = vand.u32 2147483647, %v1704
  %vm1715 = vcmp.eq.f32.partialorder %v1714, 8.507059e+37
  %v1716 = vand.u32 %v1704, 2147483648
  %v1717 = vor.u32 1.1754944e-38, %v1716
  %v1718 = vsel %vm1715, %v1717, %v1713
  %v1719 = vmul.f32 1.0, %v1718
  %v1720 = vld [vmem:[%s661] sm:$0xf]
  %v1721 = vadd.f32 %v1720, %v1669
  %v1722 = vxor.u32 %v1721, 2147483648
  %v1723 = vmul.f32 %v1722, 1.442695
  %v1724 = vpow.pop %v1723
  %v1725 = vadd.f32 %v1724, 1.0
  %v1726 = vrcp.pop %v1725
  %v1727 = vmul.f32 %v1725, %v1726
  %v1728 = vsub.f32 1.0, %v1727
  %v1729 = vmul.f32 %v1726, %v1728
  %v1730 = vadd.f32 %v1726, %v1729
  %vm1731 = vweird.f32 %v1725
  %vm1732 = vweird.f32 %v1726
  %vm1733 = vmor %vm1731, %vm1732
  %v1734 = vsel %vm1733, %v1726, %v1730
  %v1735 = vand.u32 2147483647, %v1725
  %vm1736 = vcmp.eq.f32.partialorder %v1735, 8.507059e+37
  %v1737 = vand.u32 %v1725, 2147483648
  %v1738 = vor.u32 1.1754944e-38, %v1737
  %v1739 = vsel %vm1736, %v1738, %v1734
  %v1740 = vmul.f32 1.0, %v1739
  %v1741 = vld [vmem:[%s683] sm:$0xf]
  %v1742 = vmul.f32 %v1719, %v1697
  %v1743 = vadd.f32 %v1741, %v1742
  %v1744 = vtanh.pop %v1743
  %v1745 = vsub.f32 1.0, %v1740
  %v1746 = vmul.f32 %v1745, %v1744
  %v1747 = vmul.f32 %v1740, %v1617
  %v1748 = vadd.f32 %v1746, %v1747
  %s1749 = scalar_lea.vmem %s7, 48
  %1750 = vst.msk [vmem:[%s1749] sm:$0xf] %vm156, %v1748
  %v1751 = vld [vmem:[%s3] sm:$0xff]
  %v1752 = vld [vmem:[%s3 + $0x8] sm:$0xff]
  %v1753 = vld [vmem:[%s3 + $0x10] sm:$0xff]
  %v1754 = vld [vmem:[%s3 + $0x18] sm:$0xff]
  %v1756 = vsel %vm30, %v1748, 0
  %1758 = vmatpush.msra.mxu0 0.0
  %1759 = vmatpush.msra.mxu0 0.0
  %1760 = vmatpush.msra.mxu0 0.0
  %1761 = vmatpush.msra.mxu0 0.0
  %1762 = vmatpush.msra.mxu0 0.0
  %1763 = vmatpush.msra.mxu0 0.0
  %1764 = vmatpush.msra.mxu0 0.0
  %1765 = vmatpush.msra.mxu0 0.0
  %1766 = vmatpush.msra.mxu0 0.0
  %1767 = vmatpush.msra.mxu0 0.0
  %1768 = vmatpush.msra.mxu0 0.0
  %1769 = vmatpush.msra.mxu0 0.0
  %1770 = vmatpush.msra.mxu0 %v1754
  %1771 = vmatpush.msra.mxu0 %v1753
  %1772 = vmatpush.msra.mxu0 %v1752
  %1773 = vmatpush.msra.mxu0 %v1751
  %1774 = vmatmul.f32.gmra.mxu0 %v1756
  %v1775 = vpop.f32.mrf.mxu0
  %v1776 = vadd.f32 0.0, %v1775
  %1777 = vdwg.mxu0
  %v1778 = vld [vmem:[%s4] sm:$0xff]
  %v1779 = vld [vmem:[%s4 + $0x8] sm:$0xff]
  %v1780 = vld [vmem:[%s4 + $0x10] sm:$0xff]
  %v1781 = vld [vmem:[%s4 + $0x18] sm:$0xff]
  %1782 = vmatpush.msra.mxu0 0.0
  %1783 = vmatpush.msra.mxu0 0.0
  %1784 = vmatpush.msra.mxu0 0.0
  %1785 = vmatpush.msra.mxu0 0.0
  %1786 = vmatpush.msra.mxu0 0.0
  %1787 = vmatpush.msra.mxu0 0.0
  %1788 = vmatpush.msra.mxu0 0.0
  %1789 = vmatpush.msra.mxu0 0.0
  %1790 = vmatpush.msra.mxu0 0.0
  %1791 = vmatpush.msra.mxu0 0.0
  %1792 = vmatpush.msra.mxu0 0.0
  %1793 = vmatpush.msra.mxu0 0.0
  %1794 = vmatpush.msra.mxu0 %v1781
  %1795 = vmatpush.msra.mxu0 %v1780
  %1796 = vmatpush.msra.mxu0 %v1779
  %1797 = vmatpush.msra.mxu0 %v1778
  %1798 = vmatmul.f32.gmra.mxu0 %v1756
  %v1799 = vpop.f32.mrf.mxu0
  %v1800 = vadd.f32 0.0, %v1799
  %1801 = vdwg.mxu0
  %v1802 = vld [vmem:[%s5] sm:$0xff]
  %v1803 = vld [vmem:[%s5 + $0x8] sm:$0xff]
  %v1804 = vld [vmem:[%s5 + $0x10] sm:$0xff]
  %v1805 = vld [vmem:[%s5 + $0x18] sm:$0xff]
  %v1806 = vld [vmem:[%s6] sm:$0x1]
  %v1808 = vperm.slane %v1806, 0
  %1810 = vmatpush.msra.mxu0 0.0
  %1811 = vmatpush.msra.mxu0 0.0
  %1812 = vmatpush.msra.mxu0 0.0
  %1813 = vmatpush.msra.mxu0 0.0
  %1814 = vmatpush.msra.mxu0 0.0
  %1815 = vmatpush.msra.mxu0 0.0
  %1816 = vmatpush.msra.mxu0 0.0
  %1817 = vmatpush.msra.mxu0 0.0
  %1818 = vmatpush.msra.mxu0 0.0
  %1819 = vmatpush.msra.mxu0 0.0
  %1820 = vmatpush.msra.mxu0 0.0
  %1821 = vmatpush.msra.mxu0 0.0
  %1822 = vmatpush.msra.mxu0 %v1805
  %1823 = vmatpush.msra.mxu0 %v1804
  %1824 = vmatpush.msra.mxu0 %v1803
  %1825 = vmatpush.msra.mxu0 %v1802
  %1826 = vmatmul.f32.gmra.mxu0 %v1756
  %v1827 = vpop.f32.mrf.mxu0
  %v1828 = vadd.f32 %v1808, %v1827
  %1829 = vdwg.mxu0
  %v1830 = vld [vmem:[%s773] sm:$0xf]
  %v1831 = vadd.f32 %v1830, %v1776
  %v1832 = vxor.u32 %v1831, 2147483648
  %v1833 = vmul.f32 %v1832, 1.442695
  %v1834 = vpow.pop %v1833
  %v1835 = vadd.f32 %v1834, 1.0
  %v1836 = vrcp.pop %v1835
  %v1837 = vmul.f32 %v1835, %v1836
  %v1838 = vsub.f32 1.0, %v1837
  %v1839 = vmul.f32 %v1836, %v1838
  %v1840 = vadd.f32 %v1836, %v1839
  %vm1841 = vweird.f32 %v1835
  %vm1842 = vweird.f32 %v1836
  %vm1843 = vmor %vm1841, %vm1842
  %v1844 = vsel %vm1843, %v1836, %v1840
  %v1845 = vand.u32 2147483647, %v1835
  %vm1846 = vcmp.eq.f32.partialorder %v1845, 8.507059e+37
  %v1847 = vand.u32 %v1835, 2147483648
  %v1848 = vor.u32 1.1754944e-38, %v1847
  %v1849 = vsel %vm1846, %v1848, %v1844
  %v1850 = vmul.f32 1.0, %v1849
  %v1851 = vld [vmem:[%s795] sm:$0xf]
  %v1852 = vadd.f32 %v1851, %v1800
  %v1853 = vxor.u32 %v1852, 2147483648
  %v1854 = vmul.f32 %v1853, 1.442695
  %v1855 = vpow.pop %v1854
  %v1856 = vadd.f32 %v1855, 1.0
  %v1857 = vrcp.pop %v1856
  %v1858 = vmul.f32 %v1856, %v1857
  %v1859 = vsub.f32 1.0, %v1858
  %v1860 = vmul.f32 %v1857, %v1859
  %v1861 = vadd.f32 %v1857, %v1860
  %vm1862 = vweird.f32 %v1856
  %vm1863 = vweird.f32 %v1857
  %vm1864 = vmor %vm1862, %vm1863
  %v1865 = vsel %vm1864, %v1857, %v1861
  %v1866 = vand.u32 2147483647, %v1856
  %vm1867 = vcmp.eq.f32.partialorder %v1866, 8.507059e+37
  %v1868 = vand.u32 %v1856, 2147483648
  %v1869 = vor.u32 1.1754944e-38, %v1868
  %v1870 = vsel %vm1867, %v1869, %v1865
  %v1871 = vmul.f32 1.0, %v1870
  %v1872 = vld [vmem:[%s817] sm:$0xf]
  %v1873 = vmul.f32 %v1850, %v1828
  %v1874 = vadd.f32 %v1872, %v1873
  %v1875 = vtanh.pop %v1874
  %v1876 = vsub.f32 1.0, %v1871
  %v1877 = vmul.f32 %v1876, %v1875
  %v1878 = vmul.f32 %v1871, %v1748
  %v1879 = vadd.f32 %v1877, %v1878
  %s1880 = scalar_lea.vmem %s7, 52
  %1881 = vst.msk [vmem:[%s1880] sm:$0xf] %vm156, %v1879
  %v1882 = vld [vmem:[%s3] sm:$0xff]
  %v1883 = vld [vmem:[%s3 + $0x8] sm:$0xff]
  %v1884 = vld [vmem:[%s3 + $0x10] sm:$0xff]
  %v1885 = vld [vmem:[%s3 + $0x18] sm:$0xff]
  %v1887 = vsel %vm30, %v1879, 0
  %1889 = vmatpush.msra.mxu0 0.0
  %1890 = vmatpush.msra.mxu0 0.0
  %1891 = vmatpush.msra.mxu0 0.0
  %1892 = vmatpush.msra.mxu0 0.0
  %1893 = vmatpush.msra.mxu0 0.0
  %1894 = vmatpush.msra.mxu0 0.0
  %1895 = vmatpush.msra.mxu0 0.0
  %1896 = vmatpush.msra.mxu0 0.0
  %1897 = vmatpush.msra.mxu0 0.0
  %1898 = vmatpush.msra.mxu0 0.0
  %1899 = vmatpush.msra.mxu0 0.0
  %1900 = vmatpush.msra.mxu0 0.0
  %1901 = vmatpush.msra.mxu0 %v1885
  %1902 = vmatpush.msra.mxu0 %v1884
  %1903 = vmatpush.msra.mxu0 %v1883
  %1904 = vmatpush.msra.mxu0 %v1882
  %1905 = vmatmul.f32.gmra.mxu0 %v1887
  %v1906 = vpop.f32.mrf.mxu0
  %v1907 = vadd.f32 0.0, %v1906
  %1908 = vdwg.mxu0
  %v1909 = vld [vmem:[%s4] sm:$0xff]
  %v1910 = vld [vmem:[%s4 + $0x8] sm:$0xff]
  %v1911 = vld [vmem:[%s4 + $0x10] sm:$0xff]
  %v1912 = vld [vmem:[%s4 + $0x18] sm:$0xff]
  %1913 = vmatpush.msra.mxu0 0.0
  %1914 = vmatpush.msra.mxu0 0.0
  %1915 = vmatpush.msra.mxu0 0.0
  %1916 = vmatpush.msra.mxu0 0.0
  %1917 = vmatpush.msra.mxu0 0.0
  %1918 = vmatpush.msra.mxu0 0.0
  %1919 = vmatpush.msra.mxu0 0.0
  %1920 = vmatpush.msra.mxu0 0.0
  %1921 = vmatpush.msra.mxu0 0.0
  %1922 = vmatpush.msra.mxu0 0.0
  %1923 = vmatpush.msra.mxu0 0.0
  %1924 = vmatpush.msra.mxu0 0.0
  %1925 = vmatpush.msra.mxu0 %v1912
  %1926 = vmatpush.msra.mxu0 %v1911
  %1927 = vmatpush.msra.mxu0 %v1910
  %1928 = vmatpush.msra.mxu0 %v1909
  %1929 = vmatmul.f32.gmra.mxu0 %v1887
  %v1930 = vpop.f32.mrf.mxu0
  %v1931 = vadd.f32 0.0, %v1930
  %1932 = vdwg.mxu0
  %v1933 = vld [vmem:[%s5] sm:$0xff]
  %v1934 = vld [vmem:[%s5 + $0x8] sm:$0xff]
  %v1935 = vld [vmem:[%s5 + $0x10] sm:$0xff]
  %v1936 = vld [vmem:[%s5 + $0x18] sm:$0xff]
  %v1937 = vld [vmem:[%s6] sm:$0x1]
  %v1939 = vperm.slane %v1937, 0
  %1941 = vmatpush.msra.mxu0 0.0
  %1942 = vmatpush.msra.mxu0 0.0
  %1943 = vmatpush.msra.mxu0 0.0
  %1944 = vmatpush.msra.mxu0 0.0
  %1945 = vmatpush.msra.mxu0 0.0
  %1946 = vmatpush.msra.mxu0 0.0
  %1947 = vmatpush.msra.mxu0 0.0
  %1948 = vmatpush.msra.mxu0 0.0
  %1949 = vmatpush.msra.mxu0 0.0
  %1950 = vmatpush.msra.mxu0 0.0
  %1951 = vmatpush.msra.mxu0 0.0
  %1952 = vmatpush.msra.mxu0 0.0
  %1953 = vmatpush.msra.mxu0 %v1936
  %1954 = vmatpush.msra.mxu0 %v1935
  %1955 = vmatpush.msra.mxu0 %v1934
  %1956 = vmatpush.msra.mxu0 %v1933
  %1957 = vmatmul.f32.gmra.mxu0 %v1887
  %v1958 = vpop.f32.mrf.mxu0
  %v1959 = vadd.f32 %v1939, %v1958
  %1960 = vdwg.mxu0
  %v1961 = vld [vmem:[%s907] sm:$0xf]
  %v1962 = vadd.f32 %v1961, %v1907
  %v1963 = vxor.u32 %v1962, 2147483648
  %v1964 = vmul.f32 %v1963, 1.442695
  %v1965 = vpow.pop %v1964
  %v1966 = vadd.f32 %v1965, 1.0
  %v1967 = vrcp.pop %v1966
  %v1968 = vmul.f32 %v1966, %v1967
  %v1969 = vsub.f32 1.0, %v1968
  %v1970 = vmul.f32 %v1967, %v1969
  %v1971 = vadd.f32 %v1967, %v1970
  %vm1972 = vweird.f32 %v1966
  %vm1973 = vweird.f32 %v1967
  %vm1974 = vmor %vm1972, %vm1973
  %v1975 = vsel %vm1974, %v1967, %v1971
  %v1976 = vand.u32 2147483647, %v1966
  %vm1977 = vcmp.eq.f32.partialorder %v1976, 8.507059e+37
  %v1978 = vand.u32 %v1966, 2147483648
  %v1979 = vor.u32 1.1754944e-38, %v1978
  %v1980 = vsel %vm1977, %v1979, %v1975
  %v1981 = vmul.f32 1.0, %v1980
  %v1982 = vld [vmem:[%s929] sm:$0xf]
  %v1983 = vadd.f32 %v1982, %v1931
  %v1984 = vxor.u32 %v1983, 2147483648
  %v1985 = vmul.f32 %v1984, 1.442695
  %v1986 = vpow.pop %v1985
  %v1987 = vadd.f32 %v1986, 1.0
  %v1988 = vrcp.pop %v1987
  %v1989 = vmul.f32 %v1987, %v1988
  %v1990 = vsub.f32 1.0, %v1989
  %v1991 = vmul.f32 %v1988, %v1990
  %v1992 = vadd.f32 %v1988, %v1991
  %vm1993 = vweird.f32 %v1987
  %vm1994 = vweird.f32 %v1988
  %vm1995 = vmor %vm1993, %vm1994
  %v1996 = vsel %vm1995, %v1988, %v1992
  %v1997 = vand.u32 2147483647, %v1987
  %vm1998 = vcmp.eq.f32.partialorder %v1997, 8.507059e+37
  %v1999 = vand.u32 %v1987, 2147483648
  %v2000 = vor.u32 1.1754944e-38, %v1999
  %v2001 = vsel %vm1998, %v2000, %v1996
  %v2002 = vmul.f32 1.0, %v2001
  %v2003 = vld [vmem:[%s951] sm:$0xf]
  %v2004 = vmul.f32 %v1981, %v1959
  %v2005 = vadd.f32 %v2003, %v2004
  %v2006 = vtanh.pop %v2005
  %v2007 = vsub.f32 1.0, %v2002
  %v2008 = vmul.f32 %v2007, %v2006
  %v2009 = vmul.f32 %v2002, %v1879
  %v2010 = vadd.f32 %v2008, %v2009
  %s2011 = scalar_lea.vmem %s7, 56
  %2012 = vst.msk [vmem:[%s2011] sm:$0xf] %vm156, %v2010
  %v2013 = vld [vmem:[%s3] sm:$0xff]
  %v2014 = vld [vmem:[%s3 + $0x8] sm:$0xff]
  %v2015 = vld [vmem:[%s3 + $0x10] sm:$0xff]
  %v2016 = vld [vmem:[%s3 + $0x18] sm:$0xff]
  %v2018 = vsel %vm30, %v2010, 0
  %2020 = vmatpush.msra.mxu0 0.0
  %2021 = vmatpush.msra.mxu0 0.0
  %2022 = vmatpush.msra.mxu0 0.0
  %2023 = vmatpush.msra.mxu0 0.0
  %2024 = vmatpush.msra.mxu0 0.0
  %2025 = vmatpush.msra.mxu0 0.0
  %2026 = vmatpush.msra.mxu0 0.0
  %2027 = vmatpush.msra.mxu0 0.0
  %2028 = vmatpush.msra.mxu0 0.0
  %2029 = vmatpush.msra.mxu0 0.0
  %2030 = vmatpush.msra.mxu0 0.0
  %2031 = vmatpush.msra.mxu0 0.0
  %2032 = vmatpush.msra.mxu0 %v2016
  %2033 = vmatpush.msra.mxu0 %v2015
  %2034 = vmatpush.msra.mxu0 %v2014
  %2035 = vmatpush.msra.mxu0 %v2013
  %2036 = vmatmul.f32.gmra.mxu0 %v2018
  %v2037 = vpop.f32.mrf.mxu0
  %v2038 = vadd.f32 0.0, %v2037
  %2039 = vdwg.mxu0
  %v2040 = vld [vmem:[%s4] sm:$0xff]
  %v2041 = vld [vmem:[%s4 + $0x8] sm:$0xff]
  %v2042 = vld [vmem:[%s4 + $0x10] sm:$0xff]
  %v2043 = vld [vmem:[%s4 + $0x18] sm:$0xff]
  %2044 = vmatpush.msra.mxu0 0.0
  %2045 = vmatpush.msra.mxu0 0.0
  %2046 = vmatpush.msra.mxu0 0.0
  %2047 = vmatpush.msra.mxu0 0.0
  %2048 = vmatpush.msra.mxu0 0.0
  %2049 = vmatpush.msra.mxu0 0.0
  %2050 = vmatpush.msra.mxu0 0.0
  %2051 = vmatpush.msra.mxu0 0.0
  %2052 = vmatpush.msra.mxu0 0.0
  %2053 = vmatpush.msra.mxu0 0.0
  %2054 = vmatpush.msra.mxu0 0.0
  %2055 = vmatpush.msra.mxu0 0.0
  %2056 = vmatpush.msra.mxu0 %v2043
  %2057 = vmatpush.msra.mxu0 %v2042
  %2058 = vmatpush.msra.mxu0 %v2041
  %2059 = vmatpush.msra.mxu0 %v2040
  %2060 = vmatmul.f32.gmra.mxu0 %v2018
  %v2061 = vpop.f32.mrf.mxu0
  %v2062 = vadd.f32 0.0, %v2061
  %2063 = vdwg.mxu0
  %v2064 = vld [vmem:[%s5] sm:$0xff]
  %v2065 = vld [vmem:[%s5 + $0x8] sm:$0xff]
  %v2066 = vld [vmem:[%s5 + $0x10] sm:$0xff]
  %v2067 = vld [vmem:[%s5 + $0x18] sm:$0xff]
  %v2068 = vld [vmem:[%s6] sm:$0x1]
  %v2070 = vperm.slane %v2068, 0
  %2072 = vmatpush.msra.mxu0 0.0
  %2073 = vmatpush.msra.mxu0 0.0
  %2074 = vmatpush.msra.mxu0 0.0
  %2075 = vmatpush.msra.mxu0 0.0
  %2076 = vmatpush.msra.mxu0 0.0
  %2077 = vmatpush.msra.mxu0 0.0
  %2078 = vmatpush.msra.mxu0 0.0
  %2079 = vmatpush.msra.mxu0 0.0
  %2080 = vmatpush.msra.mxu0 0.0
  %2081 = vmatpush.msra.mxu0 0.0
  %2082 = vmatpush.msra.mxu0 0.0
  %2083 = vmatpush.msra.mxu0 0.0
  %2084 = vmatpush.msra.mxu0 %v2067
  %2085 = vmatpush.msra.mxu0 %v2066
  %2086 = vmatpush.msra.mxu0 %v2065
  %2087 = vmatpush.msra.mxu0 %v2064
  %2088 = vmatmul.f32.gmra.mxu0 %v2018
  %v2089 = vpop.f32.mrf.mxu0
  %v2090 = vadd.f32 %v2070, %v2089
  %2091 = vdwg.mxu0
  %v2092 = vld [vmem:[%s1041] sm:$0xf]
  %v2093 = vadd.f32 %v2092, %v2038
  %v2094 = vxor.u32 %v2093, 2147483648
  %v2095 = vmul.f32 %v2094, 1.442695
  %v2096 = vpow.pop %v2095
  %v2097 = vadd.f32 %v2096, 1.0
  %v2098 = vrcp.pop %v2097
  %v2099 = vmul.f32 %v2097, %v2098
  %v2100 = vsub.f32 1.0, %v2099
  %v2101 = vmul.f32 %v2098, %v2100
  %v2102 = vadd.f32 %v2098, %v2101
  %vm2103 = vweird.f32 %v2097
  %vm2104 = vweird.f32 %v2098
  %vm2105 = vmor %vm2103, %vm2104
  %v2106 = vsel %vm2105, %v2098, %v2102
  %v2107 = vand.u32 2147483647, %v2097
  %vm2108 = vcmp.eq.f32.partialorder %v2107, 8.507059e+37
  %v2109 = vand.u32 %v2097, 2147483648
  %v2110 = vor.u32 1.1754944e-38, %v2109
  %v2111 = vsel %vm2108, %v2110, %v2106
  %v2112 = vmul.f32 1.0, %v2111
  %v2113 = vld [vmem:[%s1063] sm:$0xf]
  %v2114 = vadd.f32 %v2113, %v2062
  %v2115 = vxor.u32 %v2114, 2147483648
  %v2116 = vmul.f32 %v2115, 1.442695
  %v2117 = vpow.pop %v2116
  %v2118 = vadd.f32 %v2117, 1.0
  %v2119 = vrcp.pop %v2118
  %v2120 = vmul.f32 %v2118, %v2119
  %v2121 = vsub.f32 1.0, %v2120
  %v2122 = vmul.f32 %v2119, %v2121
  %v2123 = vadd.f32 %v2119, %v2122
  %vm2124 = vweird.f32 %v2118
  %vm2125 = vweird.f32 %v2119
  %vm2126 = vmor %vm2124, %vm2125
  %v2127 = vsel %vm2126, %v2119, %v2123
  %v2128 = vand.u32 2147483647, %v2118
  %vm2129 = vcmp.eq.f32.partialorder %v2128, 8.507059e+37
  %v2130 = vand.u32 %v2118, 2147483648
  %v2131 = vor.u32 1.1754944e-38, %v2130
  %v2132 = vsel %vm2129, %v2131, %v2127
  %v2133 = vmul.f32 1.0, %v2132
  %v2134 = vld [vmem:[%s1085] sm:$0xf]
  %v2135 = vmul.f32 %v2112, %v2090
  %v2136 = vadd.f32 %v2134, %v2135
  %v2137 = vtanh.pop %v2136
  %v2138 = vsub.f32 1.0, %v2133
  %v2139 = vmul.f32 %v2138, %v2137
  %v2140 = vmul.f32 %v2133, %v2010
  %v2141 = vadd.f32 %v2139, %v2140
  %s2142 = scalar_lea.vmem %s7, 60
  %2143 = vst.msk [vmem:[%s2142] sm:$0xf] %vm156, %v2141
  // Predicated region
  $region30: #{gru_head_v2_forward.1} parent=0 // pred_check
    _
  $region31: #{gru_head_v2_forward.1} parent=0 // pred_check_branch
    %2145 = sbr.rel (0) target = $region33
  $region32: #{gru_head_v2_forward.1} parent=0 // pred_region
    _
  $region33: #{gru_head_v2_forward.1} parent=0 // pred_fallthru
    _
  // Predicated region
  $region34: #{gru_head_v2_forward.1} parent=0 // pred_check
    _
  $region35: #{gru_head_v2_forward.1} parent=0 // pred_check_branch
    %2147 = sbr.rel (0) target = $region37
  $region36: #{gru_head_v2_forward.1} parent=0 // pred_region
    _
  $region37: #{gru_head_v2_forward.1} parent=0 // pred_fallthru
    _

</llo_original>
